<compile_context>
chip_gen: v7x
topology: tpu7x:2x2x1
jax: 0.10.0
libtpu: 0.0.40
codegen_flags: <defaults>
</compile_context>

<pallas_src>
import functools

import numpy as np
import jax
import jax.numpy as jnp
from jax import lax
from jax.experimental import pallas as pl
from jax.experimental.pallas import tpu as pltpu


# ---------------------------------------------------------------------------
# Static glue: sampling-index map for the direct-space S2 correlation
# ---------------------------------------------------------------------------
def _rotz(t):
    c, s = np.cos(t), np.sin(t)
    z, o = np.zeros_like(t), np.ones_like(t)
    return np.stack([np.stack([c, -s, z], -1),
                     np.stack([s,  c, z], -1),
                     np.stack([z,  z, o], -1)], -2)


def _roty(t):
    c, s = np.cos(t), np.sin(t)
    z, o = np.zeros_like(t), np.ones_like(t)
    return np.stack([np.stack([c, z, s], -1),
                     np.stack([z, o, z], -1),
                     np.stack([-s, z, c], -1)], -2)


def build_sampling_index(bandwidth, n_beta=3, max_beta=np.pi / 8):
    """Flat sphere-pixel indices for every (gamma, beta, alpha, k)."""
    nb = 2 * bandwidth
    # kernel support near the north pole (s2_near_identity_grid semantics:
    # n_alpha = 2*bandwidth, n_beta = 3)
    kb = np.arange(1, n_beta + 1) * max_beta / n_beta
    ka = np.linspace(0.0, 2.0 * np.pi, nb, endpoint=False)
    KB, KA = np.meshgrid(kb, ka, indexing="ij")
    KB, KA = KB.reshape(-1), KA.reshape(-1)
    q = np.stack([np.sin(KB) * np.cos(KA),
                  np.sin(KB) * np.sin(KA),
                  np.cos(KB)], axis=-1)                       # (K, 3)
    # SOFT grids
    alpha = 2.0 * np.pi * np.arange(nb) / nb
    beta = np.pi * (2.0 * np.arange(nb) + 1.0) / (4.0 * bandwidth)
    gamma = 2.0 * np.pi * np.arange(nb) / nb
    # R(alpha, beta, gamma) = Rz(a) Ry(b) Rz(g); ordered (gamma, beta, alpha)
    R = np.einsum("iab,jbc,lcd->ljiad", _rotz(alpha), _roty(beta), _rotz(gamma))
    r = np.einsum("ljiad,kd->ljika", R, q)                    # (g, b, a, K, 3)
    br = np.arccos(np.clip(r[..., 2], -1.0, 1.0))
    ar = np.mod(np.arctan2(r[..., 1], r[..., 0]), 2.0 * np.pi)
    jb = np.clip(np.rint((br * 4.0 * bandwidth / np.pi - 1.0) / 2.0),
                 0, nb - 1).astype(np.int32)
    ia = np.mod(np.rint(ar * nb / (2.0 * np.pi)), nb).astype(np.int32)
    idx = (jb * nb + ia).reshape(nb ** 3, -1)                 # ((2b)^3, K)
    return jnp.asarray(idx), int(q.shape[0])


def gather_sphere(x, idx_flat):
    """x: (B, C, 2b, 2b) -> (B*(2b)^3, K*C) matmul operand, cols ordered (k, c).

    The SMALL input is moved channel-last before the gather so the expanded
    tensor never needs a transpose (weights are stored in matching row order).
    """
    B, C, H, W = x.shape
    M, K = idx_flat.shape
    xf = jnp.transpose(x, (0, 2, 3, 1)).reshape(B, H * W, C)   # small transpose
    g = jnp.take(xf, idx_flat.reshape(-1), axis=1)             # (B, M*K, C)
    return g.reshape(B * M, K * C)


# ---------------------------------------------------------------------------
# Pallas kernel: fused  sigmoid( max_gamma( xg @ W ) + bias )
# ---------------------------------------------------------------------------
def _update_gate_kernel(xg_ref, w_ref, b_ref, out_ref, *, nb, sp):
    # xg_ref: (nb*sp, D) bf16 rows ordered (gamma, beta, alpha); w_ref: (D, Chp)
    # bf16 with Chp >= 128 (lane dense); out_ref: (sp, Chp) f32.
    w = w_ref[...]
    # gamma reduction folded into the body: running max over nb MXU slabs.
    acc = jnp.dot(xg_ref[0:sp, :], w, preferred_element_type=jnp.float32)
    for g in range(1, nb):                                     # static unroll
        acc = jnp.maximum(
            acc,
            jnp.dot(xg_ref[g * sp:(g + 1) * sp, :], w,
                    preferred_element_type=jnp.float32))
    # bias is per-column and sigmoid is monotone -> both commute with the max,
    # so they are applied once on the reduced (sp, Chp) tile.
    out_ref[...] = jax.nn.sigmoid(acc + b_ref[...])


@functools.lru_cache(maxsize=None)
def _build_gate_call(batch, nb, D, Chp):
    sp = nb * nb
    M = nb * sp
    if sp % 8 != 0:
        raise ValueError(
            f"(2*bandwidth)^2 = {sp} must be a multiple of 8 for TPU tiling; "
            "use an even bandwidth >= 2 (or pad the beta/alpha grid).")
    if Chp % 128 != 0:
        raise ValueError("padded hidden-channel dim must be a multiple of 128")
    return pl.pallas_call(
        functools.partial(_update_gate_kernel, nb=nb, sp=sp),
        out_shape=jax.ShapeDtypeStruct((batch * sp, Chp), jnp.float32),
        grid=(batch,),                       # one large step per batch element
        in_specs=[
            pl.BlockSpec((M, D), lambda b: (b, 0)),       # gathered slab
            pl.BlockSpec((D, Chp), lambda b: (0, 0)),     # weights (reused)
            pl.BlockSpec((1, Chp), lambda b: (0, 0)),     # bias (reused)
        ],
        out_specs=pl.BlockSpec((sp, Chp), lambda b: (b, 0)),  # lane-dense store
        compiler_params=pltpu.CompilerParams(
            dimension_semantics=("parallel",)),               # megacore-shardable
    )


def update_gate(xg, w, bias, *, batch, bandwidth):
    nb = 2 * bandwidth
    M, D = xg.shape
    Chp = w.shape[1]
    assert M == batch * nb * nb * nb and w.shape[0] == D
    return _build_gate_call(batch, nb, D, Chp)(xg, w, bias)


# ---------------------------------------------------------------------------
# Model glue (plain JAX, all under jit): cell recurrence, layer/time loops
# ---------------------------------------------------------------------------
def cell_forward(x_t, h_prev, p, idx_flat, bandwidth, ch):
    """One s2_conv_rnn_cell step. The reference cell returns `update`; the
    reset / output gates and new_state never influence the output and are
    therefore not computed (XLA would DCE them under jit anyway)."""
    B = x_t.shape[0]
    nb = 2 * bandwidth
    stacked = jnp.concatenate([x_t, h_prev], axis=1).astype(jnp.bfloat16)
    xg = gather_sphere(stacked, idx_flat)                     # (B*(2b)^3, K*C) bf16
    rows = update_gate(xg, p["Wu"], p["bu"], batch=B, bandwidth=bandwidth)
    upd = rows.reshape(B, nb, nb, -1)[..., :ch]               # drop lane padding
    return jnp.transpose(upd, (0, 3, 1, 2))                   # (B, Ch, 2b, 2b) f32


@functools.partial(jax.jit,
                   static_argnames=("bandwidth", "f_hidden", "return_all_layers"))
def s2_conv_rnn_forward(x, params, idx_flat, *, bandwidth, f_hidden,
                        return_all_layers=False):
    """x: (B, T, C_in, 2b, 2b) -> (B, T, C_hidden, 2b, 2b) (last layer)."""
    B = x.shape[0]
    nb = 2 * bandwidth
    cur = x
    layer_outputs = []
    for p, ch in zip(params, f_hidden):
        def step(h, x_t, p=p, ch=ch):
            h_new = cell_forward(x_t, h, p, idx_flat, bandwidth, ch)
            return h_new, h_new
        h0 = jnp.zeros((B, ch, nb, nb), jnp.float32)          # init_hidden
        xs = jnp.swapaxes(cur, 0, 1)                          # (T, B, C, 2b, 2b)
        _, ys = lax.scan(step, h0, xs)
        cur = jnp.swapaxes(ys, 0, 1)                          # (B, T, Ch, 2b, 2b)
        layer_outputs.append(cur)
    return layer_outputs if return_all_layers else layer_outputs[-1]


def init_params(key, f_in, f_hidden_list, bandwidth, K, lane=128):
    """Deterministic init. Logical update-gate weight: (C_in+C_h, C_h, K);
    stored in MXU form (K*C_in_total, Chp) bf16 with row order (k, c) matching
    the gathered column order, Ch zero-padded to a multiple of 128 lanes."""
    params = []
    for i, ch in enumerate(f_hidden_list):
        cin = (f_in if i == 0 else f_hidden_list[i - 1]) + ch
        chp = ((ch + lane - 1) // lane) * lane
        key, sub = jax.random.split(key)
        w = jax.random.normal(sub, (cin, ch, K), jnp.float32) / np.sqrt(cin * K)
        wm = jnp.transpose(w, (2, 0, 1)).reshape(K * cin, ch)        # (k, c) rows
        wp = jnp.zeros((K * cin, chp), jnp.float32).at[:, :ch].set(wm)
        params.append({
            "Wu": wp.astype(jnp.bfloat16),
            "bu": jnp.zeros((1, chp), jnp.float32),
        })
        # TODO(synk): reset / output gate parameters of the reference cell are
        # not materialized -- they never affect the module's returned value.
    return params


if __name__ == "__main__":
    f_in, f_hidden, bandwidth, n_layers = 4, 8, 4, 2
    B, T = 2, 4
    nb = 2 * bandwidth

    idx_flat, K = build_sampling_index(bandwidth)

    key = jax.random.PRNGKey(0)
    key, kx = jax.random.split(key)
    x = jax.random.normal(kx, (B, T, f_in, nb, nb), jnp.float32)

    f_hidden_list = (f_hidden,) * n_layers
    params = init_params(key, f_in, f_hidden_list, bandwidth, K)

    out = s2_conv_rnn_forward(x, params, idx_flat,
                              bandwidth=bandwidth, f_hidden=f_hidden_list,
                              return_all_layers=False)
    out = jax.block_until_ready(out)
    assert out.shape == (B, T, f_hidden, nb, nb), out.shape
    assert bool(jnp.all(jnp.isfinite(out)))
    print("KERNEL_OK")
</pallas_src>

<mosaic_0001>
module attributes {stable_mosaic.version = 11 : i64} {
  func.func @_update_gate_kernel(%arg0: i32, %arg1: memref<512x288xbf16, #tpu.memory_space<vmem>>, %arg2: memref<288x128xbf16, #tpu.memory_space<vmem>>, %arg3: memref<1x128xf32, #tpu.memory_space<vmem>>, %arg4: memref<64x128xf32, #tpu.memory_space<vmem>>) attributes {dimension_semantics = [#tpu.dimension_semantics<parallel>], iteration_bounds = array<i64: 2>, scalar_prefetch = 0 : i64, scratch_operands = 0 : i64, tpu.core_type = #tpu.core_type<tc>, window_params = [{transform_indices = @transform_0, window_bounds = array<i64: 512, 288>}, {pipeline_mode = #tpu.pipeline_mode<synchronous>, transform_indices = @transform_1, window_bounds = array<i64: 288, 128>}, {pipeline_mode = #tpu.pipeline_mode<synchronous>, transform_indices = @transform_2, window_bounds = array<i64: 1, 128>}, {transform_indices = @transform_3, window_bounds = array<i64: 64, 128>}]} {
    %c0 = arith.constant 0 : index
    %c0_0 = arith.constant 0 : index
    %0 = vector.load %arg2[%c0, %c0_0] : memref<288x128xbf16, #tpu.memory_space<vmem>>, vector<288x128xbf16>
    %c0_1 = arith.constant 0 : index
    %c0_2 = arith.constant 0 : index
    %1 = vector.load %arg1[%c0_1, %c0_2] : memref<512x288xbf16, #tpu.memory_space<vmem>>, vector<64x288xbf16>
    %cst = arith.constant dense<0.000000e+00> : vector<64x128xf32>
    %2 = tpu.matmul %1, %0, %cst {dimension_numbers = #tpu.dot_dimension_numbers<[1], [0], [0], [1], [0, 0, 1, 1], [], []>} : vector<64x288xbf16>, vector<288x128xbf16>, vector<64x128xf32> -> vector<64x128xf32>
    %c64 = arith.constant 64 : index
    %c0_3 = arith.constant 0 : index
    %3 = vector.load %arg1[%c64, %c0_3] : memref<512x288xbf16, #tpu.memory_space<vmem>>, vector<64x288xbf16>
    %cst_4 = arith.constant dense<0.000000e+00> : vector<64x128xf32>
    %4 = tpu.matmul %3, %0, %cst_4 {dimension_numbers = #tpu.dot_dimension_numbers<[1], [0], [0], [1], [0, 0, 1, 1], [], []>} : vector<64x288xbf16>, vector<288x128xbf16>, vector<64x128xf32> -> vector<64x128xf32>
    %5 = arith.maximumf %2, %4 : vector<64x128xf32>
    %c128 = arith.constant 128 : index
    %c0_5 = arith.constant 0 : index
    %6 = vector.load %arg1[%c128, %c0_5] : memref<512x288xbf16, #tpu.memory_space<vmem>>, vector<64x288xbf16>
    %cst_6 = arith.constant dense<0.000000e+00> : vector<64x128xf32>
    %7 = tpu.matmul %6, %0, %cst_6 {dimension_numbers = #tpu.dot_dimension_numbers<[1], [0], [0], [1], [0, 0, 1, 1], [], []>} : vector<64x288xbf16>, vector<288x128xbf16>, vector<64x128xf32> -> vector<64x128xf32>
    %8 = arith.maximumf %5, %7 : vector<64x128xf32>
    %c192 = arith.constant 192 : index
    %c0_7 = arith.constant 0 : index
    %9 = vector.load %arg1[%c192, %c0_7] : memref<512x288xbf16, #tpu.memory_space<vmem>>, vector<64x288xbf16>
    %cst_8 = arith.constant dense<0.000000e+00> : vector<64x128xf32>
    %10 = tpu.matmul %9, %0, %cst_8 {dimension_numbers = #tpu.dot_dimension_numbers<[1], [0], [0], [1], [0, 0, 1, 1], [], []>} : vector<64x288xbf16>, vector<288x128xbf16>, vector<64x128xf32> -> vector<64x128xf32>
    %11 = arith.maximumf %8, %10 : vector<64x128xf32>
    %c256 = arith.constant 256 : index
    %c0_9 = arith.constant 0 : index
    %12 = vector.load %arg1[%c256, %c0_9] : memref<512x288xbf16, #tpu.memory_space<vmem>>, vector<64x288xbf16>
    %cst_10 = arith.constant dense<0.000000e+00> : vector<64x128xf32>
    %13 = tpu.matmul %12, %0, %cst_10 {dimension_numbers = #tpu.dot_dimension_numbers<[1], [0], [0], [1], [0, 0, 1, 1], [], []>} : vector<64x288xbf16>, vector<288x128xbf16>, vector<64x128xf32> -> vector<64x128xf32>
    %14 = arith.maximumf %11, %13 : vector<64x128xf32>
    %c320 = arith.constant 320 : index
    %c0_11 = arith.constant 0 : index
    %15 = vector.load %arg1[%c320, %c0_11] : memref<512x288xbf16, #tpu.memory_space<vmem>>, vector<64x288xbf16>
    %cst_12 = arith.constant dense<0.000000e+00> : vector<64x128xf32>
    %16 = tpu.matmul %15, %0, %cst_12 {dimension_numbers = #tpu.dot_dimension_numbers<[1], [0], [0], [1], [0, 0, 1, 1], [], []>} : vector<64x288xbf16>, vector<288x128xbf16>, vector<64x128xf32> -> vector<64x128xf32>
    %17 = arith.maximumf %14, %16 : vector<64x128xf32>
    %c384 = arith.constant 384 : index
    %c0_13 = arith.constant 0 : index
    %18 = vector.load %arg1[%c384, %c0_13] : memref<512x288xbf16, #tpu.memory_space<vmem>>, vector<64x288xbf16>
    %cst_14 = arith.constant dense<0.000000e+00> : vector<64x128xf32>
    %19 = tpu.matmul %18, %0, %cst_14 {dimension_numbers = #tpu.dot_dimension_numbers<[1], [0], [0], [1], [0, 0, 1, 1], [], []>} : vector<64x288xbf16>, vector<288x128xbf16>, vector<64x128xf32> -> vector<64x128xf32>
    %20 = arith.maximumf %17, %19 : vector<64x128xf32>
    %c448 = arith.constant 448 : index
    %c0_15 = arith.constant 0 : index
    %21 = vector.load %arg1[%c448, %c0_15] : memref<512x288xbf16, #tpu.memory_space<vmem>>, vector<64x288xbf16>
    %cst_16 = arith.constant dense<0.000000e+00> : vector<64x128xf32>
    %22 = tpu.matmul %21, %0, %cst_16 {dimension_numbers = #tpu.dot_dimension_numbers<[1], [0], [0], [1], [0, 0, 1, 1], [], []>} : vector<64x288xbf16>, vector<288x128xbf16>, vector<64x128xf32> -> vector<64x128xf32>
    %23 = arith.maximumf %20, %22 : vector<64x128xf32>
    %c0_17 = arith.constant 0 : index
    %c0_18 = arith.constant 0 : index
    %24 = vector.load %arg3[%c0_17, %c0_18] : memref<1x128xf32, #tpu.memory_space<vmem>>, vector<1x128xf32>
    %25 = vector.broadcast %24 : vector<1x128xf32> to vector<64x128xf32>
    %26 = arith.addf %23, %25 : vector<64x128xf32>
    %27 = arith.negf %26 : vector<64x128xf32>
    %28 = math.exp %27 : vector<64x128xf32>
    %cst_19 = arith.constant 1.000000e+00 : f32
    %29 = vector.broadcast %cst_19 : f32 to vector<64x128xf32>
    %30 = arith.addf %29, %28 : vector<64x128xf32>
    %31 = arith.divf %29, %30 : vector<64x128xf32>
    %c0_20 = arith.constant 0 : index
    %c0_21 = arith.constant 0 : index
    %32 = vector.load %arg4[%c0_20, %c0_21] : memref<64x128xf32, #tpu.memory_space<vmem>>, vector<64x128xf32>
    tpu.vector_store %arg4[%c0_20, %c0_21], %31 {strides = array<i32>} : memref<64x128xf32, #tpu.memory_space<vmem>>, vector<64x128xf32>,
    return
  }
  func.func @transform_0(%arg0: i32) -> (i32, i32) {
    %c0_i32 = arith.constant 0 : i32
    %c0_i32_0 = arith.constant 0 : i32
    return %arg0, %c0_i32 : i32, i32
  }
  func.func @transform_1(%arg0: i32) -> (i32, i32) {
    %c0_i32 = arith.constant 0 : i32
    %c0_i32_0 = arith.constant 0 : i32
    %c0_i32_1 = arith.constant 0 : i32
    return %c0_i32, %c0_i32_0 : i32, i32
  }
  func.func @transform_2(%arg0: i32) -> (i32, i32) {
    %c0_i32 = arith.constant 0 : i32
    %c0_i32_0 = arith.constant 0 : i32
    %c0_i32_1 = arith.constant 0 : i32
    return %c0_i32, %c0_i32_0 : i32, i32
  }
  func.func @transform_3(%arg0: i32) -> (i32, i32) {
    %c0_i32 = arith.constant 0 : i32
    %c0_i32_0 = arith.constant 0 : i32
    return %arg0, %c0_i32 : i32, i32
  }
}

module attributes {stable_mosaic.version = 11 : i64} {
  func.func @_update_gate_kernel(%arg0: i32, %arg1: memref<512x384xbf16, #tpu.memory_space<vmem>>, %arg2: memref<384x128xbf16, #tpu.memory_space<vmem>>, %arg3: memref<1x128xf32, #tpu.memory_space<vmem>>, %arg4: memref<64x128xf32, #tpu.memory_space<vmem>>) attributes {dimension_semantics = [#tpu.dimension_semantics<parallel>], iteration_bounds = array<i64: 2>, scalar_prefetch = 0 : i64, scratch_operands = 0 : i64, tpu.core_type = #tpu.core_type<tc>, window_params = [{transform_indices = @transform_0, window_bounds = array<i64: 512, 384>}, {pipeline_mode = #tpu.pipeline_mode<synchronous>, transform_indices = @transform_1, window_bounds = array<i64: 384, 128>}, {pipeline_mode = #tpu.pipeline_mode<synchronous>, transform_indices = @transform_2, window_bounds = array<i64: 1, 128>}, {transform_indices = @transform_3, window_bounds = array<i64: 64, 128>}]} {
    %c0 = arith.constant 0 : index
    %c0_0 = arith.constant 0 : index
    %0 = vector.load %arg2[%c0, %c0_0] : memref<384x128xbf16, #tpu.memory_space<vmem>>, vector<384x128xbf16>
    %c0_1 = arith.constant 0 : index
    %c0_2 = arith.constant 0 : index
    %1 = vector.load %arg1[%c0_1, %c0_2] : memref<512x384xbf16, #tpu.memory_space<vmem>>, vector<64x384xbf16>
    %cst = arith.constant dense<0.000000e+00> : vector<64x128xf32>
    %2 = tpu.matmul %1, %0, %cst {dimension_numbers = #tpu.dot_dimension_numbers<[1], [0], [0], [1], [0, 0, 1, 1], [], []>} : vector<64x384xbf16>, vector<384x128xbf16>, vector<64x128xf32> -> vector<64x128xf32>
    %c64 = arith.constant 64 : index
    %c0_3 = arith.constant 0 : index
    %3 = vector.load %arg1[%c64, %c0_3] : memref<512x384xbf16, #tpu.memory_space<vmem>>, vector<64x384xbf16>
    %cst_4 = arith.constant dense<0.000000e+00> : vector<64x128xf32>
    %4 = tpu.matmul %3, %0, %cst_4 {dimension_numbers = #tpu.dot_dimension_numbers<[1], [0], [0], [1], [0, 0, 1, 1], [], []>} : vector<64x384xbf16>, vector<384x128xbf16>, vector<64x128xf32> -> vector<64x128xf32>
    %5 = arith.maximumf %2, %4 : vector<64x128xf32>
    %c128 = arith.constant 128 : index
    %c0_5 = arith.constant 0 : index
    %6 = vector.load %arg1[%c128, %c0_5] : memref<512x384xbf16, #tpu.memory_space<vmem>>, vector<64x384xbf16>
    %cst_6 = arith.constant dense<0.000000e+00> : vector<64x128xf32>
    %7 = tpu.matmul %6, %0, %cst_6 {dimension_numbers = #tpu.dot_dimension_numbers<[1], [0], [0], [1], [0, 0, 1, 1], [], []>} : vector<64x384xbf16>, vector<384x128xbf16>, vector<64x128xf32> -> vector<64x128xf32>
    %8 = arith.maximumf %5, %7 : vector<64x128xf32>
    %c192 = arith.constant 192 : index
    %c0_7 = arith.constant 0 : index
    %9 = vector.load %arg1[%c192, %c0_7] : memref<512x384xbf16, #tpu.memory_space<vmem>>, vector<64x384xbf16>
    %cst_8 = arith.constant dense<0.000000e+00> : vector<64x128xf32>
    %10 = tpu.matmul %9, %0, %cst_8 {dimension_numbers = #tpu.dot_dimension_numbers<[1], [0], [0], [1], [0, 0, 1, 1], [], []>} : vector<64x384xbf16>, vector<384x128xbf16>, vector<64x128xf32> -> vector<64x128xf32>
    %11 = arith.maximumf %8, %10 : vector<64x128xf32>
    %c256 = arith.constant 256 : index
    %c0_9 = arith.constant 0 : index
    %12 = vector.load %arg1[%c256, %c0_9] : memref<512x384xbf16, #tpu.memory_space<vmem>>, vector<64x384xbf16>
    %cst_10 = arith.constant dense<0.000000e+00> : vector<64x128xf32>
    %13 = tpu.matmul %12, %0, %cst_10 {dimension_numbers = #tpu.dot_dimension_numbers<[1], [0], [0], [1], [0, 0, 1, 1], [], []>} : vector<64x384xbf16>, vector<384x128xbf16>, vector<64x128xf32> -> vector<64x128xf32>
    %14 = arith.maximumf %11, %13 : vector<64x128xf32>
    %c320 = arith.constant 320 : index
    %c0_11 = arith.constant 0 : index
    %15 = vector.load %arg1[%c320, %c0_11] : memref<512x384xbf16, #tpu.memory_space<vmem>>, vector<64x384xbf16>
    %cst_12 = arith.constant dense<0.000000e+00> : vector<64x128xf32>
    %16 = tpu.matmul %15, %0, %cst_12 {dimension_numbers = #tpu.dot_dimension_numbers<[1], [0], [0], [1], [0, 0, 1, 1], [], []>} : vector<64x384xbf16>, vector<384x128xbf16>, vector<64x128xf32> -> vector<64x128xf32>
    %17 = arith.maximumf %14, %16 : vector<64x128xf32>
    %c384 = arith.constant 384 : index
    %c0_13 = arith.constant 0 : index
    %18 = vector.load %arg1[%c384, %c0_13] : memref<512x384xbf16, #tpu.memory_space<vmem>>, vector<64x384xbf16>
    %cst_14 = arith.constant dense<0.000000e+00> : vector<64x128xf32>
    %19 = tpu.matmul %18, %0, %cst_14 {dimension_numbers = #tpu.dot_dimension_numbers<[1], [0], [0], [1], [0, 0, 1, 1], [], []>} : vector<64x384xbf16>, vector<384x128xbf16>, vector<64x128xf32> -> vector<64x128xf32>
    %20 = arith.maximumf %17, %19 : vector<64x128xf32>
    %c448 = arith.constant 448 : index
    %c0_15 = arith.constant 0 : index
    %21 = vector.load %arg1[%c448, %c0_15] : memref<512x384xbf16, #tpu.memory_space<vmem>>, vector<64x384xbf16>
    %cst_16 = arith.constant dense<0.000000e+00> : vector<64x128xf32>
    %22 = tpu.matmul %21, %0, %cst_16 {dimension_numbers = #tpu.dot_dimension_numbers<[1], [0], [0], [1], [0, 0, 1, 1], [], []>} : vector<64x384xbf16>, vector<384x128xbf16>, vector<64x128xf32> -> vector<64x128xf32>
    %23 = arith.maximumf %20, %22 : vector<64x128xf32>
    %c0_17 = arith.constant 0 : index
    %c0_18 = arith.constant 0 : index
    %24 = vector.load %arg3[%c0_17, %c0_18] : memref<1x128xf32, #tpu.memory_space<vmem>>, vector<1x128xf32>
    %25 = vector.broadcast %24 : vector<1x128xf32> to vector<64x128xf32>
    %26 = arith.addf %23, %25 : vector<64x128xf32>
    %27 = arith.negf %26 : vector<64x128xf32>
    %28 = math.exp %27 : vector<64x128xf32>
    %cst_19 = arith.constant 1.000000e+00 : f32
    %29 = vector.broadcast %cst_19 : f32 to vector<64x128xf32>
    %30 = arith.addf %29, %28 : vector<64x128xf32>
    %31 = arith.divf %29, %30 : vector<64x128xf32>
    %c0_20 = arith.constant 0 : index
    %c0_21 = arith.constant 0 : index
    %32 = vector.load %arg4[%c0_20, %c0_21] : memref<64x128xf32, #tpu.memory_space<vmem>>, vector<64x128xf32>
    tpu.vector_store %arg4[%c0_20, %c0_21], %31 {strides = array<i32>} : memref<64x128xf32, #tpu.memory_space<vmem>>, vector<64x128xf32>,
    return
  }
  func.func @transform_0(%arg0: i32) -> (i32, i32) {
    %c0_i32 = arith.constant 0 : i32
    %c0_i32_0 = arith.constant 0 : i32
    return %arg0, %c0_i32 : i32, i32
  }
  func.func @transform_1(%arg0: i32) -> (i32, i32) {
    %c0_i32 = arith.constant 0 : i32
    %c0_i32_0 = arith.constant 0 : i32
    %c0_i32_1 = arith.constant 0 : i32
    return %c0_i32, %c0_i32_0 : i32, i32
  }
  func.func @transform_2(%arg0: i32) -> (i32, i32) {
    %c0_i32 = arith.constant 0 : i32
    %c0_i32_0 = arith.constant 0 : i32
    %c0_i32_1 = arith.constant 0 : i32
    return %c0_i32, %c0_i32_0 : i32, i32
  }
  func.func @transform_3(%arg0: i32) -> (i32, i32) {
    %c0_i32 = arith.constant 0 : i32
    %c0_i32_0 = arith.constant 0 : i32
    return %arg0, %c0_i32 : i32, i32
  }
}

</mosaic_0001>

<llo_original>
// kernel: custom-call.4
$region0: #{custom-call.4}
  %s0 = inlined_call_operand.vmem [shape: bf16[4,2,8,8,8], index: 0, kind: output, shape index: {}]

// kernel: closed_call.14
$region0: #{closed_call.14}
  #allocation0 [shape = 'u32[]', space=smem, size = 0x4, offset = 0x4, fixed_abs, tag = 'smem constant byte address 0x4 - core index']
  #allocation1 [shape = 'u32[144,128]{1,0:T(1,128)}', space=vmem, size = 0x12000, scoped, tag = 'internal scratch']
  %s0 = inlined_call_operand.vmem [shape: bf16[1024,288], index: 0, kind: input, shape index: {}]
  %s1 = inlined_call_operand.vmem [shape: bf16[288,128], index: 1, kind: input, shape index: {}]
  %s2 = inlined_call_operand.vmem [shape: f32[1,128], index: 2, kind: input, shape index: {}]
  %s3 = inlined_call_operand.vmem [shape: f32[128,128], index: 3, kind: output, shape index: {}]
  %s4 = sld [smem:[#allocation0]]
  $region45: #{closed_call.14} parent=0
    _
  %s6 = ssub.s32 1, %s4
  %s7 = scalar_select 0, %s6, %s4
  loop: start=0, step=1, limit=4
  $region2: #{closed_call.14} parent=0 // loop_pre_header
    _
  $region3: #{closed_call.14} parent=0 // loop_header
    %s9 = sphi 0, %s13
    %p10 = scmp.ge.s32.totalorder %s9, 4
    %s19 = sphi 0, %s21
    %s22 = sphi 0, %s19
    %s23 = sphi 0, %s22
    %s39 = sphi 0, %s23
    %s43 = sphi 0, %s43
    %s45 = sphi 0, %s43
    %s46 = sphi 0, %s45
    %s60 = sphi 0, %s46
    %s64 = sphi 0, %s64
    %s66 = sphi 0, %s64
    %s67 = sphi 0, %s66
    %s81 = sphi 0, %s67
    %s87 = sphi 0, %s89
    %s90 = sphi 0, %s87
    %s91 = sphi 0, %s90
    %s107 = sphi 0, %s91
  $region4: #{closed_call.14} parent=0 // loop_header_branch
    %12 = sbr.rel (%p10) target = $region8
  $region5: #{closed_call.14} parent=0 // loop_body
    %s14 = ssub.s32 %s9, 1
    %s15 = ssub.s32 %s9, 2
    %s16 = sadd.s32 %s9, 1
    %s17 = ssub.s32 %s9, %s16
    %p18 = scmp.eq.s32.totalorder %s17, 0
    %s20 = sadd.s32 %s19, 1
    %s21 = scalar_select %p18, %s19, %s20
    %p24 = pneg %p18
    %p25 = scmp.eq.s32.totalorder %s9, 1
    %p26 = por %p24, %p25
    %p27 = scmp.ne.s32.totalorder %s19, %s22
    %p28 = scmp.eq.s32.totalorder %s9, 0
    %p29 = por %p27, %p28
    %p30 = scmp.ne.s32.totalorder %s19, %s22
    %p31 = scmp.eq.s32.totalorder %s14, 1
    %p32 = por %p30, %p31
    %p33 = scmp.ne.s32.totalorder %s22, %s23
    %p34 = scmp.eq.s32.totalorder %s14, 0
    %p35 = por %p33, %p34
    %p36 = scmp.ne.s32.totalorder %s22, %s23
    %p37 = scmp.eq.s32.totalorder %s15, 1
    %p38 = por %p36, %p37
    %p40 = scmp.ne.s32.totalorder %s23, %s39
    %p41 = scmp.eq.s32.totalorder %s15, 0
    %p42 = por %p40, %p41
    %s44 = sadd.s32 %s43, 1
    %p47 = scmp.eq.s32.totalorder %s9, 1
    %p48 = scmp.ne.s32.totalorder %s43, %s45
    %p49 = scmp.eq.s32.totalorder %s9, 0
    %p50 = por %p48, %p49
    %p51 = scmp.ne.s32.totalorder %s43, %s45
    %p52 = scmp.eq.s32.totalorder %s14, 1
    %p53 = por %p51, %p52
    %p54 = scmp.ne.s32.totalorder %s45, %s46
    %p55 = scmp.eq.s32.totalorder %s14, 0
    %p56 = por %p54, %p55
    %p57 = scmp.ne.s32.totalorder %s45, %s46
    %p58 = scmp.eq.s32.totalorder %s15, 1
    %p59 = por %p57, %p58
    %p61 = scmp.ne.s32.totalorder %s46, %s60
    %p62 = scmp.eq.s32.totalorder %s15, 0
    %p63 = por %p61, %p62
    %s65 = sadd.s32 %s64, 1
    %p68 = scmp.eq.s32.totalorder %s9, 1
    %p69 = scmp.ne.s32.totalorder %s64, %s66
    %p70 = scmp.eq.s32.totalorder %s9, 0
    %p71 = por %p69, %p70
    %p72 = scmp.ne.s32.totalorder %s64, %s66
    %p73 = scmp.eq.s32.totalorder %s14, 1
    %p74 = por %p72, %p73
    %p75 = scmp.ne.s32.totalorder %s66, %s67
    %p76 = scmp.eq.s32.totalorder %s14, 0
    %p77 = por %p75, %p76
    %p78 = scmp.ne.s32.totalorder %s66, %s67
    %p79 = scmp.eq.s32.totalorder %s15, 1
    %p80 = por %p78, %p79
    %p82 = scmp.ne.s32.totalorder %s67, %s81
    %p83 = scmp.eq.s32.totalorder %s15, 0
    %p84 = por %p82, %p83
    %s85 = ssub.s32 %s9, %s16
    %p86 = scmp.eq.s32.totalorder %s85, 0
    %s88 = sadd.s32 %s87, 1
    %s89 = scalar_select %p86, %s87, %s88
    %p92 = pneg %p86
    %p93 = scmp.eq.s32.totalorder %s9, 1
    %p94 = por %p92, %p93
    %p95 = scmp.ne.s32.totalorder %s87, %s90
    %p96 = scmp.eq.s32.totalorder %s9, 0
    %p97 = por %p95, %p96
    %p98 = scmp.ne.s32.totalorder %s87, %s90
    %p99 = scmp.eq.s32.totalorder %s14, 1
    %p100 = por %p98, %p99
    %p101 = scmp.ne.s32.totalorder %s90, %s91
    %p102 = scmp.eq.s32.totalorder %s14, 0
    %p103 = por %p101, %p102
    %p104 = scmp.ne.s32.totalorder %s90, %s91
    %p105 = scmp.eq.s32.totalorder %s15, 1
    %p106 = por %p104, %p105
    %p108 = scmp.ne.s32.totalorder %s91, %s107
    %p109 = scmp.eq.s32.totalorder %s15, 0
    %p110 = por %p108, %p109
    %p111 = scmp.le.s32.totalorder 1, %s9
    %p112 = scmp.lt.s32.totalorder %s9, 3
    %p113 = pnand %p111, %p112
    %p114 = pneg %p113
    // Predicated region
    $region9: #{closed_call.14} parent=5 // pred_check
      _
    $region10: #{closed_call.14} parent=5 // pred_check_branch
      %116 = sbr.rel (%p113) target = $region12
    $region11: #{closed_call.14} parent=5 // pred_region
      %s117 = ssub.s32 %s9, 1
      // Predicated region
      $region13: #{closed_call.14} parent=11 // pred_check
        %p118 = pneg %p56
      $region14: #{closed_call.14} parent=11 // pred_check_branch
        %120 = sbr.rel (%p118) target = $region16
      $region15: #{closed_call.14} parent=11 // pred_region
        _
      $region16: #{closed_call.14} parent=11 // pred_fallthru
        _
      // Predicated region
      $region17: #{closed_call.14} parent=11 // pred_check
        %p121 = pneg %p77
      $region18: #{closed_call.14} parent=11 // pred_check_branch
        %123 = sbr.rel (%p121) target = $region20
      $region19: #{closed_call.14} parent=11 // pred_region
        _
      $region20: #{closed_call.14} parent=11 // pred_fallthru
        _
    $region12: #{closed_call.14} parent=5 // pred_fallthru
      _
    %p124 = scmp.lt.s32.totalorder %s9, 2
    // Predicated region
    $region21: #{closed_call.14} parent=5 // pred_check
      %p125 = pneg %p124
    $region22: #{closed_call.14} parent=5 // pred_check_branch
      %127 = sbr.rel (%p125) target = $region24
    $region23: #{closed_call.14} parent=5 // pred_region
      // Predicated region
      $region25: #{closed_call.14} parent=23 // pred_check
        %p128 = pneg %p29
      $region26: #{closed_call.14} parent=23 // pred_check_branch
        %130 = sbr.rel (%p128) target = $region28
      $region27: #{closed_call.14} parent=23 // pred_region
        %s131 = smul.u32 64, %s9
        %p132 = scmp.lt.s32.totalorder %s131, 127
        %s133 = scalar_select %p132, %s131, 127
        %s134 = smul.addr %s133, 3
        %s135 = smul.addr %s134, 4
        %s136 = scalar_lea.vmem %s0, %s135
        %s137 = smul.u32 64, %s9
      $region28: #{closed_call.14} parent=23 // pred_fallthru
        _
    $region24: #{closed_call.14} parent=5 // pred_fallthru
      _
    %p138 = scmp.le.s32.totalorder 1, %s9
    %p139 = scmp.lt.s32.totalorder %s9, 3
    %p140 = pnand %p138, %p139
    %p141 = pneg %p140
    // Predicated region
    $region29: #{closed_call.14} parent=5 // pred_check
      _
    $region30: #{closed_call.14} parent=5 // pred_check_branch
      %143 = sbr.rel (%p140) target = $region32
    $region31: #{closed_call.14} parent=5 // pred_region
      %s144 = ssub.s32 %s9, 1
      %s145 = smul.u32 64, %s14
      %p146 = scmp.lt.s32.totalorder %s145, 127
      %s147 = scalar_select %p146, %s145, 127
      %s148 = smul.addr %s147, 3
      %s149 = smul.addr %s148, 4
      %s150 = scalar_lea.vmem %s0, %s149
      %p151 = pneg %p35
      %p152 = pneg %p32
      %p153 = pneg %p56
      %p154 = pneg %p53
      %p155 = pneg %p77
      %p156 = pneg %p74
      %p157 = pneg %p103
      %p158 = pneg %p100
      %s159 = smul.u32 8, %s14
      %p160 = scmp.lt.s32.totalorder %s159, 15
      %s161 = scalar_select %p160, %s159, 15
      %s162 = smul.addr %s161, 8
      %s163 = scalar_lea.vmem %s3, %s162
      %s164 = smul.u32 64, %s14
      %p165 = scmp.lt.s32.totalorder %s164, 127
      %s166 = scalar_select %p165, %s164, 127
      %s167 = smul.addr %s166, 3
      %s168 = smul.addr %s167, 4
      %s169 = scalar_lea.vmem %s0, %s168
      %s170 = smul.u32 64, %s14
      %s171 = smul.u32 8, %s14
      %p172 = scmp.lt.s32.totalorder %s171, 15
      %s173 = scalar_select %p172, %s171, 15
      %s174 = smul.addr %s173, 8
      %s175 = scalar_lea.vmem %s3, %s174
      %s176 = smul.u32 8, %s14
      %v178 = vld [vmem:[%s1] sm:$0xf]
      %v179 = vld [vmem:[%s1 + $0x4] sm:$0xf]
      %v180 = vld [vmem:[%s1 + $0x8] sm:$0xf]
      %v181 = vld [vmem:[%s1 + $0xc] sm:$0xf]
      %v182 = vld [vmem:[%s1 + $0x10] sm:$0xf]
      %v183 = vld [vmem:[%s1 + $0x14] sm:$0xf]
      %v184 = vld [vmem:[%s1 + $0x18] sm:$0xf]
      %v185 = vld [vmem:[%s1 + $0x1c] sm:$0xf]
      %v186 = vld [vmem:[%s1 + $0x20] sm:$0xf]
      %v187 = vld [vmem:[%s1 + $0x24] sm:$0xf]
      %v188 = vld [vmem:[%s1 + $0x28] sm:$0xf]
      %v189 = vld [vmem:[%s1 + $0x2c] sm:$0xf]
      %v190 = vld [vmem:[%s1 + $0x30] sm:$0xf]
      %v191 = vld [vmem:[%s1 + $0x34] sm:$0xf]
      %v192 = vld [vmem:[%s1 + $0x38] sm:$0xf]
      %v193 = vld [vmem:[%s1 + $0x3c] sm:$0xf]
      %v194 = vld [vmem:[%s1 + $0x40] sm:$0xf]
      %v195 = vld [vmem:[%s1 + $0x44] sm:$0xf]
      %v196 = vld [vmem:[%s1 + $0x48] sm:$0xf]
      %v197 = vld [vmem:[%s1 + $0x4c] sm:$0xf]
      %v198 = vld [vmem:[%s1 + $0x50] sm:$0xf]
      %v199 = vld [vmem:[%s1 + $0x54] sm:$0xf]
      %v200 = vld [vmem:[%s1 + $0x58] sm:$0xf]
      %v201 = vld [vmem:[%s1 + $0x5c] sm:$0xf]
      %v202 = vld [vmem:[%s1 + $0x60] sm:$0xf]
      %v203 = vld [vmem:[%s1 + $0x64] sm:$0xf]
      %v204 = vld [vmem:[%s1 + $0x68] sm:$0xf]
      %v205 = vld [vmem:[%s1 + $0x6c] sm:$0xf]
      %v206 = vld [vmem:[%s1 + $0x70] sm:$0xf]
      %v207 = vld [vmem:[%s1 + $0x74] sm:$0xf]
      %v208 = vld [vmem:[%s1 + $0x78] sm:$0xf]
      %v209 = vld [vmem:[%s1 + $0x7c] sm:$0xf]
      %v210 = vld [vmem:[%s1 + $0x80] sm:$0xf]
      %v211 = vld [vmem:[%s1 + $0x84] sm:$0xf]
      %v212 = vld [vmem:[%s1 + $0x88] sm:$0xf]
      %v213 = vld [vmem:[%s1 + $0x8c] sm:$0xf]
      %v214 = vld [vmem:[%s169] sm:$0xff]
      %v215 = vld [vmem:[%s169 + $0x8] sm:$0xf]
      %v216 = vld [vmem:[%s169 + $0xc] sm:$0xff]
      %v217 = vld [vmem:[%s169 + $0x14] sm:$0xf]
      %v218 = vld [vmem:[%s169 + $0x18] sm:$0xff]
      %v219 = vld [vmem:[%s169 + $0x20] sm:$0xf]
      %v220 = vld [vmem:[%s169 + $0x24] sm:$0xff]
      %v221 = vld [vmem:[%s169 + $0x2c] sm:$0xf]
      %v222 = vld [vmem:[%s169 + $0x30] sm:$0xff]
      %v223 = vld [vmem:[%s169 + $0x38] sm:$0xf]
      %v224 = vld [vmem:[%s169 + $0x3c] sm:$0xff]
      %v225 = vld [vmem:[%s169 + $0x44] sm:$0xf]
      %v226 = vld [vmem:[%s169 + $0x48] sm:$0xff]
      %v227 = vld [vmem:[%s169 + $0x50] sm:$0xf]
      %v228 = vld [vmem:[%s169 + $0x54] sm:$0xff]
      %v229 = vld [vmem:[%s169 + $0x5c] sm:$0xf]
      %v246 = vunpack.c.l.b16 %v214
      %v247 = vunpack.c.h.b16 %v214
      %v248 = vunpack.c.l.b16 %v215
      %v249 = vunpack.c.l.b16 %v216
      %v250 = vunpack.c.h.b16 %v216
      %v251 = vunpack.c.l.b16 %v217
      %v252 = vunpack.c.l.b16 %v218
      %v253 = vunpack.c.h.b16 %v218
      %v254 = vunpack.c.l.b16 %v219
      %v255 = vunpack.c.l.b16 %v220
      %v256 = vunpack.c.h.b16 %v220
      %v257 = vunpack.c.l.b16 %v221
      %v258 = vunpack.c.l.b16 %v222
      %v259 = vunpack.c.h.b16 %v222
      %v260 = vunpack.c.l.b16 %v223
      %v261 = vunpack.c.l.b16 %v224
      %v262 = vunpack.c.h.b16 %v224
      %v263 = vunpack.c.l.b16 %v225
      %v264 = vunpack.c.l.b16 %v226
      %v265 = vunpack.c.h.b16 %v226
      %v266 = vunpack.c.l.b16 %v227
      %v267 = vunpack.c.l.b16 %v228
      %v268 = vunpack.c.h.b16 %v228
      %v269 = vunpack.c.l.b16 %v229
      %v270 = vpack.c.b16 %v249, %v246
      %v271 = vpack.c.b16 %v250, %v247
      %v272 = vpack.c.b16 %v251, %v248
      %v273 = vpack.c.b16 %v255, %v252
      %v274 = vpack.c.b16 %v256, %v253
      %v275 = vpack.c.b16 %v257, %v254
      %v276 = vpack.c.b16 %v261, %v258
      %v277 = vpack.c.b16 %v262, %v259
      %v278 = vpack.c.b16 %v263, %v260
      %v279 = vpack.c.b16 %v267, %v264
      %v280 = vpack.c.b16 %v268, %v265
      %v281 = vpack.c.b16 %v269, %v266
      %v326 = vunpack.c.l.b16 %v178
      %v327 = vunpack.c.l.b16 %v179
      %v328 = vunpack.c.l.b16 %v180
      %v329 = vunpack.c.l.b16 %v181
      %v330 = vunpack.c.l.b16 %v182
      %v331 = vunpack.c.l.b16 %v183
      %v332 = vunpack.c.l.b16 %v184
      %v333 = vunpack.c.l.b16 %v185
      %v334 = vunpack.c.l.b16 %v186
      %v335 = vunpack.c.l.b16 %v187
      %v336 = vunpack.c.l.b16 %v188
      %v337 = vunpack.c.l.b16 %v189
      %v338 = vunpack.c.l.b16 %v190
      %v339 = vunpack.c.l.b16 %v191
      %v340 = vunpack.c.l.b16 %v192
      %v341 = vunpack.c.l.b16 %v193
      %v342 = vunpack.c.l.b16 %v194
      %v343 = vunpack.c.l.b16 %v195
      %v344 = vunpack.c.l.b16 %v196
      %v345 = vunpack.c.l.b16 %v197
      %v346 = vunpack.c.l.b16 %v198
      %v347 = vunpack.c.l.b16 %v199
      %v348 = vunpack.c.l.b16 %v200
      %v349 = vunpack.c.l.b16 %v201
      %v350 = vunpack.c.l.b16 %v202
      %v351 = vunpack.c.l.b16 %v203
      %v352 = vunpack.c.l.b16 %v204
      %v353 = vunpack.c.l.b16 %v205
      %v354 = vunpack.c.l.b16 %v206
      %v355 = vunpack.c.l.b16 %v207
      %v356 = vunpack.c.l.b16 %v208
      %v357 = vunpack.c.l.b16 %v209
      %v358 = vunpack.c.l.b16 %v210
      %v359 = vunpack.c.l.b16 %v211
      %v360 = vunpack.c.l.b16 %v212
      %v361 = vunpack.c.l.b16 %v213
      %v362 = vpack.c.b16 %v327, %v326
      %v363 = vpack.c.b16 %v329, %v328
      %v364 = vpack.c.b16 %v331, %v330
      %v365 = vpack.c.b16 %v333, %v332
      %v366 = vpack.c.b16 %v335, %v334
      %v367 = vpack.c.b16 %v337, %v336
      %v368 = vpack.c.b16 %v339, %v338
      %v369 = vpack.c.b16 %v341, %v340
      %v370 = vpack.c.b16 %v343, %v342
      %v371 = vpack.c.b16 %v345, %v344
      %v372 = vpack.c.b16 %v347, %v346
      %v373 = vpack.c.b16 %v349, %v348
      %v374 = vpack.c.b16 %v351, %v350
      %v375 = vpack.c.b16 %v353, %v352
      %v376 = vpack.c.b16 %v355, %v354
      %v377 = vpack.c.b16 %v357, %v356
      %v378 = vpack.c.b16 %v359, %v358
      %v379 = vpack.c.b16 %v361, %v360
      %vm398 = vcmask 261120
      %v400 = vsel %vm398, %v272, 0
      %v403 = vsel %vm398, %v275, 0
      %v406 = vsel %vm398, %v278, 0
      %v409 = vsel %vm398, %v281, 0
      %411 = vmatprep.subr.bf16.mxu0 0
      %412 = vmatpush1.bf16.msra.mxu0 %v362
      %413 = vmatprep.subr.bf16.mxu0 0
      %414 = vmatpush1.bf16.msra.mxu0 %v363
      %415 = vmatprep.subr.bf16.mxu0 0
      %416 = vmatpush1.bf16.msra.mxu0 %v364
      %417 = vmatprep.subr.bf16.mxu0 0
      %418 = vmatpush1.bf16.msra.mxu0 %v365
      %419 = vmatprep.subr.bf16.mxu0 0
      %420 = vmatpush1.bf16.msra.mxu0 %v366
      %421 = vmatprep.subr.bf16.mxu0 0
      %422 = vmatpush1.bf16.msra.mxu0 %v367
      %423 = vmatprep.subr.bf16.mxu0 0
      %424 = vmatpush1.bf16.msra.mxu0 %v368
      %425 = vmatprep.subr.bf16.mxu0 0
      %426 = vmatpush1.bf16.msra.mxu0 %v369
      %427 = vmatprep.subr.bf16.mxu0 0
      %428 = vmatpush1.bf16.msra.mxu0 %v370
      %429 = vmatprep.subr.bf16.mxu0 0
      %430 = vmatpush1.bf16.msra.mxu0 %v371
      %431 = vmatprep.subr.bf16.mxu0 0
      %432 = vmatpush1.bf16.msra.mxu0 %v372
      %433 = vmatprep.subr.bf16.mxu0 0
      %434 = vmatpush1.bf16.msra.mxu0 %v373
      %435 = vmatprep.subr.bf16.mxu0 0
      %436 = vmatpush1.bf16.msra.mxu0 %v374
      %437 = vmatprep.subr.bf16.mxu0 0
      %438 = vmatpush1.bf16.msra.mxu0 %v375
      %439 = vmatprep.subr.bf16.mxu0 0
      %440 = vmatpush1.bf16.msra.mxu0 %v376
      %441 = vmatprep.subr.bf16.mxu0 0
      %442 = vmatpush1.bf16.msra.mxu0 %v377
      %443 = vmatprep.mubr.bf16.mxu0 %v271
      %444 = vmatmul.mubr.bf16.gmra.mrb[0].mxu0 %v270
      %v445 = vpop.f32.mrb[0].mxu0
      %v446 = vadd.f32 0.0, %v445
      %v447 = vpop.f32.mrb[0].mxu0
      %v448 = vpop.f32.mrb[0].mxu0
      %v449 = vadd.f32 0.0, %v448
      %v450 = vpop.f32.mrb[0].mxu0
      %451 = vmatprep.mubr.bf16.mxu0 %v274
      %452 = vmatmul.mubr.bf16.gmra.mrb[0].mxu0 %v273
      %v453 = vpop.f32.mrb[0].mxu0
      %v454 = vadd.f32 0.0, %v453
      %v455 = vpop.f32.mrb[0].mxu0
      %v456 = vpop.f32.mrb[0].mxu0
      %v457 = vadd.f32 0.0, %v456
      %v458 = vpop.f32.mrb[0].mxu0
      %459 = vmatprep.mubr.bf16.mxu0 %v277
      %460 = vmatmul.mubr.bf16.gmra.mrb[0].mxu0 %v276
      %v461 = vpop.f32.mrb[0].mxu0
      %v462 = vadd.f32 0.0, %v461
      %v463 = vpop.f32.mrb[0].mxu0
      %v464 = vpop.f32.mrb[0].mxu0
      %v465 = vadd.f32 0.0, %v464
      %v466 = vpop.f32.mrb[0].mxu0
      %467 = vmatprep.mubr.bf16.mxu0 %v280
      %468 = vmatmul.mubr.bf16.gmra.mrb[0].mxu0 %v279
      %v469 = vpop.f32.mrb[0].mxu0
      %v470 = vadd.f32 0.0, %v469
      %v471 = vpop.f32.mrb[0].mxu0
      %v472 = vpop.f32.mrb[0].mxu0
      %v473 = vadd.f32 0.0, %v472
      %v474 = vpop.f32.mrb[0].mxu0
      %475 = vdwg.mxu0
      %476 = vmatprep.subr.bf16.mxu0 0
      %477 = vmatpush1.bf16.msra.mxu0 %v378
      %478 = vmatprep.subr.bf16.mxu0 0
      %479 = vmatpush1.bf16.msra.mxu0 %v379
      %480 = vmatprep.subr.bf16.mxu0 0
      %481 = vmatpush1.bf16.msra.mxu0 0
      %482 = vmatprep.subr.bf16.mxu0 0
      %483 = vmatpush1.bf16.msra.mxu0 0
      %484 = vmatprep.subr.bf16.mxu0 0
      %485 = vmatpush1.bf16.msra.mxu0 0
      %486 = vmatprep.subr.bf16.mxu0 0
      %487 = vmatpush1.bf16.msra.mxu0 0
      %488 = vmatprep.subr.bf16.mxu0 0
      %489 = vmatpush1.bf16.msra.mxu0 0
      %490 = vmatprep.subr.bf16.mxu0 0
      %491 = vmatpush1.bf16.msra.mxu0 0
      %492 = vmatprep.subr.bf16.mxu0 0
      %493 = vmatpush1.bf16.msra.mxu0 0
      %494 = vmatprep.subr.bf16.mxu0 0
      %495 = vmatpush1.bf16.msra.mxu0 0
      %496 = vmatprep.subr.bf16.mxu0 0
      %497 = vmatpush1.bf16.msra.mxu0 0
      %498 = vmatprep.subr.bf16.mxu0 0
      %499 = vmatpush1.bf16.msra.mxu0 0
      %500 = vmatprep.subr.bf16.mxu0 0
      %501 = vmatpush1.bf16.msra.mxu0 0
      %502 = vmatprep.subr.bf16.mxu0 0
      %503 = vmatpush1.bf16.msra.mxu0 0
      %504 = vmatprep.subr.bf16.mxu0 0
      %505 = vmatpush1.bf16.msra.mxu0 0
      %506 = vmatprep.subr.bf16.mxu0 0
      %507 = vmatpush1.bf16.msra.mxu0 0
      %508 = vmatprep.mubr.bf16.mxu0 0
      %509 = vmatmul.mubr.bf16.gmra.mrb[0].mxu0 %v400
      %v510 = vpop.f32.mrb[0].mxu0
      %v511 = vadd.f32 %v446, %v510
      %v512 = vpop.f32.mrb[0].mxu0
      %v513 = vpop.f32.mrb[0].mxu0
      %v514 = vadd.f32 %v449, %v513
      %v515 = vpop.f32.mrb[0].mxu0
      %516 = vmatprep.mubr.bf16.mxu0 0
      %517 = vmatmul.mubr.bf16.gmra.mrb[0].mxu0 %v403
      %v518 = vpop.f32.mrb[0].mxu0
      %v519 = vadd.f32 %v454, %v518
      %v520 = vpop.f32.mrb[0].mxu0
      %v521 = vpop.f32.mrb[0].mxu0
      %v522 = vadd.f32 %v457, %v521
      %v523 = vpop.f32.mrb[0].mxu0
      %524 = vmatprep.mubr.bf16.mxu0 0
      %525 = vmatmul.mubr.bf16.gmra.mrb[0].mxu0 %v406
      %v526 = vpop.f32.mrb[0].mxu0
      %v527 = vadd.f32 %v462, %v526
      %v528 = vpop.f32.mrb[0].mxu0
      %v529 = vpop.f32.mrb[0].mxu0
      %v530 = vadd.f32 %v465, %v529
      %v531 = vpop.f32.mrb[0].mxu0
      %532 = vmatprep.mubr.bf16.mxu0 0
      %533 = vmatmul.mubr.bf16.gmra.mrb[0].mxu0 %v409
      %v534 = vpop.f32.mrb[0].mxu0
      %v535 = vadd.f32 %v470, %v534
      %v536 = vpop.f32.mrb[0].mxu0
      %v537 = vpop.f32.mrb[0].mxu0
      %v538 = vadd.f32 %v473, %v537
      %v539 = vpop.f32.mrb[0].mxu0
      %540 = vdwg.mxu0
      %v541 = vld [vmem:[%s169 + $0x60] sm:$0xff]
      %v542 = vld [vmem:[%s169 + $0x68] sm:$0xf]
      %v543 = vld [vmem:[%s169 + $0x6c] sm:$0xff]
      %v544 = vld [vmem:[%s169 + $0x74] sm:$0xf]
      %v545 = vld [vmem:[%s169 + $0x78] sm:$0xff]
      %v546 = vld [vmem:[%s169 + $0x80] sm:$0xf]
      %v547 = vld [vmem:[%s169 + $0x84] sm:$0xff]
      %v548 = vld [vmem:[%s169 + $0x8c] sm:$0xf]
      %v549 = vld [vmem:[%s169 + $0x90] sm:$0xff]
      %v550 = vld [vmem:[%s169 + $0x98] sm:$0xf]
      %v551 = vld [vmem:[%s169 + $0x9c] sm:$0xff]
      %v552 = vld [vmem:[%s169 + $0xa4] sm:$0xf]
      %v553 = vld [vmem:[%s169 + $0xa8] sm:$0xff]
      %v554 = vld [vmem:[%s169 + $0xb0] sm:$0xf]
      %v555 = vld [vmem:[%s169 + $0xb4] sm:$0xff]
      %v556 = vld [vmem:[%s169 + $0xbc] sm:$0xf]
      %v573 = vunpack.c.l.b16 %v541
      %v574 = vunpack.c.h.b16 %v541
      %v575 = vunpack.c.l.b16 %v542
      %v576 = vunpack.c.l.b16 %v543
      %v577 = vunpack.c.h.b16 %v543
      %v578 = vunpack.c.l.b16 %v544
      %v579 = vunpack.c.l.b16 %v545
      %v580 = vunpack.c.h.b16 %v545
      %v581 = vunpack.c.l.b16 %v546
      %v582 = vunpack.c.l.b16 %v547
      %v583 = vunpack.c.h.b16 %v547
      %v584 = vunpack.c.l.b16 %v548
      %v585 = vunpack.c.l.b16 %v549
      %v586 = vunpack.c.h.b16 %v549
      %v587 = vunpack.c.l.b16 %v550
      %v588 = vunpack.c.l.b16 %v551
      %v589 = vunpack.c.h.b16 %v551
      %v590 = vunpack.c.l.b16 %v552
      %v591 = vunpack.c.l.b16 %v553
      %v592 = vunpack.c.h.b16 %v553
      %v593 = vunpack.c.l.b16 %v554
      %v594 = vunpack.c.l.b16 %v555
      %v595 = vunpack.c.h.b16 %v555
      %v596 = vunpack.c.l.b16 %v556
      %v597 = vpack.c.b16 %v576, %v573
      %v598 = vpack.c.b16 %v577, %v574
      %v599 = vpack.c.b16 %v578, %v575
      %v600 = vpack.c.b16 %v582, %v579
      %v601 = vpack.c.b16 %v583, %v580
      %v602 = vpack.c.b16 %v584, %v581
      %v603 = vpack.c.b16 %v588, %v585
      %v604 = vpack.c.b16 %v589, %v586
      %v605 = vpack.c.b16 %v590, %v587
      %v606 = vpack.c.b16 %v594, %v591
      %v607 = vpack.c.b16 %v595, %v592
      %v608 = vpack.c.b16 %v596, %v593
      %v618 = vsel %vm398, %v599, 0
      %v621 = vsel %vm398, %v602, 0
      %v624 = vsel %vm398, %v605, 0
      %v627 = vsel %vm398, %v608, 0
      %629 = vmatprep.subr.bf16.mxu0 0
      %630 = vmatpush1.bf16.msra.mxu0 %v362
      %631 = vmatprep.subr.bf16.mxu0 0
      %632 = vmatpush1.bf16.msra.mxu0 %v363
      %633 = vmatprep.subr.bf16.mxu0 0
      %634 = vmatpush1.bf16.msra.mxu0 %v364
      %635 = vmatprep.subr.bf16.mxu0 0
      %636 = vmatpush1.bf16.msra.mxu0 %v365
      %637 = vmatprep.subr.bf16.mxu0 0
      %638 = vmatpush1.bf16.msra.mxu0 %v366
      %639 = vmatprep.subr.bf16.mxu0 0
      %640 = vmatpush1.bf16.msra.mxu0 %v367
      %641 = vmatprep.subr.bf16.mxu0 0
      %642 = vmatpush1.bf16.msra.mxu0 %v368
      %643 = vmatprep.subr.bf16.mxu0 0
      %644 = vmatpush1.bf16.msra.mxu0 %v369
      %645 = vmatprep.subr.bf16.mxu0 0
      %646 = vmatpush1.bf16.msra.mxu0 %v370
      %647 = vmatprep.subr.bf16.mxu0 0
      %648 = vmatpush1.bf16.msra.mxu0 %v371
      %649 = vmatprep.subr.bf16.mxu0 0
      %650 = vmatpush1.bf16.msra.mxu0 %v372
      %651 = vmatprep.subr.bf16.mxu0 0
      %652 = vmatpush1.bf16.msra.mxu0 %v373
      %653 = vmatprep.subr.bf16.mxu0 0
      %654 = vmatpush1.bf16.msra.mxu0 %v374
      %655 = vmatprep.subr.bf16.mxu0 0
      %656 = vmatpush1.bf16.msra.mxu0 %v375
      %657 = vmatprep.subr.bf16.mxu0 0
      %658 = vmatpush1.bf16.msra.mxu0 %v376
      %659 = vmatprep.subr.bf16.mxu0 0
      %660 = vmatpush1.bf16.msra.mxu0 %v377
      %661 = vmatprep.mubr.bf16.mxu0 %v598
      %662 = vmatmul.mubr.bf16.gmra.mrb[0].mxu0 %v597
      %v663 = vpop.f32.mrb[0].mxu0
      %v664 = vadd.f32 0.0, %v663
      %v665 = vpop.f32.mrb[0].mxu0
      %v666 = vpop.f32.mrb[0].mxu0
      %v667 = vadd.f32 0.0, %v666
      %v668 = vpop.f32.mrb[0].mxu0
      %669 = vmatprep.mubr.bf16.mxu0 %v601
      %670 = vmatmul.mubr.bf16.gmra.mrb[0].mxu0 %v600
      %v671 = vpop.f32.mrb[0].mxu0
      %v672 = vadd.f32 0.0, %v671
      %v673 = vpop.f32.mrb[0].mxu0
      %v674 = vpop.f32.mrb[0].mxu0
      %v675 = vadd.f32 0.0, %v674
      %v676 = vpop.f32.mrb[0].mxu0
      %677 = vmatprep.mubr.bf16.mxu0 %v604
      %678 = vmatmul.mubr.bf16.gmra.mrb[0].mxu0 %v603
      %v679 = vpop.f32.mrb[0].mxu0
      %v680 = vadd.f32 0.0, %v679
      %v681 = vpop.f32.mrb[0].mxu0
      %v682 = vpop.f32.mrb[0].mxu0
      %v683 = vadd.f32 0.0, %v682
      %v684 = vpop.f32.mrb[0].mxu0
      %685 = vmatprep.mubr.bf16.mxu0 %v607
      %686 = vmatmul.mubr.bf16.gmra.mrb[0].mxu0 %v606
      %v687 = vpop.f32.mrb[0].mxu0
      %v688 = vadd.f32 0.0, %v687
      %v689 = vpop.f32.mrb[0].mxu0
      %v690 = vpop.f32.mrb[0].mxu0
      %v691 = vadd.f32 0.0, %v690
      %v692 = vpop.f32.mrb[0].mxu0
      %693 = vdwg.mxu0
      %694 = vmatprep.subr.bf16.mxu0 0
      %695 = vmatpush1.bf16.msra.mxu0 %v378
      %696 = vmatprep.subr.bf16.mxu0 0
      %697 = vmatpush1.bf16.msra.mxu0 %v379
      %698 = vmatprep.subr.bf16.mxu0 0
      %699 = vmatpush1.bf16.msra.mxu0 0
      %700 = vmatprep.subr.bf16.mxu0 0
      %701 = vmatpush1.bf16.msra.mxu0 0
      %702 = vmatprep.subr.bf16.mxu0 0
      %703 = vmatpush1.bf16.msra.mxu0 0
      %704 = vmatprep.subr.bf16.mxu0 0
      %705 = vmatpush1.bf16.msra.mxu0 0
      %706 = vmatprep.subr.bf16.mxu0 0
      %707 = vmatpush1.bf16.msra.mxu0 0
      %708 = vmatprep.subr.bf16.mxu0 0
      %709 = vmatpush1.bf16.msra.mxu0 0
      %710 = vmatprep.subr.bf16.mxu0 0
      %711 = vmatpush1.bf16.msra.mxu0 0
      %712 = vmatprep.subr.bf16.mxu0 0
      %713 = vmatpush1.bf16.msra.mxu0 0
      %714 = vmatprep.subr.bf16.mxu0 0
      %715 = vmatpush1.bf16.msra.mxu0 0
      %716 = vmatprep.subr.bf16.mxu0 0
      %717 = vmatpush1.bf16.msra.mxu0 0
      %718 = vmatprep.subr.bf16.mxu0 0
      %719 = vmatpush1.bf16.msra.mxu0 0
      %720 = vmatprep.subr.bf16.mxu0 0
      %721 = vmatpush1.bf16.msra.mxu0 0
      %722 = vmatprep.subr.bf16.mxu0 0
      %723 = vmatpush1.bf16.msra.mxu0 0
      %724 = vmatprep.subr.bf16.mxu0 0
      %725 = vmatpush1.bf16.msra.mxu0 0
      %726 = vmatprep.mubr.bf16.mxu0 0
      %727 = vmatmul.mubr.bf16.gmra.mrb[0].mxu0 %v618
      %v728 = vpop.f32.mrb[0].mxu0
      %v729 = vadd.f32 %v664, %v728
      %v730 = vpop.f32.mrb[0].mxu0
      %v731 = vpop.f32.mrb[0].mxu0
      %v732 = vadd.f32 %v667, %v731
      %v733 = vpop.f32.mrb[0].mxu0
      %734 = vmatprep.mubr.bf16.mxu0 0
      %735 = vmatmul.mubr.bf16.gmra.mrb[0].mxu0 %v621
      %v736 = vpop.f32.mrb[0].mxu0
      %v737 = vadd.f32 %v672, %v736
      %v738 = vpop.f32.mrb[0].mxu0
      %v739 = vpop.f32.mrb[0].mxu0
      %v740 = vadd.f32 %v675, %v739
      %v741 = vpop.f32.mrb[0].mxu0
      %742 = vmatprep.mubr.bf16.mxu0 0
      %743 = vmatmul.mubr.bf16.gmra.mrb[0].mxu0 %v624
      %v744 = vpop.f32.mrb[0].mxu0
      %v745 = vadd.f32 %v680, %v744
      %v746 = vpop.f32.mrb[0].mxu0
      %v747 = vpop.f32.mrb[0].mxu0
      %v748 = vadd.f32 %v683, %v747
      %v749 = vpop.f32.mrb[0].mxu0
      %750 = vmatprep.mubr.bf16.mxu0 0
      %751 = vmatmul.mubr.bf16.gmra.mrb[0].mxu0 %v627
      %v752 = vpop.f32.mrb[0].mxu0
      %v753 = vadd.f32 %v688, %v752
      %v754 = vpop.f32.mrb[0].mxu0
      %v755 = vpop.f32.mrb[0].mxu0
      %v756 = vadd.f32 %v691, %v755
      %v757 = vpop.f32.mrb[0].mxu0
      %758 = vdwg.mxu0
      %v759 = vmax.f32 %v511, %v729
      %v760 = vmax.f32 %v514, %v732
      %v761 = vmax.f32 %v519, %v737
      %v762 = vmax.f32 %v522, %v740
      %v763 = vmax.f32 %v527, %v745
      %v764 = vmax.f32 %v530, %v748
      %v765 = vmax.f32 %v535, %v753
      %v766 = vmax.f32 %v538, %v756
      %v767 = vld [vmem:[%s169 + $0xc0] sm:$0xff]
      %v768 = vld [vmem:[%s169 + $0xc8] sm:$0xf]
      %v769 = vld [vmem:[%s169 + $0xcc] sm:$0xff]
      %v770 = vld [vmem:[%s169 + $0xd4] sm:$0xf]
      %v771 = vld [vmem:[%s169 + $0xd8] sm:$0xff]
      %v772 = vld [vmem:[%s169 + $0xe0] sm:$0xf]
      %v773 = vld [vmem:[%s169 + $0xe4] sm:$0xff]
      %v774 = vld [vmem:[%s169 + $0xec] sm:$0xf]
      %v775 = vld [vmem:[%s169 + $0xf0] sm:$0xff]
      %v776 = vld [vmem:[%s169 + $0xf8] sm:$0xf]
      %v777 = vld [vmem:[%s169 + $0xfc] sm:$0xff]
      %v778 = vld [vmem:[%s169 + $0x104] sm:$0xf]
      %v779 = vld [vmem:[%s169 + $0x108] sm:$0xff]
      %v780 = vld [vmem:[%s169 + $0x110] sm:$0xf]
      %v781 = vld [vmem:[%s169 + $0x114] sm:$0xff]
      %v782 = vld [vmem:[%s169 + $0x11c] sm:$0xf]
      %v799 = vunpack.c.l.b16 %v767
      %v800 = vunpack.c.h.b16 %v767
      %v801 = vunpack.c.l.b16 %v768
      %v802 = vunpack.c.l.b16 %v769
      %v803 = vunpack.c.h.b16 %v769
      %v804 = vunpack.c.l.b16 %v770
      %v805 = vunpack.c.l.b16 %v771
      %v806 = vunpack.c.h.b16 %v771
      %v807 = vunpack.c.l.b16 %v772
      %v808 = vunpack.c.l.b16 %v773
      %v809 = vunpack.c.h.b16 %v773
      %v810 = vunpack.c.l.b16 %v774
      %v811 = vunpack.c.l.b16 %v775
      %v812 = vunpack.c.h.b16 %v775
      %v813 = vunpack.c.l.b16 %v776
      %v814 = vunpack.c.l.b16 %v777
      %v815 = vunpack.c.h.b16 %v777
      %v816 = vunpack.c.l.b16 %v778
      %v817 = vunpack.c.l.b16 %v779
      %v818 = vunpack.c.h.b16 %v779
      %v819 = vunpack.c.l.b16 %v780
      %v820 = vunpack.c.l.b16 %v781
      %v821 = vunpack.c.h.b16 %v781
      %v822 = vunpack.c.l.b16 %v782
      %v823 = vpack.c.b16 %v802, %v799
      %v824 = vpack.c.b16 %v803, %v800
      %v825 = vpack.c.b16 %v804, %v801
      %v826 = vpack.c.b16 %v808, %v805
      %v827 = vpack.c.b16 %v809, %v806
      %v828 = vpack.c.b16 %v810, %v807
      %v829 = vpack.c.b16 %v814, %v811
      %v830 = vpack.c.b16 %v815, %v812
      %v831 = vpack.c.b16 %v816, %v813
      %v832 = vpack.c.b16 %v820, %v817
      %v833 = vpack.c.b16 %v821, %v818
      %v834 = vpack.c.b16 %v822, %v819
      %v844 = vsel %vm398, %v825, 0
      %v847 = vsel %vm398, %v828, 0
      %v850 = vsel %vm398, %v831, 0
      %v853 = vsel %vm398, %v834, 0
      %855 = vmatprep.subr.bf16.mxu0 0
      %856 = vmatpush1.bf16.msra.mxu0 %v362
      %857 = vmatprep.subr.bf16.mxu0 0
      %858 = vmatpush1.bf16.msra.mxu0 %v363
      %859 = vmatprep.subr.bf16.mxu0 0
      %860 = vmatpush1.bf16.msra.mxu0 %v364
      %861 = vmatprep.subr.bf16.mxu0 0
      %862 = vmatpush1.bf16.msra.mxu0 %v365
      %863 = vmatprep.subr.bf16.mxu0 0
      %864 = vmatpush1.bf16.msra.mxu0 %v366
      %865 = vmatprep.subr.bf16.mxu0 0
      %866 = vmatpush1.bf16.msra.mxu0 %v367
      %867 = vmatprep.subr.bf16.mxu0 0
      %868 = vmatpush1.bf16.msra.mxu0 %v368
      %869 = vmatprep.subr.bf16.mxu0 0
      %870 = vmatpush1.bf16.msra.mxu0 %v369
      %871 = vmatprep.subr.bf16.mxu0 0
      %872 = vmatpush1.bf16.msra.mxu0 %v370
      %873 = vmatprep.subr.bf16.mxu0 0
      %874 = vmatpush1.bf16.msra.mxu0 %v371
      %875 = vmatprep.subr.bf16.mxu0 0
      %876 = vmatpush1.bf16.msra.mxu0 %v372
      %877 = vmatprep.subr.bf16.mxu0 0
      %878 = vmatpush1.bf16.msra.mxu0 %v373
      %879 = vmatprep.subr.bf16.mxu0 0
      %880 = vmatpush1.bf16.msra.mxu0 %v374
      %881 = vmatprep.subr.bf16.mxu0 0
      %882 = vmatpush1.bf16.msra.mxu0 %v375
      %883 = vmatprep.subr.bf16.mxu0 0
      %884 = vmatpush1.bf16.msra.mxu0 %v376
      %885 = vmatprep.subr.bf16.mxu0 0
      %886 = vmatpush1.bf16.msra.mxu0 %v377
      %887 = vmatprep.mubr.bf16.mxu0 %v824
      %888 = vmatmul.mubr.bf16.gmra.mrb[0].mxu0 %v823
      %v889 = vpop.f32.mrb[0].mxu0
      %v890 = vadd.f32 0.0, %v889
      %v891 = vpop.f32.mrb[0].mxu0
      %v892 = vpop.f32.mrb[0].mxu0
      %v893 = vadd.f32 0.0, %v892
      %v894 = vpop.f32.mrb[0].mxu0
      %895 = vmatprep.mubr.bf16.mxu0 %v827
      %896 = vmatmul.mubr.bf16.gmra.mrb[0].mxu0 %v826
      %v897 = vpop.f32.mrb[0].mxu0
      %v898 = vadd.f32 0.0, %v897
      %v899 = vpop.f32.mrb[0].mxu0
      %v900 = vpop.f32.mrb[0].mxu0
      %v901 = vadd.f32 0.0, %v900
      %v902 = vpop.f32.mrb[0].mxu0
      %903 = vmatprep.mubr.bf16.mxu0 %v830
      %904 = vmatmul.mubr.bf16.gmra.mrb[0].mxu0 %v829
      %v905 = vpop.f32.mrb[0].mxu0
      %v906 = vadd.f32 0.0, %v905
      %v907 = vpop.f32.mrb[0].mxu0
      %v908 = vpop.f32.mrb[0].mxu0
      %v909 = vadd.f32 0.0, %v908
      %v910 = vpop.f32.mrb[0].mxu0
      %911 = vmatprep.mubr.bf16.mxu0 %v833
      %912 = vmatmul.mubr.bf16.gmra.mrb[0].mxu0 %v832
      %v913 = vpop.f32.mrb[0].mxu0
      %v914 = vadd.f32 0.0, %v913
      %v915 = vpop.f32.mrb[0].mxu0
      %v916 = vpop.f32.mrb[0].mxu0
      %v917 = vadd.f32 0.0, %v916
      %v918 = vpop.f32.mrb[0].mxu0
      %919 = vdwg.mxu0
      %920 = vmatprep.subr.bf16.mxu0 0
      %921 = vmatpush1.bf16.msra.mxu0 %v378
      %922 = vmatprep.subr.bf16.mxu0 0
      %923 = vmatpush1.bf16.msra.mxu0 %v379
      %924 = vmatprep.subr.bf16.mxu0 0
      %925 = vmatpush1.bf16.msra.mxu0 0
      %926 = vmatprep.subr.bf16.mxu0 0
      %927 = vmatpush1.bf16.msra.mxu0 0
      %928 = vmatprep.subr.bf16.mxu0 0
      %929 = vmatpush1.bf16.msra.mxu0 0
      %930 = vmatprep.subr.bf16.mxu0 0
      %931 = vmatpush1.bf16.msra.mxu0 0
      %932 = vmatprep.subr.bf16.mxu0 0
      %933 = vmatpush1.bf16.msra.mxu0 0
      %934 = vmatprep.subr.bf16.mxu0 0
      %935 = vmatpush1.bf16.msra.mxu0 0
      %936 = vmatprep.subr.bf16.mxu0 0
      %937 = vmatpush1.bf16.msra.mxu0 0
      %938 = vmatprep.subr.bf16.mxu0 0
      %939 = vmatpush1.bf16.msra.mxu0 0
      %940 = vmatprep.subr.bf16.mxu0 0
      %941 = vmatpush1.bf16.msra.mxu0 0
      %942 = vmatprep.subr.bf16.mxu0 0
      %943 = vmatpush1.bf16.msra.mxu0 0
      %944 = vmatprep.subr.bf16.mxu0 0
      %945 = vmatpush1.bf16.msra.mxu0 0
      %946 = vmatprep.subr.bf16.mxu0 0
      %947 = vmatpush1.bf16.msra.mxu0 0
      %948 = vmatprep.subr.bf16.mxu0 0
      %949 = vmatpush1.bf16.msra.mxu0 0
      %950 = vmatprep.subr.bf16.mxu0 0
      %951 = vmatpush1.bf16.msra.mxu0 0
      %952 = vmatprep.mubr.bf16.mxu0 0
      %953 = vmatmul.mubr.bf16.gmra.mrb[0].mxu0 %v844
      %v954 = vpop.f32.mrb[0].mxu0
      %v955 = vadd.f32 %v890, %v954
      %v956 = vpop.f32.mrb[0].mxu0
      %v957 = vpop.f32.mrb[0].mxu0
      %v958 = vadd.f32 %v893, %v957
      %v959 = vpop.f32.mrb[0].mxu0
      %960 = vmatprep.mubr.bf16.mxu0 0
      %961 = vmatmul.mubr.bf16.gmra.mrb[0].mxu0 %v847
      %v962 = vpop.f32.mrb[0].mxu0
      %v963 = vadd.f32 %v898, %v962
      %v964 = vpop.f32.mrb[0].mxu0
      %v965 = vpop.f32.mrb[0].mxu0
      %v966 = vadd.f32 %v901, %v965
      %v967 = vpop.f32.mrb[0].mxu0
      %968 = vmatprep.mubr.bf16.mxu0 0
      %969 = vmatmul.mubr.bf16.gmra.mrb[0].mxu0 %v850
      %v970 = vpop.f32.mrb[0].mxu0
      %v971 = vadd.f32 %v906, %v970
      %v972 = vpop.f32.mrb[0].mxu0
      %v973 = vpop.f32.mrb[0].mxu0
      %v974 = vadd.f32 %v909, %v973
      %v975 = vpop.f32.mrb[0].mxu0
      %976 = vmatprep.mubr.bf16.mxu0 0
      %977 = vmatmul.mubr.bf16.gmra.mrb[0].mxu0 %v853
      %v978 = vpop.f32.mrb[0].mxu0
      %v979 = vadd.f32 %v914, %v978
      %v980 = vpop.f32.mrb[0].mxu0
      %v981 = vpop.f32.mrb[0].mxu0
      %v982 = vadd.f32 %v917, %v981
      %v983 = vpop.f32.mrb[0].mxu0
      %984 = vdwg.mxu0
      %v985 = vmax.f32 %v759, %v955
      %v986 = vmax.f32 %v760, %v958
      %v987 = vmax.f32 %v761, %v963
      %v988 = vmax.f32 %v762, %v966
      %v989 = vmax.f32 %v763, %v971
      %v990 = vmax.f32 %v764, %v974
      %v991 = vmax.f32 %v765, %v979
      %v992 = vmax.f32 %v766, %v982
      %v993 = vld [vmem:[%s169 + $0x120] sm:$0xff]
      %v994 = vld [vmem:[%s169 + $0x128] sm:$0xf]
      %v995 = vld [vmem:[%s169 + $0x12c] sm:$0xff]
      %v996 = vld [vmem:[%s169 + $0x134] sm:$0xf]
      %v997 = vld [vmem:[%s169 + $0x138] sm:$0xff]
      %v998 = vld [vmem:[%s169 + $0x140] sm:$0xf]
      %v999 = vld [vmem:[%s169 + $0x144] sm:$0xff]
      %v1000 = vld [vmem:[%s169 + $0x14c] sm:$0xf]
      %v1001 = vld [vmem:[%s169 + $0x150] sm:$0xff]
      %v1002 = vld [vmem:[%s169 + $0x158] sm:$0xf]
      %v1003 = vld [vmem:[%s169 + $0x15c] sm:$0xff]
      %v1004 = vld [vmem:[%s169 + $0x164] sm:$0xf]
      %v1005 = vld [vmem:[%s169 + $0x168] sm:$0xff]
      %v1006 = vld [vmem:[%s169 + $0x170] sm:$0xf]
      %v1007 = vld [vmem:[%s169 + $0x174] sm:$0xff]
      %v1008 = vld [vmem:[%s169 + $0x17c] sm:$0xf]
      %v1025 = vunpack.c.l.b16 %v993
      %v1026 = vunpack.c.h.b16 %v993
      %v1027 = vunpack.c.l.b16 %v994
      %v1028 = vunpack.c.l.b16 %v995
      %v1029 = vunpack.c.h.b16 %v995
      %v1030 = vunpack.c.l.b16 %v996
      %v1031 = vunpack.c.l.b16 %v997
      %v1032 = vunpack.c.h.b16 %v997
      %v1033 = vunpack.c.l.b16 %v998
      %v1034 = vunpack.c.l.b16 %v999
      %v1035 = vunpack.c.h.b16 %v999
      %v1036 = vunpack.c.l.b16 %v1000
      %v1037 = vunpack.c.l.b16 %v1001
      %v1038 = vunpack.c.h.b16 %v1001
      %v1039 = vunpack.c.l.b16 %v1002
      %v1040 = vunpack.c.l.b16 %v1003
      %v1041 = vunpack.c.h.b16 %v1003
      %v1042 = vunpack.c.l.b16 %v1004
      %v1043 = vunpack.c.l.b16 %v1005
      %v1044 = vunpack.c.h.b16 %v1005
      %v1045 = vunpack.c.l.b16 %v1006
      %v1046 = vunpack.c.l.b16 %v1007
      %v1047 = vunpack.c.h.b16 %v1007
      %v1048 = vunpack.c.l.b16 %v1008
      %v1049 = vpack.c.b16 %v1028, %v1025
      %v1050 = vpack.c.b16 %v1029, %v1026
      %v1051 = vpack.c.b16 %v1030, %v1027
      %v1052 = vpack.c.b16 %v1034, %v1031
      %v1053 = vpack.c.b16 %v1035, %v1032
      %v1054 = vpack.c.b16 %v1036, %v1033
      %v1055 = vpack.c.b16 %v1040, %v1037
      %v1056 = vpack.c.b16 %v1041, %v1038
      %v1057 = vpack.c.b16 %v1042, %v1039
      %v1058 = vpack.c.b16 %v1046, %v1043
      %v1059 = vpack.c.b16 %v1047, %v1044
      %v1060 = vpack.c.b16 %v1048, %v1045
      %v1070 = vsel %vm398, %v1051, 0
      %v1073 = vsel %vm398, %v1054, 0
      %v1076 = vsel %vm398, %v1057, 0
      %v1079 = vsel %vm398, %v1060, 0
      %1081 = vmatprep.subr.bf16.mxu0 0
      %1082 = vmatpush1.bf16.msra.mxu0 %v362
      %1083 = vmatprep.subr.bf16.mxu0 0
      %1084 = vmatpush1.bf16.msra.mxu0 %v363
      %1085 = vmatprep.subr.bf16.mxu0 0
      %1086 = vmatpush1.bf16.msra.mxu0 %v364
      %1087 = vmatprep.subr.bf16.mxu0 0
      %1088 = vmatpush1.bf16.msra.mxu0 %v365
      %1089 = vmatprep.subr.bf16.mxu0 0
      %1090 = vmatpush1.bf16.msra.mxu0 %v366
      %1091 = vmatprep.subr.bf16.mxu0 0
      %1092 = vmatpush1.bf16.msra.mxu0 %v367
      %1093 = vmatprep.subr.bf16.mxu0 0
      %1094 = vmatpush1.bf16.msra.mxu0 %v368
      %1095 = vmatprep.subr.bf16.mxu0 0
      %1096 = vmatpush1.bf16.msra.mxu0 %v369
      %1097 = vmatprep.subr.bf16.mxu0 0
      %1098 = vmatpush1.bf16.msra.mxu0 %v370
      %1099 = vmatprep.subr.bf16.mxu0 0
      %1100 = vmatpush1.bf16.msra.mxu0 %v371
      %1101 = vmatprep.subr.bf16.mxu0 0
      %1102 = vmatpush1.bf16.msra.mxu0 %v372
      %1103 = vmatprep.subr.bf16.mxu0 0
      %1104 = vmatpush1.bf16.msra.mxu0 %v373
      %1105 = vmatprep.subr.bf16.mxu0 0
      %1106 = vmatpush1.bf16.msra.mxu0 %v374
      %1107 = vmatprep.subr.bf16.mxu0 0
      %1108 = vmatpush1.bf16.msra.mxu0 %v375
      %1109 = vmatprep.subr.bf16.mxu0 0
      %1110 = vmatpush1.bf16.msra.mxu0 %v376
      %1111 = vmatprep.subr.bf16.mxu0 0
      %1112 = vmatpush1.bf16.msra.mxu0 %v377
      %1113 = vmatprep.mubr.bf16.mxu0 %v1050
      %1114 = vmatmul.mubr.bf16.gmra.mrb[0].mxu0 %v1049
      %v1115 = vpop.f32.mrb[0].mxu0
      %v1116 = vadd.f32 0.0, %v1115
      %v1117 = vpop.f32.mrb[0].mxu0
      %v1118 = vpop.f32.mrb[0].mxu0
      %v1119 = vadd.f32 0.0, %v1118
      %v1120 = vpop.f32.mrb[0].mxu0
      %1121 = vmatprep.mubr.bf16.mxu0 %v1053
      %1122 = vmatmul.mubr.bf16.gmra.mrb[0].mxu0 %v1052
      %v1123 = vpop.f32.mrb[0].mxu0
      %v1124 = vadd.f32 0.0, %v1123
      %v1125 = vpop.f32.mrb[0].mxu0
      %v1126 = vpop.f32.mrb[0].mxu0
      %v1127 = vadd.f32 0.0, %v1126
      %v1128 = vpop.f32.mrb[0].mxu0
      %1129 = vmatprep.mubr.bf16.mxu0 %v1056
      %1130 = vmatmul.mubr.bf16.gmra.mrb[0].mxu0 %v1055
      %v1131 = vpop.f32.mrb[0].mxu0
      %v1132 = vadd.f32 0.0, %v1131
      %v1133 = vpop.f32.mrb[0].mxu0
      %v1134 = vpop.f32.mrb[0].mxu0
      %v1135 = vadd.f32 0.0, %v1134
      %v1136 = vpop.f32.mrb[0].mxu0
      %1137 = vmatprep.mubr.bf16.mxu0 %v1059
      %1138 = vmatmul.mubr.bf16.gmra.mrb[0].mxu0 %v1058
      %v1139 = vpop.f32.mrb[0].mxu0
      %v1140 = vadd.f32 0.0, %v1139
      %v1141 = vpop.f32.mrb[0].mxu0
      %v1142 = vpop.f32.mrb[0].mxu0
      %v1143 = vadd.f32 0.0, %v1142
      %v1144 = vpop.f32.mrb[0].mxu0
      %1145 = vdwg.mxu0
      %1146 = vmatprep.subr.bf16.mxu0 0
      %1147 = vmatpush1.bf16.msra.mxu0 %v378
      %1148 = vmatprep.subr.bf16.mxu0 0
      %1149 = vmatpush1.bf16.msra.mxu0 %v379
      %1150 = vmatprep.subr.bf16.mxu0 0
      %1151 = vmatpush1.bf16.msra.mxu0 0
      %1152 = vmatprep.subr.bf16.mxu0 0
      %1153 = vmatpush1.bf16.msra.mxu0 0
      %1154 = vmatprep.subr.bf16.mxu0 0
      %1155 = vmatpush1.bf16.msra.mxu0 0
      %1156 = vmatprep.subr.bf16.mxu0 0
      %1157 = vmatpush1.bf16.msra.mxu0 0
      %1158 = vmatprep.subr.bf16.mxu0 0
      %1159 = vmatpush1.bf16.msra.mxu0 0
      %1160 = vmatprep.subr.bf16.mxu0 0
      %1161 = vmatpush1.bf16.msra.mxu0 0
      %1162 = vmatprep.subr.bf16.mxu0 0
      %1163 = vmatpush1.bf16.msra.mxu0 0
      %1164 = vmatprep.subr.bf16.mxu0 0
      %1165 = vmatpush1.bf16.msra.mxu0 0
      %1166 = vmatprep.subr.bf16.mxu0 0
      %1167 = vmatpush1.bf16.msra.mxu0 0
      %1168 = vmatprep.subr.bf16.mxu0 0
      %1169 = vmatpush1.bf16.msra.mxu0 0
      %1170 = vmatprep.subr.bf16.mxu0 0
      %1171 = vmatpush1.bf16.msra.mxu0 0
      %1172 = vmatprep.subr.bf16.mxu0 0
      %1173 = vmatpush1.bf16.msra.mxu0 0
      %1174 = vmatprep.subr.bf16.mxu0 0
      %1175 = vmatpush1.bf16.msra.mxu0 0
      %1176 = vmatprep.subr.bf16.mxu0 0
      %1177 = vmatpush1.bf16.msra.mxu0 0
      %1178 = vmatprep.mubr.bf16.mxu0 0
      %1179 = vmatmul.mubr.bf16.gmra.mrb[0].mxu0 %v1070
      %v1180 = vpop.f32.mrb[0].mxu0
      %v1181 = vadd.f32 %v1116, %v1180
      %v1182 = vpop.f32.mrb[0].mxu0
      %v1183 = vpop.f32.mrb[0].mxu0
      %v1184 = vadd.f32 %v1119, %v1183
      %v1185 = vpop.f32.mrb[0].mxu0
      %1186 = vmatprep.mubr.bf16.mxu0 0
      %1187 = vmatmul.mubr.bf16.gmra.mrb[0].mxu0 %v1073
      %v1188 = vpop.f32.mrb[0].mxu0
      %v1189 = vadd.f32 %v1124, %v1188
      %v1190 = vpop.f32.mrb[0].mxu0
      %v1191 = vpop.f32.mrb[0].mxu0
      %v1192 = vadd.f32 %v1127, %v1191
      %v1193 = vpop.f32.mrb[0].mxu0
      %1194 = vmatprep.mubr.bf16.mxu0 0
      %1195 = vmatmul.mubr.bf16.gmra.mrb[0].mxu0 %v1076
      %v1196 = vpop.f32.mrb[0].mxu0
      %v1197 = vadd.f32 %v1132, %v1196
      %v1198 = vpop.f32.mrb[0].mxu0
      %v1199 = vpop.f32.mrb[0].mxu0
      %v1200 = vadd.f32 %v1135, %v1199
      %v1201 = vpop.f32.mrb[0].mxu0
      %1202 = vmatprep.mubr.bf16.mxu0 0
      %1203 = vmatmul.mubr.bf16.gmra.mrb[0].mxu0 %v1079
      %v1204 = vpop.f32.mrb[0].mxu0
      %v1205 = vadd.f32 %v1140, %v1204
      %v1206 = vpop.f32.mrb[0].mxu0
      %v1207 = vpop.f32.mrb[0].mxu0
      %v1208 = vadd.f32 %v1143, %v1207
      %v1209 = vpop.f32.mrb[0].mxu0
      %1210 = vdwg.mxu0
      %v1211 = vmax.f32 %v985, %v1181
      %v1212 = vmax.f32 %v986, %v1184
      %v1213 = vmax.f32 %v987, %v1189
      %v1214 = vmax.f32 %v988, %v1192
      %v1215 = vmax.f32 %v989, %v1197
      %v1216 = vmax.f32 %v990, %v1200
      %v1217 = vmax.f32 %v991, %v1205
      %v1218 = vmax.f32 %v992, %v1208
      %v1219 = vld [vmem:[%s169 + $0x180] sm:$0xff]
      %v1220 = vld [vmem:[%s169 + $0x188] sm:$0xf]
      %v1221 = vld [vmem:[%s169 + $0x18c] sm:$0xff]
      %v1222 = vld [vmem:[%s169 + $0x194] sm:$0xf]
      %v1223 = vld [vmem:[%s169 + $0x198] sm:$0xff]
      %v1224 = vld [vmem:[%s169 + $0x1a0] sm:$0xf]
      %v1225 = vld [vmem:[%s169 + $0x1a4] sm:$0xff]
      %v1226 = vld [vmem:[%s169 + $0x1ac] sm:$0xf]
      %v1227 = vld [vmem:[%s169 + $0x1b0] sm:$0xff]
      %v1228 = vld [vmem:[%s169 + $0x1b8] sm:$0xf]
      %v1229 = vld [vmem:[%s169 + $0x1bc] sm:$0xff]
      %v1230 = vld [vmem:[%s169 + $0x1c4] sm:$0xf]
      %v1231 = vld [vmem:[%s169 + $0x1c8] sm:$0xff]
      %v1232 = vld [vmem:[%s169 + $0x1d0] sm:$0xf]
      %v1233 = vld [vmem:[%s169 + $0x1d4] sm:$0xff]
      %v1234 = vld [vmem:[%s169 + $0x1dc] sm:$0xf]
      %v1251 = vunpack.c.l.b16 %v1219
      %v1252 = vunpack.c.h.b16 %v1219
      %v1253 = vunpack.c.l.b16 %v1220
      %v1254 = vunpack.c.l.b16 %v1221
      %v1255 = vunpack.c.h.b16 %v1221
      %v1256 = vunpack.c.l.b16 %v1222
      %v1257 = vunpack.c.l.b16 %v1223
      %v1258 = vunpack.c.h.b16 %v1223
      %v1259 = vunpack.c.l.b16 %v1224
      %v1260 = vunpack.c.l.b16 %v1225
      %v1261 = vunpack.c.h.b16 %v1225
      %v1262 = vunpack.c.l.b16 %v1226
      %v1263 = vunpack.c.l.b16 %v1227
      %v1264 = vunpack.c.h.b16 %v1227
      %v1265 = vunpack.c.l.b16 %v1228
      %v1266 = vunpack.c.l.b16 %v1229
      %v1267 = vunpack.c.h.b16 %v1229
      %v1268 = vunpack.c.l.b16 %v1230
      %v1269 = vunpack.c.l.b16 %v1231
      %v1270 = vunpack.c.h.b16 %v1231
      %v1271 = vunpack.c.l.b16 %v1232
      %v1272 = vunpack.c.l.b16 %v1233
      %v1273 = vunpack.c.h.b16 %v1233
      %v1274 = vunpack.c.l.b16 %v1234
      %v1275 = vpack.c.b16 %v1254, %v1251
      %v1276 = vpack.c.b16 %v1255, %v1252
      %v1277 = vpack.c.b16 %v1256, %v1253
      %v1278 = vpack.c.b16 %v1260, %v1257
      %v1279 = vpack.c.b16 %v1261, %v1258
      %v1280 = vpack.c.b16 %v1262, %v1259
      %v1281 = vpack.c.b16 %v1266, %v1263
      %v1282 = vpack.c.b16 %v1267, %v1264
      %v1283 = vpack.c.b16 %v1268, %v1265
      %v1284 = vpack.c.b16 %v1272, %v1269
      %v1285 = vpack.c.b16 %v1273, %v1270
      %v1286 = vpack.c.b16 %v1274, %v1271
      %v1296 = vsel %vm398, %v1277, 0
      %v1299 = vsel %vm398, %v1280, 0
      %v1302 = vsel %vm398, %v1283, 0
      %v1305 = vsel %vm398, %v1286, 0
      %1307 = vmatprep.subr.bf16.mxu0 0
      %1308 = vmatpush1.bf16.msra.mxu0 %v362
      %1309 = vmatprep.subr.bf16.mxu0 0
      %1310 = vmatpush1.bf16.msra.mxu0 %v363
      %1311 = vmatprep.subr.bf16.mxu0 0
      %1312 = vmatpush1.bf16.msra.mxu0 %v364
      %1313 = vmatprep.subr.bf16.mxu0 0
      %1314 = vmatpush1.bf16.msra.mxu0 %v365
      %1315 = vmatprep.subr.bf16.mxu0 0
      %1316 = vmatpush1.bf16.msra.mxu0 %v366
      %1317 = vmatprep.subr.bf16.mxu0 0
      %1318 = vmatpush1.bf16.msra.mxu0 %v367
      %1319 = vmatprep.subr.bf16.mxu0 0
      %1320 = vmatpush1.bf16.msra.mxu0 %v368
      %1321 = vmatprep.subr.bf16.mxu0 0
      %1322 = vmatpush1.bf16.msra.mxu0 %v369
      %1323 = vmatprep.subr.bf16.mxu0 0
      %1324 = vmatpush1.bf16.msra.mxu0 %v370
      %1325 = vmatprep.subr.bf16.mxu0 0
      %1326 = vmatpush1.bf16.msra.mxu0 %v371
      %1327 = vmatprep.subr.bf16.mxu0 0
      %1328 = vmatpush1.bf16.msra.mxu0 %v372
      %1329 = vmatprep.subr.bf16.mxu0 0
      %1330 = vmatpush1.bf16.msra.mxu0 %v373
      %1331 = vmatprep.subr.bf16.mxu0 0
      %1332 = vmatpush1.bf16.msra.mxu0 %v374
      %1333 = vmatprep.subr.bf16.mxu0 0
      %1334 = vmatpush1.bf16.msra.mxu0 %v375
      %1335 = vmatprep.subr.bf16.mxu0 0
      %1336 = vmatpush1.bf16.msra.mxu0 %v376
      %1337 = vmatprep.subr.bf16.mxu0 0
      %1338 = vmatpush1.bf16.msra.mxu0 %v377
      %1339 = vmatprep.mubr.bf16.mxu0 %v1276
      %1340 = vmatmul.mubr.bf16.gmra.mrb[0].mxu0 %v1275
      %v1341 = vpop.f32.mrb[0].mxu0
      %v1342 = vadd.f32 0.0, %v1341
      %v1343 = vpop.f32.mrb[0].mxu0
      %v1344 = vpop.f32.mrb[0].mxu0
      %v1345 = vadd.f32 0.0, %v1344
      %v1346 = vpop.f32.mrb[0].mxu0
      %1347 = vmatprep.mubr.bf16.mxu0 %v1279
      %1348 = vmatmul.mubr.bf16.gmra.mrb[0].mxu0 %v1278
      %v1349 = vpop.f32.mrb[0].mxu0
      %v1350 = vadd.f32 0.0, %v1349
      %v1351 = vpop.f32.mrb[0].mxu0
      %v1352 = vpop.f32.mrb[0].mxu0
      %v1353 = vadd.f32 0.0, %v1352
      %v1354 = vpop.f32.mrb[0].mxu0
      %1355 = vmatprep.mubr.bf16.mxu0 %v1282
      %1356 = vmatmul.mubr.bf16.gmra.mrb[0].mxu0 %v1281
      %v1357 = vpop.f32.mrb[0].mxu0
      %v1358 = vadd.f32 0.0, %v1357
      %v1359 = vpop.f32.mrb[0].mxu0
      %v1360 = vpop.f32.mrb[0].mxu0
      %v1361 = vadd.f32 0.0, %v1360
      %v1362 = vpop.f32.mrb[0].mxu0
      %1363 = vmatprep.mubr.bf16.mxu0 %v1285
      %1364 = vmatmul.mubr.bf16.gmra.mrb[0].mxu0 %v1284
      %v1365 = vpop.f32.mrb[0].mxu0
      %v1366 = vadd.f32 0.0, %v1365
      %v1367 = vpop.f32.mrb[0].mxu0
      %v1368 = vpop.f32.mrb[0].mxu0
      %v1369 = vadd.f32 0.0, %v1368
      %v1370 = vpop.f32.mrb[0].mxu0
      %1371 = vdwg.mxu0
      %1372 = vmatprep.subr.bf16.mxu0 0
      %1373 = vmatpush1.bf16.msra.mxu0 %v378
      %1374 = vmatprep.subr.bf16.mxu0 0
      %1375 = vmatpush1.bf16.msra.mxu0 %v379
      %1376 = vmatprep.subr.bf16.mxu0 0
      %1377 = vmatpush1.bf16.msra.mxu0 0
      %1378 = vmatprep.subr.bf16.mxu0 0
      %1379 = vmatpush1.bf16.msra.mxu0 0
      %1380 = vmatprep.subr.bf16.mxu0 0
      %1381 = vmatpush1.bf16.msra.mxu0 0
      %1382 = vmatprep.subr.bf16.mxu0 0
      %1383 = vmatpush1.bf16.msra.mxu0 0
      %1384 = vmatprep.subr.bf16.mxu0 0
      %1385 = vmatpush1.bf16.msra.mxu0 0
      %1386 = vmatprep.subr.bf16.mxu0 0
      %1387 = vmatpush1.bf16.msra.mxu0 0
      %1388 = vmatprep.subr.bf16.mxu0 0
      %1389 = vmatpush1.bf16.msra.mxu0 0
      %1390 = vmatprep.subr.bf16.mxu0 0
      %1391 = vmatpush1.bf16.msra.mxu0 0
      %1392 = vmatprep.subr.bf16.mxu0 0
      %1393 = vmatpush1.bf16.msra.mxu0 0
      %1394 = vmatprep.subr.bf16.mxu0 0
      %1395 = vmatpush1.bf16.msra.mxu0 0
      %1396 = vmatprep.subr.bf16.mxu0 0
      %1397 = vmatpush1.bf16.msra.mxu0 0
      %1398 = vmatprep.subr.bf16.mxu0 0
      %1399 = vmatpush1.bf16.msra.mxu0 0
      %1400 = vmatprep.subr.bf16.mxu0 0
      %1401 = vmatpush1.bf16.msra.mxu0 0
      %1402 = vmatprep.subr.bf16.mxu0 0
      %1403 = vmatpush1.bf16.msra.mxu0 0
      %1404 = vmatprep.mubr.bf16.mxu0 0
      %1405 = vmatmul.mubr.bf16.gmra.mrb[0].mxu0 %v1296
      %v1406 = vpop.f32.mrb[0].mxu0
      %v1407 = vadd.f32 %v1342, %v1406
      %v1408 = vpop.f32.mrb[0].mxu0
      %v1409 = vpop.f32.mrb[0].mxu0
      %v1410 = vadd.f32 %v1345, %v1409
      %v1411 = vpop.f32.mrb[0].mxu0
      %1412 = vmatprep.mubr.bf16.mxu0 0
      %1413 = vmatmul.mubr.bf16.gmra.mrb[0].mxu0 %v1299
      %v1414 = vpop.f32.mrb[0].mxu0
      %v1415 = vadd.f32 %v1350, %v1414
      %v1416 = vpop.f32.mrb[0].mxu0
      %v1417 = vpop.f32.mrb[0].mxu0
      %v1418 = vadd.f32 %v1353, %v1417
      %v1419 = vpop.f32.mrb[0].mxu0
      %1420 = vmatprep.mubr.bf16.mxu0 0
      %1421 = vmatmul.mubr.bf16.gmra.mrb[0].mxu0 %v1302
      %v1422 = vpop.f32.mrb[0].mxu0
      %v1423 = vadd.f32 %v1358, %v1422
      %v1424 = vpop.f32.mrb[0].mxu0
      %v1425 = vpop.f32.mrb[0].mxu0
      %v1426 = vadd.f32 %v1361, %v1425
      %v1427 = vpop.f32.mrb[0].mxu0
      %1428 = vmatprep.mubr.bf16.mxu0 0
      %1429 = vmatmul.mubr.bf16.gmra.mrb[0].mxu0 %v1305
      %v1430 = vpop.f32.mrb[0].mxu0
      %v1431 = vadd.f32 %v1366, %v1430
      %v1432 = vpop.f32.mrb[0].mxu0
      %v1433 = vpop.f32.mrb[0].mxu0
      %v1434 = vadd.f32 %v1369, %v1433
      %v1435 = vpop.f32.mrb[0].mxu0
      %1436 = vdwg.mxu0
      %v1437 = vmax.f32 %v1211, %v1407
      %v1438 = vmax.f32 %v1212, %v1410
      %v1439 = vmax.f32 %v1213, %v1415
      %v1440 = vmax.f32 %v1214, %v1418
      %v1441 = vmax.f32 %v1215, %v1423
      %v1442 = vmax.f32 %v1216, %v1426
      %v1443 = vmax.f32 %v1217, %v1431
      %v1444 = vmax.f32 %v1218, %v1434
      %v1445 = vld [vmem:[%s169 + $0x1e0] sm:$0xff]
      %v1446 = vld [vmem:[%s169 + $0x1e8] sm:$0xf]
      %v1447 = vld [vmem:[%s169 + $0x1ec] sm:$0xff]
      %v1448 = vld [vmem:[%s169 + $0x1f4] sm:$0xf]
      %v1449 = vld [vmem:[%s169 + $0x1f8] sm:$0xff]
      %v1450 = vld [vmem:[%s169 + $0x200] sm:$0xf]
      %v1451 = vld [vmem:[%s169 + $0x204] sm:$0xff]
      %v1452 = vld [vmem:[%s169 + $0x20c] sm:$0xf]
      %v1453 = vld [vmem:[%s169 + $0x210] sm:$0xff]
      %v1454 = vld [vmem:[%s169 + $0x218] sm:$0xf]
      %v1455 = vld [vmem:[%s169 + $0x21c] sm:$0xff]
      %v1456 = vld [vmem:[%s169 + $0x224] sm:$0xf]
      %v1457 = vld [vmem:[%s169 + $0x228] sm:$0xff]
      %v1458 = vld [vmem:[%s169 + $0x230] sm:$0xf]
      %v1459 = vld [vmem:[%s169 + $0x234] sm:$0xff]
      %v1460 = vld [vmem:[%s169 + $0x23c] sm:$0xf]
      %v1477 = vunpack.c.l.b16 %v1445
      %v1478 = vunpack.c.h.b16 %v1445
      %v1479 = vunpack.c.l.b16 %v1446
      %v1480 = vunpack.c.l.b16 %v1447
      %v1481 = vunpack.c.h.b16 %v1447
      %v1482 = vunpack.c.l.b16 %v1448
      %v1483 = vunpack.c.l.b16 %v1449
      %v1484 = vunpack.c.h.b16 %v1449
      %v1485 = vunpack.c.l.b16 %v1450
      %v1486 = vunpack.c.l.b16 %v1451
      %v1487 = vunpack.c.h.b16 %v1451
      %v1488 = vunpack.c.l.b16 %v1452
      %v1489 = vunpack.c.l.b16 %v1453
      %v1490 = vunpack.c.h.b16 %v1453
      %v1491 = vunpack.c.l.b16 %v1454
      %v1492 = vunpack.c.l.b16 %v1455
      %v1493 = vunpack.c.h.b16 %v1455
      %v1494 = vunpack.c.l.b16 %v1456
      %v1495 = vunpack.c.l.b16 %v1457
      %v1496 = vunpack.c.h.b16 %v1457
      %v1497 = vunpack.c.l.b16 %v1458
      %v1498 = vunpack.c.l.b16 %v1459
      %v1499 = vunpack.c.h.b16 %v1459
      %v1500 = vunpack.c.l.b16 %v1460
      %v1501 = vpack.c.b16 %v1480, %v1477
      %v1502 = vpack.c.b16 %v1481, %v1478
      %v1503 = vpack.c.b16 %v1482, %v1479
      %v1504 = vpack.c.b16 %v1486, %v1483
      %v1505 = vpack.c.b16 %v1487, %v1484
      %v1506 = vpack.c.b16 %v1488, %v1485
      %v1507 = vpack.c.b16 %v1492, %v1489
      %v1508 = vpack.c.b16 %v1493, %v1490
      %v1509 = vpack.c.b16 %v1494, %v1491
      %v1510 = vpack.c.b16 %v1498, %v1495
      %v1511 = vpack.c.b16 %v1499, %v1496
      %v1512 = vpack.c.b16 %v1500, %v1497
      %v1522 = vsel %vm398, %v1503, 0
      %v1525 = vsel %vm398, %v1506, 0
      %v1528 = vsel %vm398, %v1509, 0
      %v1531 = vsel %vm398, %v1512, 0
      %1533 = vmatprep.subr.bf16.mxu0 0
      %1534 = vmatpush1.bf16.msra.mxu0 %v362
      %1535 = vmatprep.subr.bf16.mxu0 0
      %1536 = vmatpush1.bf16.msra.mxu0 %v363
      %1537 = vmatprep.subr.bf16.mxu0 0
      %1538 = vmatpush1.bf16.msra.mxu0 %v364
      %1539 = vmatprep.subr.bf16.mxu0 0
      %1540 = vmatpush1.bf16.msra.mxu0 %v365
      %1541 = vmatprep.subr.bf16.mxu0 0
      %1542 = vmatpush1.bf16.msra.mxu0 %v366
      %1543 = vmatprep.subr.bf16.mxu0 0
      %1544 = vmatpush1.bf16.msra.mxu0 %v367
      %1545 = vmatprep.subr.bf16.mxu0 0
      %1546 = vmatpush1.bf16.msra.mxu0 %v368
      %1547 = vmatprep.subr.bf16.mxu0 0
      %1548 = vmatpush1.bf16.msra.mxu0 %v369
      %1549 = vmatprep.subr.bf16.mxu0 0
      %1550 = vmatpush1.bf16.msra.mxu0 %v370
      %1551 = vmatprep.subr.bf16.mxu0 0
      %1552 = vmatpush1.bf16.msra.mxu0 %v371
      %1553 = vmatprep.subr.bf16.mxu0 0
      %1554 = vmatpush1.bf16.msra.mxu0 %v372
      %1555 = vmatprep.subr.bf16.mxu0 0
      %1556 = vmatpush1.bf16.msra.mxu0 %v373
      %1557 = vmatprep.subr.bf16.mxu0 0
      %1558 = vmatpush1.bf16.msra.mxu0 %v374
      %1559 = vmatprep.subr.bf16.mxu0 0
      %1560 = vmatpush1.bf16.msra.mxu0 %v375
      %1561 = vmatprep.subr.bf16.mxu0 0
      %1562 = vmatpush1.bf16.msra.mxu0 %v376
      %1563 = vmatprep.subr.bf16.mxu0 0
      %1564 = vmatpush1.bf16.msra.mxu0 %v377
      %1565 = vmatprep.mubr.bf16.mxu0 %v1502
      %1566 = vmatmul.mubr.bf16.gmra.mrb[0].mxu0 %v1501
      %v1567 = vpop.f32.mrb[0].mxu0
      %v1568 = vadd.f32 0.0, %v1567
      %v1569 = vpop.f32.mrb[0].mxu0
      %v1570 = vpop.f32.mrb[0].mxu0
      %v1571 = vadd.f32 0.0, %v1570
      %v1572 = vpop.f32.mrb[0].mxu0
      %1573 = vmatprep.mubr.bf16.mxu0 %v1505
      %1574 = vmatmul.mubr.bf16.gmra.mrb[0].mxu0 %v1504
      %v1575 = vpop.f32.mrb[0].mxu0
      %v1576 = vadd.f32 0.0, %v1575
      %v1577 = vpop.f32.mrb[0].mxu0
      %v1578 = vpop.f32.mrb[0].mxu0
      %v1579 = vadd.f32 0.0, %v1578
      %v1580 = vpop.f32.mrb[0].mxu0
      %1581 = vmatprep.mubr.bf16.mxu0 %v1508
      %1582 = vmatmul.mubr.bf16.gmra.mrb[0].mxu0 %v1507
      %v1583 = vpop.f32.mrb[0].mxu0
      %v1584 = vadd.f32 0.0, %v1583
      %v1585 = vpop.f32.mrb[0].mxu0
      %v1586 = vpop.f32.mrb[0].mxu0
      %v1587 = vadd.f32 0.0, %v1586
      %v1588 = vpop.f32.mrb[0].mxu0
      %1589 = vmatprep.mubr.bf16.mxu0 %v1511
      %1590 = vmatmul.mubr.bf16.gmra.mrb[0].mxu0 %v1510
      %v1591 = vpop.f32.mrb[0].mxu0
      %v1592 = vadd.f32 0.0, %v1591
      %v1593 = vpop.f32.mrb[0].mxu0
      %v1594 = vpop.f32.mrb[0].mxu0
      %v1595 = vadd.f32 0.0, %v1594
      %v1596 = vpop.f32.mrb[0].mxu0
      %1597 = vdwg.mxu0
      %1598 = vmatprep.subr.bf16.mxu0 0
      %1599 = vmatpush1.bf16.msra.mxu0 %v378
      %1600 = vmatprep.subr.bf16.mxu0 0
      %1601 = vmatpush1.bf16.msra.mxu0 %v379
      %1602 = vmatprep.subr.bf16.mxu0 0
      %1603 = vmatpush1.bf16.msra.mxu0 0
      %1604 = vmatprep.subr.bf16.mxu0 0
      %1605 = vmatpush1.bf16.msra.mxu0 0
      %1606 = vmatprep.subr.bf16.mxu0 0
      %1607 = vmatpush1.bf16.msra.mxu0 0
      %1608 = vmatprep.subr.bf16.mxu0 0
      %1609 = vmatpush1.bf16.msra.mxu0 0
      %1610 = vmatprep.subr.bf16.mxu0 0
      %1611 = vmatpush1.bf16.msra.mxu0 0
      %1612 = vmatprep.subr.bf16.mxu0 0
      %1613 = vmatpush1.bf16.msra.mxu0 0
      %1614 = vmatprep.subr.bf16.mxu0 0
      %1615 = vmatpush1.bf16.msra.mxu0 0
      %1616 = vmatprep.subr.bf16.mxu0 0
      %1617 = vmatpush1.bf16.msra.mxu0 0
      %1618 = vmatprep.subr.bf16.mxu0 0
      %1619 = vmatpush1.bf16.msra.mxu0 0
      %1620 = vmatprep.subr.bf16.mxu0 0
      %1621 = vmatpush1.bf16.msra.mxu0 0
      %1622 = vmatprep.subr.bf16.mxu0 0
      %1623 = vmatpush1.bf16.msra.mxu0 0
      %1624 = vmatprep.subr.bf16.mxu0 0
      %1625 = vmatpush1.bf16.msra.mxu0 0
      %1626 = vmatprep.subr.bf16.mxu0 0
      %1627 = vmatpush1.bf16.msra.mxu0 0
      %1628 = vmatprep.subr.bf16.mxu0 0
      %1629 = vmatpush1.bf16.msra.mxu0 0
      %1630 = vmatprep.mubr.bf16.mxu0 0
      %1631 = vmatmul.mubr.bf16.gmra.mrb[0].mxu0 %v1522
      %v1632 = vpop.f32.mrb[0].mxu0
      %v1633 = vadd.f32 %v1568, %v1632
      %v1634 = vpop.f32.mrb[0].mxu0
      %v1635 = vpop.f32.mrb[0].mxu0
      %v1636 = vadd.f32 %v1571, %v1635
      %v1637 = vpop.f32.mrb[0].mxu0
      %1638 = vmatprep.mubr.bf16.mxu0 0
      %1639 = vmatmul.mubr.bf16.gmra.mrb[0].mxu0 %v1525
      %v1640 = vpop.f32.mrb[0].mxu0
      %v1641 = vadd.f32 %v1576, %v1640
      %v1642 = vpop.f32.mrb[0].mxu0
      %v1643 = vpop.f32.mrb[0].mxu0
      %v1644 = vadd.f32 %v1579, %v1643
      %v1645 = vpop.f32.mrb[0].mxu0
      %1646 = vmatprep.mubr.bf16.mxu0 0
      %1647 = vmatmul.mubr.bf16.gmra.mrb[0].mxu0 %v1528
      %v1648 = vpop.f32.mrb[0].mxu0
      %v1649 = vadd.f32 %v1584, %v1648
      %v1650 = vpop.f32.mrb[0].mxu0
      %v1651 = vpop.f32.mrb[0].mxu0
      %v1652 = vadd.f32 %v1587, %v1651
      %v1653 = vpop.f32.mrb[0].mxu0
      %1654 = vmatprep.mubr.bf16.mxu0 0
      %1655 = vmatmul.mubr.bf16.gmra.mrb[0].mxu0 %v1531
      %v1656 = vpop.f32.mrb[0].mxu0
      %v1657 = vadd.f32 %v1592, %v1656
      %v1658 = vpop.f32.mrb[0].mxu0
      %v1659 = vpop.f32.mrb[0].mxu0
      %v1660 = vadd.f32 %v1595, %v1659
      %v1661 = vpop.f32.mrb[0].mxu0
      %1662 = vdwg.mxu0
      %v1663 = vmax.f32 %v1437, %v1633
      %v1664 = vmax.f32 %v1438, %v1636
      %v1665 = vmax.f32 %v1439, %v1641
      %v1666 = vmax.f32 %v1440, %v1644
      %v1667 = vmax.f32 %v1441, %v1649
      %v1668 = vmax.f32 %v1442, %v1652
      %v1669 = vmax.f32 %v1443, %v1657
      %v1670 = vmax.f32 %v1444, %v1660
      %v1671 = vld [vmem:[%s169 + $0x240] sm:$0xff]
      %v1672 = vld [vmem:[%s169 + $0x248] sm:$0xf]
      %v1673 = vld [vmem:[%s169 + $0x24c] sm:$0xff]
      %v1674 = vld [vmem:[%s169 + $0x254] sm:$0xf]
      %v1675 = vld [vmem:[%s169 + $0x258] sm:$0xff]
      %v1676 = vld [vmem:[%s169 + $0x260] sm:$0xf]
      %v1677 = vld [vmem:[%s169 + $0x264] sm:$0xff]
      %v1678 = vld [vmem:[%s169 + $0x26c] sm:$0xf]
      %v1679 = vld [vmem:[%s169 + $0x270] sm:$0xff]
      %v1680 = vld [vmem:[%s169 + $0x278] sm:$0xf]
      %v1681 = vld [vmem:[%s169 + $0x27c] sm:$0xff]
      %v1682 = vld [vmem:[%s169 + $0x284] sm:$0xf]
      %v1683 = vld [vmem:[%s169 + $0x288] sm:$0xff]
      %v1684 = vld [vmem:[%s169 + $0x290] sm:$0xf]
      %v1685 = vld [vmem:[%s169 + $0x294] sm:$0xff]
      %v1686 = vld [vmem:[%s169 + $0x29c] sm:$0xf]
      %v1703 = vunpack.c.l.b16 %v1671
      %v1704 = vunpack.c.h.b16 %v1671
      %v1705 = vunpack.c.l.b16 %v1672
      %v1706 = vunpack.c.l.b16 %v1673
      %v1707 = vunpack.c.h.b16 %v1673
      %v1708 = vunpack.c.l.b16 %v1674
      %v1709 = vunpack.c.l.b16 %v1675
      %v1710 = vunpack.c.h.b16 %v1675
      %v1711 = vunpack.c.l.b16 %v1676
      %v1712 = vunpack.c.l.b16 %v1677
      %v1713 = vunpack.c.h.b16 %v1677
      %v1714 = vunpack.c.l.b16 %v1678
      %v1715 = vunpack.c.l.b16 %v1679
      %v1716 = vunpack.c.h.b16 %v1679
      %v1717 = vunpack.c.l.b16 %v1680
      %v1718 = vunpack.c.l.b16 %v1681
      %v1719 = vunpack.c.h.b16 %v1681
      %v1720 = vunpack.c.l.b16 %v1682
      %v1721 = vunpack.c.l.b16 %v1683
      %v1722 = vunpack.c.h.b16 %v1683
      %v1723 = vunpack.c.l.b16 %v1684
      %v1724 = vunpack.c.l.b16 %v1685
      %v1725 = vunpack.c.h.b16 %v1685
      %v1726 = vunpack.c.l.b16 %v1686
      %v1727 = vpack.c.b16 %v1706, %v1703
      %v1728 = vpack.c.b16 %v1707, %v1704
      %v1729 = vpack.c.b16 %v1708, %v1705
      %v1730 = vpack.c.b16 %v1712, %v1709
      %v1731 = vpack.c.b16 %v1713, %v1710
      %v1732 = vpack.c.b16 %v1714, %v1711
      %v1733 = vpack.c.b16 %v1718, %v1715
      %v1734 = vpack.c.b16 %v1719, %v1716
      %v1735 = vpack.c.b16 %v1720, %v1717
      %v1736 = vpack.c.b16 %v1724, %v1721
      %v1737 = vpack.c.b16 %v1725, %v1722
      %v1738 = vpack.c.b16 %v1726, %v1723
      %v1748 = vsel %vm398, %v1729, 0
      %v1751 = vsel %vm398, %v1732, 0
      %v1754 = vsel %vm398, %v1735, 0
      %v1757 = vsel %vm398, %v1738, 0
      %1759 = vmatprep.subr.bf16.mxu0 0
      %1760 = vmatpush1.bf16.msra.mxu0 %v362
      %1761 = vmatprep.subr.bf16.mxu0 0
      %1762 = vmatpush1.bf16.msra.mxu0 %v363
      %1763 = vmatprep.subr.bf16.mxu0 0
      %1764 = vmatpush1.bf16.msra.mxu0 %v364
      %1765 = vmatprep.subr.bf16.mxu0 0
      %1766 = vmatpush1.bf16.msra.mxu0 %v365
      %1767 = vmatprep.subr.bf16.mxu0 0
      %1768 = vmatpush1.bf16.msra.mxu0 %v366
      %1769 = vmatprep.subr.bf16.mxu0 0
      %1770 = vmatpush1.bf16.msra.mxu0 %v367
      %1771 = vmatprep.subr.bf16.mxu0 0
      %1772 = vmatpush1.bf16.msra.mxu0 %v368
      %1773 = vmatprep.subr.bf16.mxu0 0
      %1774 = vmatpush1.bf16.msra.mxu0 %v369
      %1775 = vmatprep.subr.bf16.mxu0 0
      %1776 = vmatpush1.bf16.msra.mxu0 %v370
      %1777 = vmatprep.subr.bf16.mxu0 0
      %1778 = vmatpush1.bf16.msra.mxu0 %v371
      %1779 = vmatprep.subr.bf16.mxu0 0
      %1780 = vmatpush1.bf16.msra.mxu0 %v372
      %1781 = vmatprep.subr.bf16.mxu0 0
      %1782 = vmatpush1.bf16.msra.mxu0 %v373
      %1783 = vmatprep.subr.bf16.mxu0 0
      %1784 = vmatpush1.bf16.msra.mxu0 %v374
      %1785 = vmatprep.subr.bf16.mxu0 0
      %1786 = vmatpush1.bf16.msra.mxu0 %v375
      %1787 = vmatprep.subr.bf16.mxu0 0
      %1788 = vmatpush1.bf16.msra.mxu0 %v376
      %1789 = vmatprep.subr.bf16.mxu0 0
      %1790 = vmatpush1.bf16.msra.mxu0 %v377
      %1791 = vmatprep.mubr.bf16.mxu0 %v1728
      %1792 = vmatmul.mubr.bf16.gmra.mrb[0].mxu0 %v1727
      %v1793 = vpop.f32.mrb[0].mxu0
      %v1794 = vadd.f32 0.0, %v1793
      %v1795 = vpop.f32.mrb[0].mxu0
      %v1796 = vpop.f32.mrb[0].mxu0
      %v1797 = vadd.f32 0.0, %v1796
      %v1798 = vpop.f32.mrb[0].mxu0
      %1799 = vmatprep.mubr.bf16.mxu0 %v1731
      %1800 = vmatmul.mubr.bf16.gmra.mrb[0].mxu0 %v1730
      %v1801 = vpop.f32.mrb[0].mxu0
      %v1802 = vadd.f32 0.0, %v1801
      %v1803 = vpop.f32.mrb[0].mxu0
      %v1804 = vpop.f32.mrb[0].mxu0
      %v1805 = vadd.f32 0.0, %v1804
      %v1806 = vpop.f32.mrb[0].mxu0
      %1807 = vmatprep.mubr.bf16.mxu0 %v1734
      %1808 = vmatmul.mubr.bf16.gmra.mrb[0].mxu0 %v1733
      %v1809 = vpop.f32.mrb[0].mxu0
      %v1810 = vadd.f32 0.0, %v1809
      %v1811 = vpop.f32.mrb[0].mxu0
      %v1812 = vpop.f32.mrb[0].mxu0
      %v1813 = vadd.f32 0.0, %v1812
      %v1814 = vpop.f32.mrb[0].mxu0
      %1815 = vmatprep.mubr.bf16.mxu0 %v1737
      %1816 = vmatmul.mubr.bf16.gmra.mrb[0].mxu0 %v1736
      %v1817 = vpop.f32.mrb[0].mxu0
      %v1818 = vadd.f32 0.0, %v1817
      %v1819 = vpop.f32.mrb[0].mxu0
      %v1820 = vpop.f32.mrb[0].mxu0
      %v1821 = vadd.f32 0.0, %v1820
      %v1822 = vpop.f32.mrb[0].mxu0
      %1823 = vdwg.mxu0
      %1824 = vmatprep.subr.bf16.mxu0 0
      %1825 = vmatpush1.bf16.msra.mxu0 %v378
      %1826 = vmatprep.subr.bf16.mxu0 0
      %1827 = vmatpush1.bf16.msra.mxu0 %v379
      %1828 = vmatprep.subr.bf16.mxu0 0
      %1829 = vmatpush1.bf16.msra.mxu0 0
      %1830 = vmatprep.subr.bf16.mxu0 0
      %1831 = vmatpush1.bf16.msra.mxu0 0
      %1832 = vmatprep.subr.bf16.mxu0 0
      %1833 = vmatpush1.bf16.msra.mxu0 0
      %1834 = vmatprep.subr.bf16.mxu0 0
      %1835 = vmatpush1.bf16.msra.mxu0 0
      %1836 = vmatprep.subr.bf16.mxu0 0
      %1837 = vmatpush1.bf16.msra.mxu0 0
      %1838 = vmatprep.subr.bf16.mxu0 0
      %1839 = vmatpush1.bf16.msra.mxu0 0
      %1840 = vmatprep.subr.bf16.mxu0 0
      %1841 = vmatpush1.bf16.msra.mxu0 0
      %1842 = vmatprep.subr.bf16.mxu0 0
      %1843 = vmatpush1.bf16.msra.mxu0 0
      %1844 = vmatprep.subr.bf16.mxu0 0
      %1845 = vmatpush1.bf16.msra.mxu0 0
      %1846 = vmatprep.subr.bf16.mxu0 0
      %1847 = vmatpush1.bf16.msra.mxu0 0
      %1848 = vmatprep.subr.bf16.mxu0 0
      %1849 = vmatpush1.bf16.msra.mxu0 0
      %1850 = vmatprep.subr.bf16.mxu0 0
      %1851 = vmatpush1.bf16.msra.mxu0 0
      %1852 = vmatprep.subr.bf16.mxu0 0
      %1853 = vmatpush1.bf16.msra.mxu0 0
      %1854 = vmatprep.subr.bf16.mxu0 0
      %1855 = vmatpush1.bf16.msra.mxu0 0
      %1856 = vmatprep.mubr.bf16.mxu0 0
      %1857 = vmatmul.mubr.bf16.gmra.mrb[0].mxu0 %v1748
      %v1858 = vpop.f32.mrb[0].mxu0
      %v1859 = vadd.f32 %v1794, %v1858
      %v1860 = vpop.f32.mrb[0].mxu0
      %v1861 = vpop.f32.mrb[0].mxu0
      %v1862 = vadd.f32 %v1797, %v1861
      %v1863 = vpop.f32.mrb[0].mxu0
      %1864 = vmatprep.mubr.bf16.mxu0 0
      %1865 = vmatmul.mubr.bf16.gmra.mrb[0].mxu0 %v1751
      %v1866 = vpop.f32.mrb[0].mxu0
      %v1867 = vadd.f32 %v1802, %v1866
      %v1868 = vpop.f32.mrb[0].mxu0
      %v1869 = vpop.f32.mrb[0].mxu0
      %v1870 = vadd.f32 %v1805, %v1869
      %v1871 = vpop.f32.mrb[0].mxu0
      %1872 = vmatprep.mubr.bf16.mxu0 0
      %1873 = vmatmul.mubr.bf16.gmra.mrb[0].mxu0 %v1754
      %v1874 = vpop.f32.mrb[0].mxu0
      %v1875 = vadd.f32 %v1810, %v1874
      %v1876 = vpop.f32.mrb[0].mxu0
      %v1877 = vpop.f32.mrb[0].mxu0
      %v1878 = vadd.f32 %v1813, %v1877
      %v1879 = vpop.f32.mrb[0].mxu0
      %1880 = vmatprep.mubr.bf16.mxu0 0
      %1881 = vmatmul.mubr.bf16.gmra.mrb[0].mxu0 %v1757
      %v1882 = vpop.f32.mrb[0].mxu0
      %v1883 = vadd.f32 %v1818, %v1882
      %v1884 = vpop.f32.mrb[0].mxu0
      %v1885 = vpop.f32.mrb[0].mxu0
      %v1886 = vadd.f32 %v1821, %v1885
      %v1887 = vpop.f32.mrb[0].mxu0
      %1888 = vdwg.mxu0
      %v1889 = vmax.f32 %v1663, %v1859
      %v1890 = vmax.f32 %v1664, %v1862
      %v1891 = vmax.f32 %v1665, %v1867
      %v1892 = vmax.f32 %v1666, %v1870
      %v1893 = vmax.f32 %v1667, %v1875
      %v1894 = vmax.f32 %v1668, %v1878
      %v1895 = vmax.f32 %v1669, %v1883
      %v1896 = vmax.f32 %v1670, %v1886
      %v1897 = vld [vmem:[%s169 + $0x2a0] sm:$0xff]
      %v1898 = vld [vmem:[%s169 + $0x2a8] sm:$0xf]
      %v1899 = vld [vmem:[%s169 + $0x2ac] sm:$0xff]
      %v1900 = vld [vmem:[%s169 + $0x2b4] sm:$0xf]
      %v1901 = vld [vmem:[%s169 + $0x2b8] sm:$0xff]
      %v1902 = vld [vmem:[%s169 + $0x2c0] sm:$0xf]
      %v1903 = vld [vmem:[%s169 + $0x2c4] sm:$0xff]
      %v1904 = vld [vmem:[%s169 + $0x2cc] sm:$0xf]
      %v1905 = vld [vmem:[%s169 + $0x2d0] sm:$0xff]
      %v1906 = vld [vmem:[%s169 + $0x2d8] sm:$0xf]
      %v1907 = vld [vmem:[%s169 + $0x2dc] sm:$0xff]
      %v1908 = vld [vmem:[%s169 + $0x2e4] sm:$0xf]
      %v1909 = vld [vmem:[%s169 + $0x2e8] sm:$0xff]
      %v1910 = vld [vmem:[%s169 + $0x2f0] sm:$0xf]
      %v1911 = vld [vmem:[%s169 + $0x2f4] sm:$0xff]
      %v1912 = vld [vmem:[%s169 + $0x2fc] sm:$0xf]
      %v1929 = vunpack.c.l.b16 %v1897
      %v1930 = vunpack.c.h.b16 %v1897
      %v1931 = vunpack.c.l.b16 %v1898
      %v1932 = vunpack.c.l.b16 %v1899
      %v1933 = vunpack.c.h.b16 %v1899
      %v1934 = vunpack.c.l.b16 %v1900
      %v1935 = vunpack.c.l.b16 %v1901
      %v1936 = vunpack.c.h.b16 %v1901
      %v1937 = vunpack.c.l.b16 %v1902
      %v1938 = vunpack.c.l.b16 %v1903
      %v1939 = vunpack.c.h.b16 %v1903
      %v1940 = vunpack.c.l.b16 %v1904
      %v1941 = vunpack.c.l.b16 %v1905
      %v1942 = vunpack.c.h.b16 %v1905
      %v1943 = vunpack.c.l.b16 %v1906
      %v1944 = vunpack.c.l.b16 %v1907
      %v1945 = vunpack.c.h.b16 %v1907
      %v1946 = vunpack.c.l.b16 %v1908
      %v1947 = vunpack.c.l.b16 %v1909
      %v1948 = vunpack.c.h.b16 %v1909
      %v1949 = vunpack.c.l.b16 %v1910
      %v1950 = vunpack.c.l.b16 %v1911
      %v1951 = vunpack.c.h.b16 %v1911
      %v1952 = vunpack.c.l.b16 %v1912
      %v1953 = vpack.c.b16 %v1932, %v1929
      %v1954 = vpack.c.b16 %v1933, %v1930
      %v1955 = vpack.c.b16 %v1934, %v1931
      %v1956 = vpack.c.b16 %v1938, %v1935
      %v1957 = vpack.c.b16 %v1939, %v1936
      %v1958 = vpack.c.b16 %v1940, %v1937
      %v1959 = vpack.c.b16 %v1944, %v1941
      %v1960 = vpack.c.b16 %v1945, %v1942
      %v1961 = vpack.c.b16 %v1946, %v1943
      %v1962 = vpack.c.b16 %v1950, %v1947
      %v1963 = vpack.c.b16 %v1951, %v1948
      %v1964 = vpack.c.b16 %v1952, %v1949
      %v1974 = vsel %vm398, %v1955, 0
      %v1977 = vsel %vm398, %v1958, 0
      %v1980 = vsel %vm398, %v1961, 0
      %v1983 = vsel %vm398, %v1964, 0
      %1985 = vmatprep.subr.bf16.mxu0 0
      %1986 = vmatpush1.bf16.msra.mxu0 %v362
      %1987 = vmatprep.subr.bf16.mxu0 0
      %1988 = vmatpush1.bf16.msra.mxu0 %v363
      %1989 = vmatprep.subr.bf16.mxu0 0
      %1990 = vmatpush1.bf16.msra.mxu0 %v364
      %1991 = vmatprep.subr.bf16.mxu0 0
      %1992 = vmatpush1.bf16.msra.mxu0 %v365
      %1993 = vmatprep.subr.bf16.mxu0 0
      %1994 = vmatpush1.bf16.msra.mxu0 %v366
      %1995 = vmatprep.subr.bf16.mxu0 0
      %1996 = vmatpush1.bf16.msra.mxu0 %v367
      %1997 = vmatprep.subr.bf16.mxu0 0
      %1998 = vmatpush1.bf16.msra.mxu0 %v368
      %1999 = vmatprep.subr.bf16.mxu0 0
      %2000 = vmatpush1.bf16.msra.mxu0 %v369
      %2001 = vmatprep.subr.bf16.mxu0 0
      %2002 = vmatpush1.bf16.msra.mxu0 %v370
      %2003 = vmatprep.subr.bf16.mxu0 0
      %2004 = vmatpush1.bf16.msra.mxu0 %v371
      %2005 = vmatprep.subr.bf16.mxu0 0
      %2006 = vmatpush1.bf16.msra.mxu0 %v372
      %2007 = vmatprep.subr.bf16.mxu0 0
      %2008 = vmatpush1.bf16.msra.mxu0 %v373
      %2009 = vmatprep.subr.bf16.mxu0 0
      %2010 = vmatpush1.bf16.msra.mxu0 %v374
      %2011 = vmatprep.subr.bf16.mxu0 0
      %2012 = vmatpush1.bf16.msra.mxu0 %v375
      %2013 = vmatprep.subr.bf16.mxu0 0
      %2014 = vmatpush1.bf16.msra.mxu0 %v376
      %2015 = vmatprep.subr.bf16.mxu0 0
      %2016 = vmatpush1.bf16.msra.mxu0 %v377
      %2017 = vmatprep.mubr.bf16.mxu0 %v1954
      %2018 = vmatmul.mubr.bf16.gmra.mrb[0].mxu0 %v1953
      %v2019 = vpop.f32.mrb[0].mxu0
      %v2020 = vadd.f32 0.0, %v2019
      %v2021 = vpop.f32.mrb[0].mxu0
      %v2022 = vpop.f32.mrb[0].mxu0
      %v2023 = vadd.f32 0.0, %v2022
      %v2024 = vpop.f32.mrb[0].mxu0
      %2025 = vmatprep.mubr.bf16.mxu0 %v1957
      %2026 = vmatmul.mubr.bf16.gmra.mrb[0].mxu0 %v1956
      %v2027 = vpop.f32.mrb[0].mxu0
      %v2028 = vadd.f32 0.0, %v2027
      %v2029 = vpop.f32.mrb[0].mxu0
      %v2030 = vpop.f32.mrb[0].mxu0
      %v2031 = vadd.f32 0.0, %v2030
      %v2032 = vpop.f32.mrb[0].mxu0
      %2033 = vmatprep.mubr.bf16.mxu0 %v1960
      %2034 = vmatmul.mubr.bf16.gmra.mrb[0].mxu0 %v1959
      %v2035 = vpop.f32.mrb[0].mxu0
      %v2036 = vadd.f32 0.0, %v2035
      %v2037 = vpop.f32.mrb[0].mxu0
      %v2038 = vpop.f32.mrb[0].mxu0
      %v2039 = vadd.f32 0.0, %v2038
      %v2040 = vpop.f32.mrb[0].mxu0
      %2041 = vmatprep.mubr.bf16.mxu0 %v1963
      %2042 = vmatmul.mubr.bf16.gmra.mrb[0].mxu0 %v1962
      %v2043 = vpop.f32.mrb[0].mxu0
      %v2044 = vadd.f32 0.0, %v2043
      %v2045 = vpop.f32.mrb[0].mxu0
      %v2046 = vpop.f32.mrb[0].mxu0
      %v2047 = vadd.f32 0.0, %v2046
      %v2048 = vpop.f32.mrb[0].mxu0
      %2049 = vdwg.mxu0
      %2050 = vmatprep.subr.bf16.mxu0 0
      %2051 = vmatpush1.bf16.msra.mxu0 %v378
      %2052 = vmatprep.subr.bf16.mxu0 0
      %2053 = vmatpush1.bf16.msra.mxu0 %v379
      %2054 = vmatprep.subr.bf16.mxu0 0
      %2055 = vmatpush1.bf16.msra.mxu0 0
      %2056 = vmatprep.subr.bf16.mxu0 0
      %2057 = vmatpush1.bf16.msra.mxu0 0
      %2058 = vmatprep.subr.bf16.mxu0 0
      %2059 = vmatpush1.bf16.msra.mxu0 0
      %2060 = vmatprep.subr.bf16.mxu0 0
      %2061 = vmatpush1.bf16.msra.mxu0 0
      %2062 = vmatprep.subr.bf16.mxu0 0
      %2063 = vmatpush1.bf16.msra.mxu0 0
      %2064 = vmatprep.subr.bf16.mxu0 0
      %2065 = vmatpush1.bf16.msra.mxu0 0
      %2066 = vmatprep.subr.bf16.mxu0 0
      %2067 = vmatpush1.bf16.msra.mxu0 0
      %2068 = vmatprep.subr.bf16.mxu0 0
      %2069 = vmatpush1.bf16.msra.mxu0 0
      %2070 = vmatprep.subr.bf16.mxu0 0
      %2071 = vmatpush1.bf16.msra.mxu0 0
      %2072 = vmatprep.subr.bf16.mxu0 0
      %2073 = vmatpush1.bf16.msra.mxu0 0
      %2074 = vmatprep.subr.bf16.mxu0 0
      %2075 = vmatpush1.bf16.msra.mxu0 0
      %2076 = vmatprep.subr.bf16.mxu0 0
      %2077 = vmatpush1.bf16.msra.mxu0 0
      %2078 = vmatprep.subr.bf16.mxu0 0
      %2079 = vmatpush1.bf16.msra.mxu0 0
      %2080 = vmatprep.subr.bf16.mxu0 0
      %2081 = vmatpush1.bf16.msra.mxu0 0
      %2082 = vmatprep.mubr.bf16.mxu0 0
      %2083 = vmatmul.mubr.bf16.gmra.mrb[0].mxu0 %v1974
      %v2084 = vpop.f32.mrb[0].mxu0
      %v2085 = vadd.f32 %v2020, %v2084
      %v2086 = vpop.f32.mrb[0].mxu0
      %v2087 = vpop.f32.mrb[0].mxu0
      %v2088 = vadd.f32 %v2023, %v2087
      %v2089 = vpop.f32.mrb[0].mxu0
      %2090 = vmatprep.mubr.bf16.mxu0 0
      %2091 = vmatmul.mubr.bf16.gmra.mrb[0].mxu0 %v1977
      %v2092 = vpop.f32.mrb[0].mxu0
      %v2093 = vadd.f32 %v2028, %v2092
      %v2094 = vpop.f32.mrb[0].mxu0
      %v2095 = vpop.f32.mrb[0].mxu0
      %v2096 = vadd.f32 %v2031, %v2095
      %v2097 = vpop.f32.mrb[0].mxu0
      %2098 = vmatprep.mubr.bf16.mxu0 0
      %2099 = vmatmul.mubr.bf16.gmra.mrb[0].mxu0 %v1980
      %v2100 = vpop.f32.mrb[0].mxu0
      %v2101 = vadd.f32 %v2036, %v2100
      %v2102 = vpop.f32.mrb[0].mxu0
      %v2103 = vpop.f32.mrb[0].mxu0
      %v2104 = vadd.f32 %v2039, %v2103
      %v2105 = vpop.f32.mrb[0].mxu0
      %2106 = vmatprep.mubr.bf16.mxu0 0
      %2107 = vmatmul.mubr.bf16.gmra.mrb[0].mxu0 %v1983
      %v2108 = vpop.f32.mrb[0].mxu0
      %v2109 = vadd.f32 %v2044, %v2108
      %v2110 = vpop.f32.mrb[0].mxu0
      %v2111 = vpop.f32.mrb[0].mxu0
      %v2112 = vadd.f32 %v2047, %v2111
      %v2113 = vpop.f32.mrb[0].mxu0
      %2114 = vdwg.mxu0
      %v2115 = vmax.f32 %v1889, %v2085
      %v2116 = vmax.f32 %v1890, %v2088
      %v2117 = vmax.f32 %v1891, %v2093
      %v2118 = vmax.f32 %v1892, %v2096
      %v2119 = vmax.f32 %v1893, %v2101
      %v2120 = vmax.f32 %v1894, %v2104
      %v2121 = vmax.f32 %v1895, %v2109
      %v2122 = vmax.f32 %v1896, %v2112
      %v2123 = vld [vmem:[%s2] sm:$0x1]
      %v2125 = vlaneseq
      %v2126 = vshrl.u32 %v2125, 7
      %v2127 = vsub.s32 0, %v2126
      %v2128 = vrot.slane %v2123, %v2127
      %v2130 = vadd.f32 %v2115, %v2128
      %v2131 = vadd.f32 %v2116, %v2128
      %v2132 = vadd.f32 %v2117, %v2128
      %v2133 = vadd.f32 %v2118, %v2128
      %v2134 = vadd.f32 %v2119, %v2128
      %v2135 = vadd.f32 %v2120, %v2128
      %v2136 = vadd.f32 %v2121, %v2128
      %v2137 = vadd.f32 %v2122, %v2128
      %v2138 = vxor.u32 %v2130, 2147483648
      %v2139 = vxor.u32 %v2131, 2147483648
      %v2140 = vxor.u32 %v2132, 2147483648
      %v2141 = vxor.u32 %v2133, 2147483648
      %v2142 = vxor.u32 %v2134, 2147483648
      %v2143 = vxor.u32 %v2135, 2147483648
      %v2144 = vxor.u32 %v2136, 2147483648
      %v2145 = vxor.u32 %v2137, 2147483648
      %v2146 = vmul.f32 %v2138, 1.442695
      %v2147 = vpow.pop %v2146
      %v2148 = vmul.f32 %v2139, 1.442695
      %v2149 = vpow.pop %v2148
      %v2150 = vmul.f32 %v2140, 1.442695
      %v2151 = vpow.pop %v2150
      %v2152 = vmul.f32 %v2141, 1.442695
      %v2153 = vpow.pop %v2152
      %v2154 = vmul.f32 %v2142, 1.442695
      %v2155 = vpow.pop %v2154
      %v2156 = vmul.f32 %v2143, 1.442695
      %v2157 = vpow.pop %v2156
      %v2158 = vmul.f32 %v2144, 1.442695
      %v2159 = vpow.pop %v2158
      %v2160 = vmul.f32 %v2145, 1.442695
      %v2161 = vpow.pop %v2160
      %v2162 = vadd.f32 %v2147, 1.0
      %v2163 = vadd.f32 %v2149, 1.0
      %v2164 = vadd.f32 %v2151, 1.0
      %v2165 = vadd.f32 %v2153, 1.0
      %v2166 = vadd.f32 %v2155, 1.0
      %v2167 = vadd.f32 %v2157, 1.0
      %v2168 = vadd.f32 %v2159, 1.0
      %v2169 = vadd.f32 %v2161, 1.0
      %v2170 = vrcp.pop %v2162
      %v2171 = vmul.f32 1.0, %v2170
      %v2172 = vrcp.pop %v2163
      %v2173 = vmul.f32 1.0, %v2172
      %v2174 = vrcp.pop %v2164
      %v2175 = vmul.f32 1.0, %v2174
      %v2176 = vrcp.pop %v2165
      %v2177 = vmul.f32 1.0, %v2176
      %v2178 = vrcp.pop %v2166
      %v2179 = vmul.f32 1.0, %v2178
      %v2180 = vrcp.pop %v2167
      %v2181 = vmul.f32 1.0, %v2180
      %v2182 = vrcp.pop %v2168
      %v2183 = vmul.f32 1.0, %v2182
      %v2184 = vrcp.pop %v2169
      %v2185 = vmul.f32 1.0, %v2184
      %2186 = vst [vmem:[%s175] sm:$0xff] %v2171
      %2187 = vst [vmem:[%s175 + $0x8] sm:$0xff] %v2173
      %2188 = vst [vmem:[%s175 + $0x10] sm:$0xff] %v2175
      %2189 = vst [vmem:[%s175 + $0x18] sm:$0xff] %v2177
      %2190 = vst [vmem:[%s175 + $0x20] sm:$0xff] %v2179
      %2191 = vst [vmem:[%s175 + $0x28] sm:$0xff] %v2181
      %2192 = vst [vmem:[%s175 + $0x30] sm:$0xff] %v2183
      %2193 = vst [vmem:[%s175 + $0x38] sm:$0xff] %v2185
      %s2194 = smul.u32 8, %s14
      %p2195 = scmp.lt.s32.totalorder %s2194, 15
      %s2196 = scalar_select %p2195, %s2194, 15
      %s2197 = smul.addr %s2196, 8
      %s2198 = scalar_lea.vmem %s3, %s2197
      // Predicated region
      $region33: #{closed_call.14} parent=31 // pred_check
        %p2199 = pneg %p100
      $region34: #{closed_call.14} parent=31 // pred_check_branch
        %2201 = sbr.rel (%p2199) target = $region36
      $region35: #{closed_call.14} parent=31 // pred_region
        %s2202 = smul.u32 8, %s14
      $region36: #{closed_call.14} parent=31 // pred_fallthru
        _
    $region32: #{closed_call.14} parent=5 // pred_fallthru
      _
    %p2203 = scmp.le.s32.totalorder 2, %s9
    // Predicated region
    $region37: #{closed_call.14} parent=5 // pred_check
      %p2204 = pneg %p2203
    $region38: #{closed_call.14} parent=5 // pred_check_branch
      %2206 = sbr.rel (%p2204) target = $region40
    $region39: #{closed_call.14} parent=5 // pred_region
      %s2207 = ssub.s32 %s9, 2
      // Predicated region
      $region41: #{closed_call.14} parent=39 // pred_check
        %p2208 = pneg %p106
      $region42: #{closed_call.14} parent=39 // pred_check_branch
        %2210 = sbr.rel (%p2208) target = $region44
      $region43: #{closed_call.14} parent=39 // pred_region
        %s2211 = smul.u32 8, %s15
        %p2212 = scmp.lt.s32.totalorder %s2211, 15
        %s2213 = scalar_select %p2212, %s2211, 15
        %s2214 = smul.addr %s2213, 8
        %s2215 = scalar_lea.vmem %s3, %s2214
      $region44: #{closed_call.14} parent=39 // pred_fallthru
        _
    $region40: #{closed_call.14} parent=5 // pred_fallthru
      _
  $region6: #{closed_call.14} parent=0 // loop_footer
    %s13 = sadd.s32 1, %s9
  $region7: #{closed_call.14} parent=0 // loop_footer_branch
    %8 = sbr.rel target = $region3
  $region8: #{closed_call.14} parent=0 // loop_exit
    _

// kernel: custom-call.5
$region0: #{custom-call.5}
  %s0 = inlined_call_operand.hbm [shape: f32[4,2,8,8,8], index: 0, kind: output, shape index: {}]

// kernel: closed_call.15
$region0: #{closed_call.15}
  #allocation0 [shape = 'u32[]', space=smem, size = 0x4, offset = 0x4, fixed_abs, tag = 'smem constant byte address 0x4 - core index']
  #allocation1 [shape = 'u32[144,128]{1,0:T(1,128)}', space=vmem, size = 0x12000, scoped, tag = 'internal scratch']
  %s0 = inlined_call_operand.vmem [shape: bf16[1024,384], index: 0, kind: input, shape index: {}]
  %s1 = inlined_call_operand.vmem [shape: bf16[384,128], index: 1, kind: input, shape index: {}]
  %s2 = inlined_call_operand.vmem [shape: f32[1,128], index: 2, kind: input, shape index: {}]
  %s3 = inlined_call_operand.vmem [shape: f32[128,128], index: 3, kind: output, shape index: {}]
  %s4 = sld [smem:[#allocation0]]
  $region45: #{closed_call.15} parent=0
    _
  %s6 = ssub.s32 1, %s4
  %s7 = scalar_select 0, %s6, %s4
  loop: start=0, step=1, limit=4
  $region2: #{closed_call.15} parent=0 // loop_pre_header
    _
  $region3: #{closed_call.15} parent=0 // loop_header
    %s9 = sphi 0, %s13
    %p10 = scmp.ge.s32.totalorder %s9, 4
    %s19 = sphi 0, %s21
    %s22 = sphi 0, %s19
    %s23 = sphi 0, %s22
    %s39 = sphi 0, %s23
    %s43 = sphi 0, %s43
    %s45 = sphi 0, %s43
    %s46 = sphi 0, %s45
    %s60 = sphi 0, %s46
    %s64 = sphi 0, %s64
    %s66 = sphi 0, %s64
    %s67 = sphi 0, %s66
    %s81 = sphi 0, %s67
    %s87 = sphi 0, %s89
    %s90 = sphi 0, %s87
    %s91 = sphi 0, %s90
    %s107 = sphi 0, %s91
  $region4: #{closed_call.15} parent=0 // loop_header_branch
    %12 = sbr.rel (%p10) target = $region8
  $region5: #{closed_call.15} parent=0 // loop_body
    %s14 = ssub.s32 %s9, 1
    %s15 = ssub.s32 %s9, 2
    %s16 = sadd.s32 %s9, 1
    %s17 = ssub.s32 %s9, %s16
    %p18 = scmp.eq.s32.totalorder %s17, 0
    %s20 = sadd.s32 %s19, 1
    %s21 = scalar_select %p18, %s19, %s20
    %p24 = pneg %p18
    %p25 = scmp.eq.s32.totalorder %s9, 1
    %p26 = por %p24, %p25
    %p27 = scmp.ne.s32.totalorder %s19, %s22
    %p28 = scmp.eq.s32.totalorder %s9, 0
    %p29 = por %p27, %p28
    %p30 = scmp.ne.s32.totalorder %s19, %s22
    %p31 = scmp.eq.s32.totalorder %s14, 1
    %p32 = por %p30, %p31
    %p33 = scmp.ne.s32.totalorder %s22, %s23
    %p34 = scmp.eq.s32.totalorder %s14, 0
    %p35 = por %p33, %p34
    %p36 = scmp.ne.s32.totalorder %s22, %s23
    %p37 = scmp.eq.s32.totalorder %s15, 1
    %p38 = por %p36, %p37
    %p40 = scmp.ne.s32.totalorder %s23, %s39
    %p41 = scmp.eq.s32.totalorder %s15, 0
    %p42 = por %p40, %p41
    %s44 = sadd.s32 %s43, 1
    %p47 = scmp.eq.s32.totalorder %s9, 1
    %p48 = scmp.ne.s32.totalorder %s43, %s45
    %p49 = scmp.eq.s32.totalorder %s9, 0
    %p50 = por %p48, %p49
    %p51 = scmp.ne.s32.totalorder %s43, %s45
    %p52 = scmp.eq.s32.totalorder %s14, 1
    %p53 = por %p51, %p52
    %p54 = scmp.ne.s32.totalorder %s45, %s46
    %p55 = scmp.eq.s32.totalorder %s14, 0
    %p56 = por %p54, %p55
    %p57 = scmp.ne.s32.totalorder %s45, %s46
    %p58 = scmp.eq.s32.totalorder %s15, 1
    %p59 = por %p57, %p58
    %p61 = scmp.ne.s32.totalorder %s46, %s60
    %p62 = scmp.eq.s32.totalorder %s15, 0
    %p63 = por %p61, %p62
    %s65 = sadd.s32 %s64, 1
    %p68 = scmp.eq.s32.totalorder %s9, 1
    %p69 = scmp.ne.s32.totalorder %s64, %s66
    %p70 = scmp.eq.s32.totalorder %s9, 0
    %p71 = por %p69, %p70
    %p72 = scmp.ne.s32.totalorder %s64, %s66
    %p73 = scmp.eq.s32.totalorder %s14, 1
    %p74 = por %p72, %p73
    %p75 = scmp.ne.s32.totalorder %s66, %s67
    %p76 = scmp.eq.s32.totalorder %s14, 0
    %p77 = por %p75, %p76
    %p78 = scmp.ne.s32.totalorder %s66, %s67
    %p79 = scmp.eq.s32.totalorder %s15, 1
    %p80 = por %p78, %p79
    %p82 = scmp.ne.s32.totalorder %s67, %s81
    %p83 = scmp.eq.s32.totalorder %s15, 0
    %p84 = por %p82, %p83
    %s85 = ssub.s32 %s9, %s16
    %p86 = scmp.eq.s32.totalorder %s85, 0
    %s88 = sadd.s32 %s87, 1
    %s89 = scalar_select %p86, %s87, %s88
    %p92 = pneg %p86
    %p93 = scmp.eq.s32.totalorder %s9, 1
    %p94 = por %p92, %p93
    %p95 = scmp.ne.s32.totalorder %s87, %s90
    %p96 = scmp.eq.s32.totalorder %s9, 0
    %p97 = por %p95, %p96
    %p98 = scmp.ne.s32.totalorder %s87, %s90
    %p99 = scmp.eq.s32.totalorder %s14, 1
    %p100 = por %p98, %p99
    %p101 = scmp.ne.s32.totalorder %s90, %s91
    %p102 = scmp.eq.s32.totalorder %s14, 0
    %p103 = por %p101, %p102
    %p104 = scmp.ne.s32.totalorder %s90, %s91
    %p105 = scmp.eq.s32.totalorder %s15, 1
    %p106 = por %p104, %p105
    %p108 = scmp.ne.s32.totalorder %s91, %s107
    %p109 = scmp.eq.s32.totalorder %s15, 0
    %p110 = por %p108, %p109
    %p111 = scmp.le.s32.totalorder 1, %s9
    %p112 = scmp.lt.s32.totalorder %s9, 3
    %p113 = pnand %p111, %p112
    %p114 = pneg %p113
    // Predicated region
    $region9: #{closed_call.15} parent=5 // pred_check
      _
    $region10: #{closed_call.15} parent=5 // pred_check_branch
      %116 = sbr.rel (%p113) target = $region12
    $region11: #{closed_call.15} parent=5 // pred_region
      %s117 = ssub.s32 %s9, 1
      // Predicated region
      $region13: #{closed_call.15} parent=11 // pred_check
        %p118 = pneg %p56
      $region14: #{closed_call.15} parent=11 // pred_check_branch
        %120 = sbr.rel (%p118) target = $region16
      $region15: #{closed_call.15} parent=11 // pred_region
        _
      $region16: #{closed_call.15} parent=11 // pred_fallthru
        _
      // Predicated region
      $region17: #{closed_call.15} parent=11 // pred_check
        %p121 = pneg %p77
      $region18: #{closed_call.15} parent=11 // pred_check_branch
        %123 = sbr.rel (%p121) target = $region20
      $region19: #{closed_call.15} parent=11 // pred_region
        _
      $region20: #{closed_call.15} parent=11 // pred_fallthru
        _
    $region12: #{closed_call.15} parent=5 // pred_fallthru
      _
    %p124 = scmp.lt.s32.totalorder %s9, 2
    // Predicated region
    $region21: #{closed_call.15} parent=5 // pred_check
      %p125 = pneg %p124
    $region22: #{closed_call.15} parent=5 // pred_check_branch
      %127 = sbr.rel (%p125) target = $region24
    $region23: #{closed_call.15} parent=5 // pred_region
      // Predicated region
      $region25: #{closed_call.15} parent=23 // pred_check
        %p128 = pneg %p29
      $region26: #{closed_call.15} parent=23 // pred_check_branch
        %130 = sbr.rel (%p128) target = $region28
      $region27: #{closed_call.15} parent=23 // pred_region
        %s131 = smul.u32 64, %s9
        %p132 = scmp.lt.s32.totalorder %s131, 127
        %s133 = scalar_select %p132, %s131, 127
        %s134 = smul.addr %s133, 3
        %s135 = smul.addr %s134, 4
        %s136 = scalar_lea.vmem %s0, %s135
        %s137 = smul.u32 64, %s9
      $region28: #{closed_call.15} parent=23 // pred_fallthru
        _
    $region24: #{closed_call.15} parent=5 // pred_fallthru
      _
    %p138 = scmp.le.s32.totalorder 1, %s9
    %p139 = scmp.lt.s32.totalorder %s9, 3
    %p140 = pnand %p138, %p139
    %p141 = pneg %p140
    // Predicated region
    $region29: #{closed_call.15} parent=5 // pred_check
      _
    $region30: #{closed_call.15} parent=5 // pred_check_branch
      %143 = sbr.rel (%p140) target = $region32
    $region31: #{closed_call.15} parent=5 // pred_region
      %s144 = ssub.s32 %s9, 1
      %s145 = smul.u32 64, %s14
      %p146 = scmp.lt.s32.totalorder %s145, 127
      %s147 = scalar_select %p146, %s145, 127
      %s148 = smul.addr %s147, 3
      %s149 = smul.addr %s148, 4
      %s150 = scalar_lea.vmem %s0, %s149
      %p151 = pneg %p35
      %p152 = pneg %p32
      %p153 = pneg %p56
      %p154 = pneg %p53
      %p155 = pneg %p77
      %p156 = pneg %p74
      %p157 = pneg %p103
      %p158 = pneg %p100
      %s159 = smul.u32 8, %s14
      %p160 = scmp.lt.s32.totalorder %s159, 15
      %s161 = scalar_select %p160, %s159, 15
      %s162 = smul.addr %s161, 8
      %s163 = scalar_lea.vmem %s3, %s162
      %s164 = smul.u32 64, %s14
      %p165 = scmp.lt.s32.totalorder %s164, 127
      %s166 = scalar_select %p165, %s164, 127
      %s167 = smul.addr %s166, 3
      %s168 = smul.addr %s167, 4
      %s169 = scalar_lea.vmem %s0, %s168
      %s170 = smul.u32 64, %s14
      %s171 = smul.u32 8, %s14
      %p172 = scmp.lt.s32.totalorder %s171, 15
      %s173 = scalar_select %p172, %s171, 15
      %s174 = smul.addr %s173, 8
      %s175 = scalar_lea.vmem %s3, %s174
      %s176 = smul.u32 8, %s14
      %v178 = vld [vmem:[%s1] sm:$0xf]
      %v179 = vld [vmem:[%s1 + $0x4] sm:$0xf]
      %v180 = vld [vmem:[%s1 + $0x8] sm:$0xf]
      %v181 = vld [vmem:[%s1 + $0xc] sm:$0xf]
      %v182 = vld [vmem:[%s1 + $0x10] sm:$0xf]
      %v183 = vld [vmem:[%s1 + $0x14] sm:$0xf]
      %v184 = vld [vmem:[%s1 + $0x18] sm:$0xf]
      %v185 = vld [vmem:[%s1 + $0x1c] sm:$0xf]
      %v186 = vld [vmem:[%s1 + $0x20] sm:$0xf]
      %v187 = vld [vmem:[%s1 + $0x24] sm:$0xf]
      %v188 = vld [vmem:[%s1 + $0x28] sm:$0xf]
      %v189 = vld [vmem:[%s1 + $0x2c] sm:$0xf]
      %v190 = vld [vmem:[%s1 + $0x30] sm:$0xf]
      %v191 = vld [vmem:[%s1 + $0x34] sm:$0xf]
      %v192 = vld [vmem:[%s1 + $0x38] sm:$0xf]
      %v193 = vld [vmem:[%s1 + $0x3c] sm:$0xf]
      %v194 = vld [vmem:[%s1 + $0x40] sm:$0xf]
      %v195 = vld [vmem:[%s1 + $0x44] sm:$0xf]
      %v196 = vld [vmem:[%s1 + $0x48] sm:$0xf]
      %v197 = vld [vmem:[%s1 + $0x4c] sm:$0xf]
      %v198 = vld [vmem:[%s1 + $0x50] sm:$0xf]
      %v199 = vld [vmem:[%s1 + $0x54] sm:$0xf]
      %v200 = vld [vmem:[%s1 + $0x58] sm:$0xf]
      %v201 = vld [vmem:[%s1 + $0x5c] sm:$0xf]
      %v202 = vld [vmem:[%s1 + $0x60] sm:$0xf]
      %v203 = vld [vmem:[%s1 + $0x64] sm:$0xf]
      %v204 = vld [vmem:[%s1 + $0x68] sm:$0xf]
      %v205 = vld [vmem:[%s1 + $0x6c] sm:$0xf]
      %v206 = vld [vmem:[%s1 + $0x70] sm:$0xf]
      %v207 = vld [vmem:[%s1 + $0x74] sm:$0xf]
      %v208 = vld [vmem:[%s1 + $0x78] sm:$0xf]
      %v209 = vld [vmem:[%s1 + $0x7c] sm:$0xf]
      %v210 = vld [vmem:[%s1 + $0x80] sm:$0xf]
      %v211 = vld [vmem:[%s1 + $0x84] sm:$0xf]
      %v212 = vld [vmem:[%s1 + $0x88] sm:$0xf]
      %v213 = vld [vmem:[%s1 + $0x8c] sm:$0xf]
      %v214 = vld [vmem:[%s1 + $0x90] sm:$0xf]
      %v215 = vld [vmem:[%s1 + $0x94] sm:$0xf]
      %v216 = vld [vmem:[%s1 + $0x98] sm:$0xf]
      %v217 = vld [vmem:[%s1 + $0x9c] sm:$0xf]
      %v218 = vld [vmem:[%s1 + $0xa0] sm:$0xf]
      %v219 = vld [vmem:[%s1 + $0xa4] sm:$0xf]
      %v220 = vld [vmem:[%s1 + $0xa8] sm:$0xf]
      %v221 = vld [vmem:[%s1 + $0xac] sm:$0xf]
      %v222 = vld [vmem:[%s1 + $0xb0] sm:$0xf]
      %v223 = vld [vmem:[%s1 + $0xb4] sm:$0xf]
      %v224 = vld [vmem:[%s1 + $0xb8] sm:$0xf]
      %v225 = vld [vmem:[%s1 + $0xbc] sm:$0xf]
      %v226 = vld [vmem:[%s169] sm:$0xff]
      %v227 = vld [vmem:[%s169 + $0x8] sm:$0xf]
      %v228 = vld [vmem:[%s169 + $0xc] sm:$0xff]
      %v229 = vld [vmem:[%s169 + $0x14] sm:$0xf]
      %v230 = vld [vmem:[%s169 + $0x18] sm:$0xff]
      %v231 = vld [vmem:[%s169 + $0x20] sm:$0xf]
      %v232 = vld [vmem:[%s169 + $0x24] sm:$0xff]
      %v233 = vld [vmem:[%s169 + $0x2c] sm:$0xf]
      %v234 = vld [vmem:[%s169 + $0x30] sm:$0xff]
      %v235 = vld [vmem:[%s169 + $0x38] sm:$0xf]
      %v236 = vld [vmem:[%s169 + $0x3c] sm:$0xff]
      %v237 = vld [vmem:[%s169 + $0x44] sm:$0xf]
      %v238 = vld [vmem:[%s169 + $0x48] sm:$0xff]
      %v239 = vld [vmem:[%s169 + $0x50] sm:$0xf]
      %v240 = vld [vmem:[%s169 + $0x54] sm:$0xff]
      %v241 = vld [vmem:[%s169 + $0x5c] sm:$0xf]
      %v258 = vunpack.c.l.b16 %v226
      %v259 = vunpack.c.h.b16 %v226
      %v260 = vunpack.c.l.b16 %v227
      %v261 = vunpack.c.l.b16 %v228
      %v262 = vunpack.c.h.b16 %v228
      %v263 = vunpack.c.l.b16 %v229
      %v264 = vunpack.c.l.b16 %v230
      %v265 = vunpack.c.h.b16 %v230
      %v266 = vunpack.c.l.b16 %v231
      %v267 = vunpack.c.l.b16 %v232
      %v268 = vunpack.c.h.b16 %v232
      %v269 = vunpack.c.l.b16 %v233
      %v270 = vunpack.c.l.b16 %v234
      %v271 = vunpack.c.h.b16 %v234
      %v272 = vunpack.c.l.b16 %v235
      %v273 = vunpack.c.l.b16 %v236
      %v274 = vunpack.c.h.b16 %v236
      %v275 = vunpack.c.l.b16 %v237
      %v276 = vunpack.c.l.b16 %v238
      %v277 = vunpack.c.h.b16 %v238
      %v278 = vunpack.c.l.b16 %v239
      %v279 = vunpack.c.l.b16 %v240
      %v280 = vunpack.c.h.b16 %v240
      %v281 = vunpack.c.l.b16 %v241
      %v282 = vpack.c.b16 %v261, %v258
      %v283 = vpack.c.b16 %v262, %v259
      %v284 = vpack.c.b16 %v263, %v260
      %v285 = vpack.c.b16 %v267, %v264
      %v286 = vpack.c.b16 %v268, %v265
      %v287 = vpack.c.b16 %v269, %v266
      %v288 = vpack.c.b16 %v273, %v270
      %v289 = vpack.c.b16 %v274, %v271
      %v290 = vpack.c.b16 %v275, %v272
      %v291 = vpack.c.b16 %v279, %v276
      %v292 = vpack.c.b16 %v280, %v277
      %v293 = vpack.c.b16 %v281, %v278
      %v354 = vunpack.c.l.b16 %v178
      %v355 = vunpack.c.l.b16 %v179
      %v356 = vunpack.c.l.b16 %v180
      %v357 = vunpack.c.l.b16 %v181
      %v358 = vunpack.c.l.b16 %v182
      %v359 = vunpack.c.l.b16 %v183
      %v360 = vunpack.c.l.b16 %v184
      %v361 = vunpack.c.l.b16 %v185
      %v362 = vunpack.c.l.b16 %v186
      %v363 = vunpack.c.l.b16 %v187
      %v364 = vunpack.c.l.b16 %v188
      %v365 = vunpack.c.l.b16 %v189
      %v366 = vunpack.c.l.b16 %v190
      %v367 = vunpack.c.l.b16 %v191
      %v368 = vunpack.c.l.b16 %v192
      %v369 = vunpack.c.l.b16 %v193
      %v370 = vunpack.c.l.b16 %v194
      %v371 = vunpack.c.l.b16 %v195
      %v372 = vunpack.c.l.b16 %v196
      %v373 = vunpack.c.l.b16 %v197
      %v374 = vunpack.c.l.b16 %v198
      %v375 = vunpack.c.l.b16 %v199
      %v376 = vunpack.c.l.b16 %v200
      %v377 = vunpack.c.l.b16 %v201
      %v378 = vunpack.c.l.b16 %v202
      %v379 = vunpack.c.l.b16 %v203
      %v380 = vunpack.c.l.b16 %v204
      %v381 = vunpack.c.l.b16 %v205
      %v382 = vunpack.c.l.b16 %v206
      %v383 = vunpack.c.l.b16 %v207
      %v384 = vunpack.c.l.b16 %v208
      %v385 = vunpack.c.l.b16 %v209
      %v386 = vunpack.c.l.b16 %v210
      %v387 = vunpack.c.l.b16 %v211
      %v388 = vunpack.c.l.b16 %v212
      %v389 = vunpack.c.l.b16 %v213
      %v390 = vunpack.c.l.b16 %v214
      %v391 = vunpack.c.l.b16 %v215
      %v392 = vunpack.c.l.b16 %v216
      %v393 = vunpack.c.l.b16 %v217
      %v394 = vunpack.c.l.b16 %v218
      %v395 = vunpack.c.l.b16 %v219
      %v396 = vunpack.c.l.b16 %v220
      %v397 = vunpack.c.l.b16 %v221
      %v398 = vunpack.c.l.b16 %v222
      %v399 = vunpack.c.l.b16 %v223
      %v400 = vunpack.c.l.b16 %v224
      %v401 = vunpack.c.l.b16 %v225
      %v402 = vpack.c.b16 %v355, %v354
      %v403 = vpack.c.b16 %v357, %v356
      %v404 = vpack.c.b16 %v359, %v358
      %v405 = vpack.c.b16 %v361, %v360
      %v406 = vpack.c.b16 %v363, %v362
      %v407 = vpack.c.b16 %v365, %v364
      %v408 = vpack.c.b16 %v367, %v366
      %v409 = vpack.c.b16 %v369, %v368
      %v410 = vpack.c.b16 %v371, %v370
      %v411 = vpack.c.b16 %v373, %v372
      %v412 = vpack.c.b16 %v375, %v374
      %v413 = vpack.c.b16 %v377, %v376
      %v414 = vpack.c.b16 %v379, %v378
      %v415 = vpack.c.b16 %v381, %v380
      %v416 = vpack.c.b16 %v383, %v382
      %v417 = vpack.c.b16 %v385, %v384
      %v418 = vpack.c.b16 %v387, %v386
      %v419 = vpack.c.b16 %v389, %v388
      %v420 = vpack.c.b16 %v391, %v390
      %v421 = vpack.c.b16 %v393, %v392
      %v422 = vpack.c.b16 %v395, %v394
      %v423 = vpack.c.b16 %v397, %v396
      %v424 = vpack.c.b16 %v399, %v398
      %v425 = vpack.c.b16 %v401, %v400
      %450 = vmatprep.subr.bf16.mxu0 0
      %451 = vmatpush1.bf16.msra.mxu0 %v402
      %452 = vmatprep.subr.bf16.mxu0 0
      %453 = vmatpush1.bf16.msra.mxu0 %v403
      %454 = vmatprep.subr.bf16.mxu0 0
      %455 = vmatpush1.bf16.msra.mxu0 %v404
      %456 = vmatprep.subr.bf16.mxu0 0
      %457 = vmatpush1.bf16.msra.mxu0 %v405
      %458 = vmatprep.subr.bf16.mxu0 0
      %459 = vmatpush1.bf16.msra.mxu0 %v406
      %460 = vmatprep.subr.bf16.mxu0 0
      %461 = vmatpush1.bf16.msra.mxu0 %v407
      %462 = vmatprep.subr.bf16.mxu0 0
      %463 = vmatpush1.bf16.msra.mxu0 %v408
      %464 = vmatprep.subr.bf16.mxu0 0
      %465 = vmatpush1.bf16.msra.mxu0 %v409
      %466 = vmatprep.subr.bf16.mxu0 0
      %467 = vmatpush1.bf16.msra.mxu0 %v410
      %468 = vmatprep.subr.bf16.mxu0 0
      %469 = vmatpush1.bf16.msra.mxu0 %v411
      %470 = vmatprep.subr.bf16.mxu0 0
      %471 = vmatpush1.bf16.msra.mxu0 %v412
      %472 = vmatprep.subr.bf16.mxu0 0
      %473 = vmatpush1.bf16.msra.mxu0 %v413
      %474 = vmatprep.subr.bf16.mxu0 0
      %475 = vmatpush1.bf16.msra.mxu0 %v414
      %476 = vmatprep.subr.bf16.mxu0 0
      %477 = vmatpush1.bf16.msra.mxu0 %v415
      %478 = vmatprep.subr.bf16.mxu0 0
      %479 = vmatpush1.bf16.msra.mxu0 %v416
      %480 = vmatprep.subr.bf16.mxu0 0
      %481 = vmatpush1.bf16.msra.mxu0 %v417
      %482 = vmatprep.mubr.bf16.mxu0 %v283
      %483 = vmatmul.mubr.bf16.gmra.mrb[0].mxu0 %v282
      %v484 = vpop.f32.mrb[0].mxu0
      %v485 = vadd.f32 0.0, %v484
      %v486 = vpop.f32.mrb[0].mxu0
      %v487 = vpop.f32.mrb[0].mxu0
      %v488 = vadd.f32 0.0, %v487
      %v489 = vpop.f32.mrb[0].mxu0
      %490 = vmatprep.mubr.bf16.mxu0 %v286
      %491 = vmatmul.mubr.bf16.gmra.mrb[0].mxu0 %v285
      %v492 = vpop.f32.mrb[0].mxu0
      %v493 = vadd.f32 0.0, %v492
      %v494 = vpop.f32.mrb[0].mxu0
      %v495 = vpop.f32.mrb[0].mxu0
      %v496 = vadd.f32 0.0, %v495
      %v497 = vpop.f32.mrb[0].mxu0
      %498 = vmatprep.mubr.bf16.mxu0 %v289
      %499 = vmatmul.mubr.bf16.gmra.mrb[0].mxu0 %v288
      %v500 = vpop.f32.mrb[0].mxu0
      %v501 = vadd.f32 0.0, %v500
      %v502 = vpop.f32.mrb[0].mxu0
      %v503 = vpop.f32.mrb[0].mxu0
      %v504 = vadd.f32 0.0, %v503
      %v505 = vpop.f32.mrb[0].mxu0
      %506 = vmatprep.mubr.bf16.mxu0 %v292
      %507 = vmatmul.mubr.bf16.gmra.mrb[0].mxu0 %v291
      %v508 = vpop.f32.mrb[0].mxu0
      %v509 = vadd.f32 0.0, %v508
      %v510 = vpop.f32.mrb[0].mxu0
      %v511 = vpop.f32.mrb[0].mxu0
      %v512 = vadd.f32 0.0, %v511
      %v513 = vpop.f32.mrb[0].mxu0
      %514 = vdwg.mxu0
      %515 = vmatprep.subr.bf16.mxu0 0
      %516 = vmatpush1.bf16.msra.mxu0 %v418
      %517 = vmatprep.subr.bf16.mxu0 0
      %518 = vmatpush1.bf16.msra.mxu0 %v419
      %519 = vmatprep.subr.bf16.mxu0 0
      %520 = vmatpush1.bf16.msra.mxu0 %v420
      %521 = vmatprep.subr.bf16.mxu0 0
      %522 = vmatpush1.bf16.msra.mxu0 %v421
      %523 = vmatprep.subr.bf16.mxu0 0
      %524 = vmatpush1.bf16.msra.mxu0 %v422
      %525 = vmatprep.subr.bf16.mxu0 0
      %526 = vmatpush1.bf16.msra.mxu0 %v423
      %527 = vmatprep.subr.bf16.mxu0 0
      %528 = vmatpush1.bf16.msra.mxu0 %v424
      %529 = vmatprep.subr.bf16.mxu0 0
      %530 = vmatpush1.bf16.msra.mxu0 %v425
      %531 = vmatprep.subr.bf16.mxu0 0
      %532 = vmatpush1.bf16.msra.mxu0 0
      %533 = vmatprep.subr.bf16.mxu0 0
      %534 = vmatpush1.bf16.msra.mxu0 0
      %535 = vmatprep.subr.bf16.mxu0 0
      %536 = vmatpush1.bf16.msra.mxu0 0
      %537 = vmatprep.subr.bf16.mxu0 0
      %538 = vmatpush1.bf16.msra.mxu0 0
      %539 = vmatprep.subr.bf16.mxu0 0
      %540 = vmatpush1.bf16.msra.mxu0 0
      %541 = vmatprep.subr.bf16.mxu0 0
      %542 = vmatpush1.bf16.msra.mxu0 0
      %543 = vmatprep.subr.bf16.mxu0 0
      %544 = vmatpush1.bf16.msra.mxu0 0
      %545 = vmatprep.subr.bf16.mxu0 0
      %546 = vmatpush1.bf16.msra.mxu0 0
      %547 = vmatprep.mubr.bf16.mxu0 0
      %548 = vmatmul.mubr.bf16.gmra.mrb[0].mxu0 %v284
      %v549 = vpop.f32.mrb[0].mxu0
      %v550 = vadd.f32 %v485, %v549
      %v551 = vpop.f32.mrb[0].mxu0
      %v552 = vpop.f32.mrb[0].mxu0
      %v553 = vadd.f32 %v488, %v552
      %v554 = vpop.f32.mrb[0].mxu0
      %555 = vmatprep.mubr.bf16.mxu0 0
      %556 = vmatmul.mubr.bf16.gmra.mrb[0].mxu0 %v287
      %v557 = vpop.f32.mrb[0].mxu0
      %v558 = vadd.f32 %v493, %v557
      %v559 = vpop.f32.mrb[0].mxu0
      %v560 = vpop.f32.mrb[0].mxu0
      %v561 = vadd.f32 %v496, %v560
      %v562 = vpop.f32.mrb[0].mxu0
      %563 = vmatprep.mubr.bf16.mxu0 0
      %564 = vmatmul.mubr.bf16.gmra.mrb[0].mxu0 %v290
      %v565 = vpop.f32.mrb[0].mxu0
      %v566 = vadd.f32 %v501, %v565
      %v567 = vpop.f32.mrb[0].mxu0
      %v568 = vpop.f32.mrb[0].mxu0
      %v569 = vadd.f32 %v504, %v568
      %v570 = vpop.f32.mrb[0].mxu0
      %571 = vmatprep.mubr.bf16.mxu0 0
      %572 = vmatmul.mubr.bf16.gmra.mrb[0].mxu0 %v293
      %v573 = vpop.f32.mrb[0].mxu0
      %v574 = vadd.f32 %v509, %v573
      %v575 = vpop.f32.mrb[0].mxu0
      %v576 = vpop.f32.mrb[0].mxu0
      %v577 = vadd.f32 %v512, %v576
      %v578 = vpop.f32.mrb[0].mxu0
      %579 = vdwg.mxu0
      %v580 = vld [vmem:[%s169 + $0x60] sm:$0xff]
      %v581 = vld [vmem:[%s169 + $0x68] sm:$0xf]
      %v582 = vld [vmem:[%s169 + $0x6c] sm:$0xff]
      %v583 = vld [vmem:[%s169 + $0x74] sm:$0xf]
      %v584 = vld [vmem:[%s169 + $0x78] sm:$0xff]
      %v585 = vld [vmem:[%s169 + $0x80] sm:$0xf]
      %v586 = vld [vmem:[%s169 + $0x84] sm:$0xff]
      %v587 = vld [vmem:[%s169 + $0x8c] sm:$0xf]
      %v588 = vld [vmem:[%s169 + $0x90] sm:$0xff]
      %v589 = vld [vmem:[%s169 + $0x98] sm:$0xf]
      %v590 = vld [vmem:[%s169 + $0x9c] sm:$0xff]
      %v591 = vld [vmem:[%s169 + $0xa4] sm:$0xf]
      %v592 = vld [vmem:[%s169 + $0xa8] sm:$0xff]
      %v593 = vld [vmem:[%s169 + $0xb0] sm:$0xf]
      %v594 = vld [vmem:[%s169 + $0xb4] sm:$0xff]
      %v595 = vld [vmem:[%s169 + $0xbc] sm:$0xf]
      %v612 = vunpack.c.l.b16 %v580
      %v613 = vunpack.c.h.b16 %v580
      %v614 = vunpack.c.l.b16 %v581
      %v615 = vunpack.c.l.b16 %v582
      %v616 = vunpack.c.h.b16 %v582
      %v617 = vunpack.c.l.b16 %v583
      %v618 = vunpack.c.l.b16 %v584
      %v619 = vunpack.c.h.b16 %v584
      %v620 = vunpack.c.l.b16 %v585
      %v621 = vunpack.c.l.b16 %v586
      %v622 = vunpack.c.h.b16 %v586
      %v623 = vunpack.c.l.b16 %v587
      %v624 = vunpack.c.l.b16 %v588
      %v625 = vunpack.c.h.b16 %v588
      %v626 = vunpack.c.l.b16 %v589
      %v627 = vunpack.c.l.b16 %v590
      %v628 = vunpack.c.h.b16 %v590
      %v629 = vunpack.c.l.b16 %v591
      %v630 = vunpack.c.l.b16 %v592
      %v631 = vunpack.c.h.b16 %v592
      %v632 = vunpack.c.l.b16 %v593
      %v633 = vunpack.c.l.b16 %v594
      %v634 = vunpack.c.h.b16 %v594
      %v635 = vunpack.c.l.b16 %v595
      %v636 = vpack.c.b16 %v615, %v612
      %v637 = vpack.c.b16 %v616, %v613
      %v638 = vpack.c.b16 %v617, %v614
      %v639 = vpack.c.b16 %v621, %v618
      %v640 = vpack.c.b16 %v622, %v619
      %v641 = vpack.c.b16 %v623, %v620
      %v642 = vpack.c.b16 %v627, %v624
      %v643 = vpack.c.b16 %v628, %v625
      %v644 = vpack.c.b16 %v629, %v626
      %v645 = vpack.c.b16 %v633, %v630
      %v646 = vpack.c.b16 %v634, %v631
      %v647 = vpack.c.b16 %v635, %v632
      %660 = vmatprep.subr.bf16.mxu0 0
      %661 = vmatpush1.bf16.msra.mxu0 %v402
      %662 = vmatprep.subr.bf16.mxu0 0
      %663 = vmatpush1.bf16.msra.mxu0 %v403
      %664 = vmatprep.subr.bf16.mxu0 0
      %665 = vmatpush1.bf16.msra.mxu0 %v404
      %666 = vmatprep.subr.bf16.mxu0 0
      %667 = vmatpush1.bf16.msra.mxu0 %v405
      %668 = vmatprep.subr.bf16.mxu0 0
      %669 = vmatpush1.bf16.msra.mxu0 %v406
      %670 = vmatprep.subr.bf16.mxu0 0
      %671 = vmatpush1.bf16.msra.mxu0 %v407
      %672 = vmatprep.subr.bf16.mxu0 0
      %673 = vmatpush1.bf16.msra.mxu0 %v408
      %674 = vmatprep.subr.bf16.mxu0 0
      %675 = vmatpush1.bf16.msra.mxu0 %v409
      %676 = vmatprep.subr.bf16.mxu0 0
      %677 = vmatpush1.bf16.msra.mxu0 %v410
      %678 = vmatprep.subr.bf16.mxu0 0
      %679 = vmatpush1.bf16.msra.mxu0 %v411
      %680 = vmatprep.subr.bf16.mxu0 0
      %681 = vmatpush1.bf16.msra.mxu0 %v412
      %682 = vmatprep.subr.bf16.mxu0 0
      %683 = vmatpush1.bf16.msra.mxu0 %v413
      %684 = vmatprep.subr.bf16.mxu0 0
      %685 = vmatpush1.bf16.msra.mxu0 %v414
      %686 = vmatprep.subr.bf16.mxu0 0
      %687 = vmatpush1.bf16.msra.mxu0 %v415
      %688 = vmatprep.subr.bf16.mxu0 0
      %689 = vmatpush1.bf16.msra.mxu0 %v416
      %690 = vmatprep.subr.bf16.mxu0 0
      %691 = vmatpush1.bf16.msra.mxu0 %v417
      %692 = vmatprep.mubr.bf16.mxu0 %v637
      %693 = vmatmul.mubr.bf16.gmra.mrb[0].mxu0 %v636
      %v694 = vpop.f32.mrb[0].mxu0
      %v695 = vadd.f32 0.0, %v694
      %v696 = vpop.f32.mrb[0].mxu0
      %v697 = vpop.f32.mrb[0].mxu0
      %v698 = vadd.f32 0.0, %v697
      %v699 = vpop.f32.mrb[0].mxu0
      %700 = vmatprep.mubr.bf16.mxu0 %v640
      %701 = vmatmul.mubr.bf16.gmra.mrb[0].mxu0 %v639
      %v702 = vpop.f32.mrb[0].mxu0
      %v703 = vadd.f32 0.0, %v702
      %v704 = vpop.f32.mrb[0].mxu0
      %v705 = vpop.f32.mrb[0].mxu0
      %v706 = vadd.f32 0.0, %v705
      %v707 = vpop.f32.mrb[0].mxu0
      %708 = vmatprep.mubr.bf16.mxu0 %v643
      %709 = vmatmul.mubr.bf16.gmra.mrb[0].mxu0 %v642
      %v710 = vpop.f32.mrb[0].mxu0
      %v711 = vadd.f32 0.0, %v710
      %v712 = vpop.f32.mrb[0].mxu0
      %v713 = vpop.f32.mrb[0].mxu0
      %v714 = vadd.f32 0.0, %v713
      %v715 = vpop.f32.mrb[0].mxu0
      %716 = vmatprep.mubr.bf16.mxu0 %v646
      %717 = vmatmul.mubr.bf16.gmra.mrb[0].mxu0 %v645
      %v718 = vpop.f32.mrb[0].mxu0
      %v719 = vadd.f32 0.0, %v718
      %v720 = vpop.f32.mrb[0].mxu0
      %v721 = vpop.f32.mrb[0].mxu0
      %v722 = vadd.f32 0.0, %v721
      %v723 = vpop.f32.mrb[0].mxu0
      %724 = vdwg.mxu0
      %725 = vmatprep.subr.bf16.mxu0 0
      %726 = vmatpush1.bf16.msra.mxu0 %v418
      %727 = vmatprep.subr.bf16.mxu0 0
      %728 = vmatpush1.bf16.msra.mxu0 %v419
      %729 = vmatprep.subr.bf16.mxu0 0
      %730 = vmatpush1.bf16.msra.mxu0 %v420
      %731 = vmatprep.subr.bf16.mxu0 0
      %732 = vmatpush1.bf16.msra.mxu0 %v421
      %733 = vmatprep.subr.bf16.mxu0 0
      %734 = vmatpush1.bf16.msra.mxu0 %v422
      %735 = vmatprep.subr.bf16.mxu0 0
      %736 = vmatpush1.bf16.msra.mxu0 %v423
      %737 = vmatprep.subr.bf16.mxu0 0
      %738 = vmatpush1.bf16.msra.mxu0 %v424
      %739 = vmatprep.subr.bf16.mxu0 0
      %740 = vmatpush1.bf16.msra.mxu0 %v425
      %741 = vmatprep.subr.bf16.mxu0 0
      %742 = vmatpush1.bf16.msra.mxu0 0
      %743 = vmatprep.subr.bf16.mxu0 0
      %744 = vmatpush1.bf16.msra.mxu0 0
      %745 = vmatprep.subr.bf16.mxu0 0
      %746 = vmatpush1.bf16.msra.mxu0 0
      %747 = vmatprep.subr.bf16.mxu0 0
      %748 = vmatpush1.bf16.msra.mxu0 0
      %749 = vmatprep.subr.bf16.mxu0 0
      %750 = vmatpush1.bf16.msra.mxu0 0
      %751 = vmatprep.subr.bf16.mxu0 0
      %752 = vmatpush1.bf16.msra.mxu0 0
      %753 = vmatprep.subr.bf16.mxu0 0
      %754 = vmatpush1.bf16.msra.mxu0 0
      %755 = vmatprep.subr.bf16.mxu0 0
      %756 = vmatpush1.bf16.msra.mxu0 0
      %757 = vmatprep.mubr.bf16.mxu0 0
      %758 = vmatmul.mubr.bf16.gmra.mrb[0].mxu0 %v638
      %v759 = vpop.f32.mrb[0].mxu0
      %v760 = vadd.f32 %v695, %v759
      %v761 = vpop.f32.mrb[0].mxu0
      %v762 = vpop.f32.mrb[0].mxu0
      %v763 = vadd.f32 %v698, %v762
      %v764 = vpop.f32.mrb[0].mxu0
      %765 = vmatprep.mubr.bf16.mxu0 0
      %766 = vmatmul.mubr.bf16.gmra.mrb[0].mxu0 %v641
      %v767 = vpop.f32.mrb[0].mxu0
      %v768 = vadd.f32 %v703, %v767
      %v769 = vpop.f32.mrb[0].mxu0
      %v770 = vpop.f32.mrb[0].mxu0
      %v771 = vadd.f32 %v706, %v770
      %v772 = vpop.f32.mrb[0].mxu0
      %773 = vmatprep.mubr.bf16.mxu0 0
      %774 = vmatmul.mubr.bf16.gmra.mrb[0].mxu0 %v644
      %v775 = vpop.f32.mrb[0].mxu0
      %v776 = vadd.f32 %v711, %v775
      %v777 = vpop.f32.mrb[0].mxu0
      %v778 = vpop.f32.mrb[0].mxu0
      %v779 = vadd.f32 %v714, %v778
      %v780 = vpop.f32.mrb[0].mxu0
      %781 = vmatprep.mubr.bf16.mxu0 0
      %782 = vmatmul.mubr.bf16.gmra.mrb[0].mxu0 %v647
      %v783 = vpop.f32.mrb[0].mxu0
      %v784 = vadd.f32 %v719, %v783
      %v785 = vpop.f32.mrb[0].mxu0
      %v786 = vpop.f32.mrb[0].mxu0
      %v787 = vadd.f32 %v722, %v786
      %v788 = vpop.f32.mrb[0].mxu0
      %789 = vdwg.mxu0
      %v790 = vmax.f32 %v550, %v760
      %v791 = vmax.f32 %v553, %v763
      %v792 = vmax.f32 %v558, %v768
      %v793 = vmax.f32 %v561, %v771
      %v794 = vmax.f32 %v566, %v776
      %v795 = vmax.f32 %v569, %v779
      %v796 = vmax.f32 %v574, %v784
      %v797 = vmax.f32 %v577, %v787
      %v798 = vld [vmem:[%s169 + $0xc0] sm:$0xff]
      %v799 = vld [vmem:[%s169 + $0xc8] sm:$0xf]
      %v800 = vld [vmem:[%s169 + $0xcc] sm:$0xff]
      %v801 = vld [vmem:[%s169 + $0xd4] sm:$0xf]
      %v802 = vld [vmem:[%s169 + $0xd8] sm:$0xff]
      %v803 = vld [vmem:[%s169 + $0xe0] sm:$0xf]
      %v804 = vld [vmem:[%s169 + $0xe4] sm:$0xff]
      %v805 = vld [vmem:[%s169 + $0xec] sm:$0xf]
      %v806 = vld [vmem:[%s169 + $0xf0] sm:$0xff]
      %v807 = vld [vmem:[%s169 + $0xf8] sm:$0xf]
      %v808 = vld [vmem:[%s169 + $0xfc] sm:$0xff]
      %v809 = vld [vmem:[%s169 + $0x104] sm:$0xf]
      %v810 = vld [vmem:[%s169 + $0x108] sm:$0xff]
      %v811 = vld [vmem:[%s169 + $0x110] sm:$0xf]
      %v812 = vld [vmem:[%s169 + $0x114] sm:$0xff]
      %v813 = vld [vmem:[%s169 + $0x11c] sm:$0xf]
      %v830 = vunpack.c.l.b16 %v798
      %v831 = vunpack.c.h.b16 %v798
      %v832 = vunpack.c.l.b16 %v799
      %v833 = vunpack.c.l.b16 %v800
      %v834 = vunpack.c.h.b16 %v800
      %v835 = vunpack.c.l.b16 %v801
      %v836 = vunpack.c.l.b16 %v802
      %v837 = vunpack.c.h.b16 %v802
      %v838 = vunpack.c.l.b16 %v803
      %v839 = vunpack.c.l.b16 %v804
      %v840 = vunpack.c.h.b16 %v804
      %v841 = vunpack.c.l.b16 %v805
      %v842 = vunpack.c.l.b16 %v806
      %v843 = vunpack.c.h.b16 %v806
      %v844 = vunpack.c.l.b16 %v807
      %v845 = vunpack.c.l.b16 %v808
      %v846 = vunpack.c.h.b16 %v808
      %v847 = vunpack.c.l.b16 %v809
      %v848 = vunpack.c.l.b16 %v810
      %v849 = vunpack.c.h.b16 %v810
      %v850 = vunpack.c.l.b16 %v811
      %v851 = vunpack.c.l.b16 %v812
      %v852 = vunpack.c.h.b16 %v812
      %v853 = vunpack.c.l.b16 %v813
      %v854 = vpack.c.b16 %v833, %v830
      %v855 = vpack.c.b16 %v834, %v831
      %v856 = vpack.c.b16 %v835, %v832
      %v857 = vpack.c.b16 %v839, %v836
      %v858 = vpack.c.b16 %v840, %v837
      %v859 = vpack.c.b16 %v841, %v838
      %v860 = vpack.c.b16 %v845, %v842
      %v861 = vpack.c.b16 %v846, %v843
      %v862 = vpack.c.b16 %v847, %v844
      %v863 = vpack.c.b16 %v851, %v848
      %v864 = vpack.c.b16 %v852, %v849
      %v865 = vpack.c.b16 %v853, %v850
      %878 = vmatprep.subr.bf16.mxu0 0
      %879 = vmatpush1.bf16.msra.mxu0 %v402
      %880 = vmatprep.subr.bf16.mxu0 0
      %881 = vmatpush1.bf16.msra.mxu0 %v403
      %882 = vmatprep.subr.bf16.mxu0 0
      %883 = vmatpush1.bf16.msra.mxu0 %v404
      %884 = vmatprep.subr.bf16.mxu0 0
      %885 = vmatpush1.bf16.msra.mxu0 %v405
      %886 = vmatprep.subr.bf16.mxu0 0
      %887 = vmatpush1.bf16.msra.mxu0 %v406
      %888 = vmatprep.subr.bf16.mxu0 0
      %889 = vmatpush1.bf16.msra.mxu0 %v407
      %890 = vmatprep.subr.bf16.mxu0 0
      %891 = vmatpush1.bf16.msra.mxu0 %v408
      %892 = vmatprep.subr.bf16.mxu0 0
      %893 = vmatpush1.bf16.msra.mxu0 %v409
      %894 = vmatprep.subr.bf16.mxu0 0
      %895 = vmatpush1.bf16.msra.mxu0 %v410
      %896 = vmatprep.subr.bf16.mxu0 0
      %897 = vmatpush1.bf16.msra.mxu0 %v411
      %898 = vmatprep.subr.bf16.mxu0 0
      %899 = vmatpush1.bf16.msra.mxu0 %v412
      %900 = vmatprep.subr.bf16.mxu0 0
      %901 = vmatpush1.bf16.msra.mxu0 %v413
      %902 = vmatprep.subr.bf16.mxu0 0
      %903 = vmatpush1.bf16.msra.mxu0 %v414
      %904 = vmatprep.subr.bf16.mxu0 0
      %905 = vmatpush1.bf16.msra.mxu0 %v415
      %906 = vmatprep.subr.bf16.mxu0 0
      %907 = vmatpush1.bf16.msra.mxu0 %v416
      %908 = vmatprep.subr.bf16.mxu0 0
      %909 = vmatpush1.bf16.msra.mxu0 %v417
      %910 = vmatprep.mubr.bf16.mxu0 %v855
      %911 = vmatmul.mubr.bf16.gmra.mrb[0].mxu0 %v854
      %v912 = vpop.f32.mrb[0].mxu0
      %v913 = vadd.f32 0.0, %v912
      %v914 = vpop.f32.mrb[0].mxu0
      %v915 = vpop.f32.mrb[0].mxu0
      %v916 = vadd.f32 0.0, %v915
      %v917 = vpop.f32.mrb[0].mxu0
      %918 = vmatprep.mubr.bf16.mxu0 %v858
      %919 = vmatmul.mubr.bf16.gmra.mrb[0].mxu0 %v857
      %v920 = vpop.f32.mrb[0].mxu0
      %v921 = vadd.f32 0.0, %v920
      %v922 = vpop.f32.mrb[0].mxu0
      %v923 = vpop.f32.mrb[0].mxu0
      %v924 = vadd.f32 0.0, %v923
      %v925 = vpop.f32.mrb[0].mxu0
      %926 = vmatprep.mubr.bf16.mxu0 %v861
      %927 = vmatmul.mubr.bf16.gmra.mrb[0].mxu0 %v860
      %v928 = vpop.f32.mrb[0].mxu0
      %v929 = vadd.f32 0.0, %v928
      %v930 = vpop.f32.mrb[0].mxu0
      %v931 = vpop.f32.mrb[0].mxu0
      %v932 = vadd.f32 0.0, %v931
      %v933 = vpop.f32.mrb[0].mxu0
      %934 = vmatprep.mubr.bf16.mxu0 %v864
      %935 = vmatmul.mubr.bf16.gmra.mrb[0].mxu0 %v863
      %v936 = vpop.f32.mrb[0].mxu0
      %v937 = vadd.f32 0.0, %v936
      %v938 = vpop.f32.mrb[0].mxu0
      %v939 = vpop.f32.mrb[0].mxu0
      %v940 = vadd.f32 0.0, %v939
      %v941 = vpop.f32.mrb[0].mxu0
      %942 = vdwg.mxu0
      %943 = vmatprep.subr.bf16.mxu0 0
      %944 = vmatpush1.bf16.msra.mxu0 %v418
      %945 = vmatprep.subr.bf16.mxu0 0
      %946 = vmatpush1.bf16.msra.mxu0 %v419
      %947 = vmatprep.subr.bf16.mxu0 0
      %948 = vmatpush1.bf16.msra.mxu0 %v420
      %949 = vmatprep.subr.bf16.mxu0 0
      %950 = vmatpush1.bf16.msra.mxu0 %v421
      %951 = vmatprep.subr.bf16.mxu0 0
      %952 = vmatpush1.bf16.msra.mxu0 %v422
      %953 = vmatprep.subr.bf16.mxu0 0
      %954 = vmatpush1.bf16.msra.mxu0 %v423
      %955 = vmatprep.subr.bf16.mxu0 0
      %956 = vmatpush1.bf16.msra.mxu0 %v424
      %957 = vmatprep.subr.bf16.mxu0 0
      %958 = vmatpush1.bf16.msra.mxu0 %v425
      %959 = vmatprep.subr.bf16.mxu0 0
      %960 = vmatpush1.bf16.msra.mxu0 0
      %961 = vmatprep.subr.bf16.mxu0 0
      %962 = vmatpush1.bf16.msra.mxu0 0
      %963 = vmatprep.subr.bf16.mxu0 0
      %964 = vmatpush1.bf16.msra.mxu0 0
      %965 = vmatprep.subr.bf16.mxu0 0
      %966 = vmatpush1.bf16.msra.mxu0 0
      %967 = vmatprep.subr.bf16.mxu0 0
      %968 = vmatpush1.bf16.msra.mxu0 0
      %969 = vmatprep.subr.bf16.mxu0 0
      %970 = vmatpush1.bf16.msra.mxu0 0
      %971 = vmatprep.subr.bf16.mxu0 0
      %972 = vmatpush1.bf16.msra.mxu0 0
      %973 = vmatprep.subr.bf16.mxu0 0
      %974 = vmatpush1.bf16.msra.mxu0 0
      %975 = vmatprep.mubr.bf16.mxu0 0
      %976 = vmatmul.mubr.bf16.gmra.mrb[0].mxu0 %v856
      %v977 = vpop.f32.mrb[0].mxu0
      %v978 = vadd.f32 %v913, %v977
      %v979 = vpop.f32.mrb[0].mxu0
      %v980 = vpop.f32.mrb[0].mxu0
      %v981 = vadd.f32 %v916, %v980
      %v982 = vpop.f32.mrb[0].mxu0
      %983 = vmatprep.mubr.bf16.mxu0 0
      %984 = vmatmul.mubr.bf16.gmra.mrb[0].mxu0 %v859
      %v985 = vpop.f32.mrb[0].mxu0
      %v986 = vadd.f32 %v921, %v985
      %v987 = vpop.f32.mrb[0].mxu0
      %v988 = vpop.f32.mrb[0].mxu0
      %v989 = vadd.f32 %v924, %v988
      %v990 = vpop.f32.mrb[0].mxu0
      %991 = vmatprep.mubr.bf16.mxu0 0
      %992 = vmatmul.mubr.bf16.gmra.mrb[0].mxu0 %v862
      %v993 = vpop.f32.mrb[0].mxu0
      %v994 = vadd.f32 %v929, %v993
      %v995 = vpop.f32.mrb[0].mxu0
      %v996 = vpop.f32.mrb[0].mxu0
      %v997 = vadd.f32 %v932, %v996
      %v998 = vpop.f32.mrb[0].mxu0
      %999 = vmatprep.mubr.bf16.mxu0 0
      %1000 = vmatmul.mubr.bf16.gmra.mrb[0].mxu0 %v865
      %v1001 = vpop.f32.mrb[0].mxu0
      %v1002 = vadd.f32 %v937, %v1001
      %v1003 = vpop.f32.mrb[0].mxu0
      %v1004 = vpop.f32.mrb[0].mxu0
      %v1005 = vadd.f32 %v940, %v1004
      %v1006 = vpop.f32.mrb[0].mxu0
      %1007 = vdwg.mxu0
      %v1008 = vmax.f32 %v790, %v978
      %v1009 = vmax.f32 %v791, %v981
      %v1010 = vmax.f32 %v792, %v986
      %v1011 = vmax.f32 %v793, %v989
      %v1012 = vmax.f32 %v794, %v994
      %v1013 = vmax.f32 %v795, %v997
      %v1014 = vmax.f32 %v796, %v1002
      %v1015 = vmax.f32 %v797, %v1005
      %v1016 = vld [vmem:[%s169 + $0x120] sm:$0xff]
      %v1017 = vld [vmem:[%s169 + $0x128] sm:$0xf]
      %v1018 = vld [vmem:[%s169 + $0x12c] sm:$0xff]
      %v1019 = vld [vmem:[%s169 + $0x134] sm:$0xf]
      %v1020 = vld [vmem:[%s169 + $0x138] sm:$0xff]
      %v1021 = vld [vmem:[%s169 + $0x140] sm:$0xf]
      %v1022 = vld [vmem:[%s169 + $0x144] sm:$0xff]
      %v1023 = vld [vmem:[%s169 + $0x14c] sm:$0xf]
      %v1024 = vld [vmem:[%s169 + $0x150] sm:$0xff]
      %v1025 = vld [vmem:[%s169 + $0x158] sm:$0xf]
      %v1026 = vld [vmem:[%s169 + $0x15c] sm:$0xff]
      %v1027 = vld [vmem:[%s169 + $0x164] sm:$0xf]
      %v1028 = vld [vmem:[%s169 + $0x168] sm:$0xff]
      %v1029 = vld [vmem:[%s169 + $0x170] sm:$0xf]
      %v1030 = vld [vmem:[%s169 + $0x174] sm:$0xff]
      %v1031 = vld [vmem:[%s169 + $0x17c] sm:$0xf]
      %v1048 = vunpack.c.l.b16 %v1016
      %v1049 = vunpack.c.h.b16 %v1016
      %v1050 = vunpack.c.l.b16 %v1017
      %v1051 = vunpack.c.l.b16 %v1018
      %v1052 = vunpack.c.h.b16 %v1018
      %v1053 = vunpack.c.l.b16 %v1019
      %v1054 = vunpack.c.l.b16 %v1020
      %v1055 = vunpack.c.h.b16 %v1020
      %v1056 = vunpack.c.l.b16 %v1021
      %v1057 = vunpack.c.l.b16 %v1022
      %v1058 = vunpack.c.h.b16 %v1022
      %v1059 = vunpack.c.l.b16 %v1023
      %v1060 = vunpack.c.l.b16 %v1024
      %v1061 = vunpack.c.h.b16 %v1024
      %v1062 = vunpack.c.l.b16 %v1025
      %v1063 = vunpack.c.l.b16 %v1026
      %v1064 = vunpack.c.h.b16 %v1026
      %v1065 = vunpack.c.l.b16 %v1027
      %v1066 = vunpack.c.l.b16 %v1028
      %v1067 = vunpack.c.h.b16 %v1028
      %v1068 = vunpack.c.l.b16 %v1029
      %v1069 = vunpack.c.l.b16 %v1030
      %v1070 = vunpack.c.h.b16 %v1030
      %v1071 = vunpack.c.l.b16 %v1031
      %v1072 = vpack.c.b16 %v1051, %v1048
      %v1073 = vpack.c.b16 %v1052, %v1049
      %v1074 = vpack.c.b16 %v1053, %v1050
      %v1075 = vpack.c.b16 %v1057, %v1054
      %v1076 = vpack.c.b16 %v1058, %v1055
      %v1077 = vpack.c.b16 %v1059, %v1056
      %v1078 = vpack.c.b16 %v1063, %v1060
      %v1079 = vpack.c.b16 %v1064, %v1061
      %v1080 = vpack.c.b16 %v1065, %v1062
      %v1081 = vpack.c.b16 %v1069, %v1066
      %v1082 = vpack.c.b16 %v1070, %v1067
      %v1083 = vpack.c.b16 %v1071, %v1068
      %1096 = vmatprep.subr.bf16.mxu0 0
      %1097 = vmatpush1.bf16.msra.mxu0 %v402
      %1098 = vmatprep.subr.bf16.mxu0 0
      %1099 = vmatpush1.bf16.msra.mxu0 %v403
      %1100 = vmatprep.subr.bf16.mxu0 0
      %1101 = vmatpush1.bf16.msra.mxu0 %v404
      %1102 = vmatprep.subr.bf16.mxu0 0
      %1103 = vmatpush1.bf16.msra.mxu0 %v405
      %1104 = vmatprep.subr.bf16.mxu0 0
      %1105 = vmatpush1.bf16.msra.mxu0 %v406
      %1106 = vmatprep.subr.bf16.mxu0 0
      %1107 = vmatpush1.bf16.msra.mxu0 %v407
      %1108 = vmatprep.subr.bf16.mxu0 0
      %1109 = vmatpush1.bf16.msra.mxu0 %v408
      %1110 = vmatprep.subr.bf16.mxu0 0
      %1111 = vmatpush1.bf16.msra.mxu0 %v409
      %1112 = vmatprep.subr.bf16.mxu0 0
      %1113 = vmatpush1.bf16.msra.mxu0 %v410
      %1114 = vmatprep.subr.bf16.mxu0 0
      %1115 = vmatpush1.bf16.msra.mxu0 %v411
      %1116 = vmatprep.subr.bf16.mxu0 0
      %1117 = vmatpush1.bf16.msra.mxu0 %v412
      %1118 = vmatprep.subr.bf16.mxu0 0
      %1119 = vmatpush1.bf16.msra.mxu0 %v413
      %1120 = vmatprep.subr.bf16.mxu0 0
      %1121 = vmatpush1.bf16.msra.mxu0 %v414
      %1122 = vmatprep.subr.bf16.mxu0 0
      %1123 = vmatpush1.bf16.msra.mxu0 %v415
      %1124 = vmatprep.subr.bf16.mxu0 0
      %1125 = vmatpush1.bf16.msra.mxu0 %v416
      %1126 = vmatprep.subr.bf16.mxu0 0
      %1127 = vmatpush1.bf16.msra.mxu0 %v417
      %1128 = vmatprep.mubr.bf16.mxu0 %v1073
      %1129 = vmatmul.mubr.bf16.gmra.mrb[0].mxu0 %v1072
      %v1130 = vpop.f32.mrb[0].mxu0
      %v1131 = vadd.f32 0.0, %v1130
      %v1132 = vpop.f32.mrb[0].mxu0
      %v1133 = vpop.f32.mrb[0].mxu0
      %v1134 = vadd.f32 0.0, %v1133
      %v1135 = vpop.f32.mrb[0].mxu0
      %1136 = vmatprep.mubr.bf16.mxu0 %v1076
      %1137 = vmatmul.mubr.bf16.gmra.mrb[0].mxu0 %v1075
      %v1138 = vpop.f32.mrb[0].mxu0
      %v1139 = vadd.f32 0.0, %v1138
      %v1140 = vpop.f32.mrb[0].mxu0
      %v1141 = vpop.f32.mrb[0].mxu0
      %v1142 = vadd.f32 0.0, %v1141
      %v1143 = vpop.f32.mrb[0].mxu0
      %1144 = vmatprep.mubr.bf16.mxu0 %v1079
      %1145 = vmatmul.mubr.bf16.gmra.mrb[0].mxu0 %v1078
      %v1146 = vpop.f32.mrb[0].mxu0
      %v1147 = vadd.f32 0.0, %v1146
      %v1148 = vpop.f32.mrb[0].mxu0
      %v1149 = vpop.f32.mrb[0].mxu0
      %v1150 = vadd.f32 0.0, %v1149
      %v1151 = vpop.f32.mrb[0].mxu0
      %1152 = vmatprep.mubr.bf16.mxu0 %v1082
      %1153 = vmatmul.mubr.bf16.gmra.mrb[0].mxu0 %v1081
      %v1154 = vpop.f32.mrb[0].mxu0
      %v1155 = vadd.f32 0.0, %v1154
      %v1156 = vpop.f32.mrb[0].mxu0
      %v1157 = vpop.f32.mrb[0].mxu0
      %v1158 = vadd.f32 0.0, %v1157
      %v1159 = vpop.f32.mrb[0].mxu0
      %1160 = vdwg.mxu0
      %1161 = vmatprep.subr.bf16.mxu0 0
      %1162 = vmatpush1.bf16.msra.mxu0 %v418
      %1163 = vmatprep.subr.bf16.mxu0 0
      %1164 = vmatpush1.bf16.msra.mxu0 %v419
      %1165 = vmatprep.subr.bf16.mxu0 0
      %1166 = vmatpush1.bf16.msra.mxu0 %v420
      %1167 = vmatprep.subr.bf16.mxu0 0
      %1168 = vmatpush1.bf16.msra.mxu0 %v421
      %1169 = vmatprep.subr.bf16.mxu0 0
      %1170 = vmatpush1.bf16.msra.mxu0 %v422
      %1171 = vmatprep.subr.bf16.mxu0 0
      %1172 = vmatpush1.bf16.msra.mxu0 %v423
      %1173 = vmatprep.subr.bf16.mxu0 0
      %1174 = vmatpush1.bf16.msra.mxu0 %v424
      %1175 = vmatprep.subr.bf16.mxu0 0
      %1176 = vmatpush1.bf16.msra.mxu0 %v425
      %1177 = vmatprep.subr.bf16.mxu0 0
      %1178 = vmatpush1.bf16.msra.mxu0 0
      %1179 = vmatprep.subr.bf16.mxu0 0
      %1180 = vmatpush1.bf16.msra.mxu0 0
      %1181 = vmatprep.subr.bf16.mxu0 0
      %1182 = vmatpush1.bf16.msra.mxu0 0
      %1183 = vmatprep.subr.bf16.mxu0 0
      %1184 = vmatpush1.bf16.msra.mxu0 0
      %1185 = vmatprep.subr.bf16.mxu0 0
      %1186 = vmatpush1.bf16.msra.mxu0 0
      %1187 = vmatprep.subr.bf16.mxu0 0
      %1188 = vmatpush1.bf16.msra.mxu0 0
      %1189 = vmatprep.subr.bf16.mxu0 0
      %1190 = vmatpush1.bf16.msra.mxu0 0
      %1191 = vmatprep.subr.bf16.mxu0 0
      %1192 = vmatpush1.bf16.msra.mxu0 0
      %1193 = vmatprep.mubr.bf16.mxu0 0
      %1194 = vmatmul.mubr.bf16.gmra.mrb[0].mxu0 %v1074
      %v1195 = vpop.f32.mrb[0].mxu0
      %v1196 = vadd.f32 %v1131, %v1195
      %v1197 = vpop.f32.mrb[0].mxu0
      %v1198 = vpop.f32.mrb[0].mxu0
      %v1199 = vadd.f32 %v1134, %v1198
      %v1200 = vpop.f32.mrb[0].mxu0
      %1201 = vmatprep.mubr.bf16.mxu0 0
      %1202 = vmatmul.mubr.bf16.gmra.mrb[0].mxu0 %v1077
      %v1203 = vpop.f32.mrb[0].mxu0
      %v1204 = vadd.f32 %v1139, %v1203
      %v1205 = vpop.f32.mrb[0].mxu0
      %v1206 = vpop.f32.mrb[0].mxu0
      %v1207 = vadd.f32 %v1142, %v1206
      %v1208 = vpop.f32.mrb[0].mxu0
      %1209 = vmatprep.mubr.bf16.mxu0 0
      %1210 = vmatmul.mubr.bf16.gmra.mrb[0].mxu0 %v1080
      %v1211 = vpop.f32.mrb[0].mxu0
      %v1212 = vadd.f32 %v1147, %v1211
      %v1213 = vpop.f32.mrb[0].mxu0
      %v1214 = vpop.f32.mrb[0].mxu0
      %v1215 = vadd.f32 %v1150, %v1214
      %v1216 = vpop.f32.mrb[0].mxu0
      %1217 = vmatprep.mubr.bf16.mxu0 0
      %1218 = vmatmul.mubr.bf16.gmra.mrb[0].mxu0 %v1083
      %v1219 = vpop.f32.mrb[0].mxu0
      %v1220 = vadd.f32 %v1155, %v1219
      %v1221 = vpop.f32.mrb[0].mxu0
      %v1222 = vpop.f32.mrb[0].mxu0
      %v1223 = vadd.f32 %v1158, %v1222
      %v1224 = vpop.f32.mrb[0].mxu0
      %1225 = vdwg.mxu0
      %v1226 = vmax.f32 %v1008, %v1196
      %v1227 = vmax.f32 %v1009, %v1199
      %v1228 = vmax.f32 %v1010, %v1204
      %v1229 = vmax.f32 %v1011, %v1207
      %v1230 = vmax.f32 %v1012, %v1212
      %v1231 = vmax.f32 %v1013, %v1215
      %v1232 = vmax.f32 %v1014, %v1220
      %v1233 = vmax.f32 %v1015, %v1223
      %v1234 = vld [vmem:[%s169 + $0x180] sm:$0xff]
      %v1235 = vld [vmem:[%s169 + $0x188] sm:$0xf]
      %v1236 = vld [vmem:[%s169 + $0x18c] sm:$0xff]
      %v1237 = vld [vmem:[%s169 + $0x194] sm:$0xf]
      %v1238 = vld [vmem:[%s169 + $0x198] sm:$0xff]
      %v1239 = vld [vmem:[%s169 + $0x1a0] sm:$0xf]
      %v1240 = vld [vmem:[%s169 + $0x1a4] sm:$0xff]
      %v1241 = vld [vmem:[%s169 + $0x1ac] sm:$0xf]
      %v1242 = vld [vmem:[%s169 + $0x1b0] sm:$0xff]
      %v1243 = vld [vmem:[%s169 + $0x1b8] sm:$0xf]
      %v1244 = vld [vmem:[%s169 + $0x1bc] sm:$0xff]
      %v1245 = vld [vmem:[%s169 + $0x1c4] sm:$0xf]
      %v1246 = vld [vmem:[%s169 + $0x1c8] sm:$0xff]
      %v1247 = vld [vmem:[%s169 + $0x1d0] sm:$0xf]
      %v1248 = vld [vmem:[%s169 + $0x1d4] sm:$0xff]
      %v1249 = vld [vmem:[%s169 + $0x1dc] sm:$0xf]
      %v1266 = vunpack.c.l.b16 %v1234
      %v1267 = vunpack.c.h.b16 %v1234
      %v1268 = vunpack.c.l.b16 %v1235
      %v1269 = vunpack.c.l.b16 %v1236
      %v1270 = vunpack.c.h.b16 %v1236
      %v1271 = vunpack.c.l.b16 %v1237
      %v1272 = vunpack.c.l.b16 %v1238
      %v1273 = vunpack.c.h.b16 %v1238
      %v1274 = vunpack.c.l.b16 %v1239
      %v1275 = vunpack.c.l.b16 %v1240
      %v1276 = vunpack.c.h.b16 %v1240
      %v1277 = vunpack.c.l.b16 %v1241
      %v1278 = vunpack.c.l.b16 %v1242
      %v1279 = vunpack.c.h.b16 %v1242
      %v1280 = vunpack.c.l.b16 %v1243
      %v1281 = vunpack.c.l.b16 %v1244
      %v1282 = vunpack.c.h.b16 %v1244
      %v1283 = vunpack.c.l.b16 %v1245
      %v1284 = vunpack.c.l.b16 %v1246
      %v1285 = vunpack.c.h.b16 %v1246
      %v1286 = vunpack.c.l.b16 %v1247
      %v1287 = vunpack.c.l.b16 %v1248
      %v1288 = vunpack.c.h.b16 %v1248
      %v1289 = vunpack.c.l.b16 %v1249
      %v1290 = vpack.c.b16 %v1269, %v1266
      %v1291 = vpack.c.b16 %v1270, %v1267
      %v1292 = vpack.c.b16 %v1271, %v1268
      %v1293 = vpack.c.b16 %v1275, %v1272
      %v1294 = vpack.c.b16 %v1276, %v1273
      %v1295 = vpack.c.b16 %v1277, %v1274
      %v1296 = vpack.c.b16 %v1281, %v1278
      %v1297 = vpack.c.b16 %v1282, %v1279
      %v1298 = vpack.c.b16 %v1283, %v1280
      %v1299 = vpack.c.b16 %v1287, %v1284
      %v1300 = vpack.c.b16 %v1288, %v1285
      %v1301 = vpack.c.b16 %v1289, %v1286
      %1314 = vmatprep.subr.bf16.mxu0 0
      %1315 = vmatpush1.bf16.msra.mxu0 %v402
      %1316 = vmatprep.subr.bf16.mxu0 0
      %1317 = vmatpush1.bf16.msra.mxu0 %v403
      %1318 = vmatprep.subr.bf16.mxu0 0
      %1319 = vmatpush1.bf16.msra.mxu0 %v404
      %1320 = vmatprep.subr.bf16.mxu0 0
      %1321 = vmatpush1.bf16.msra.mxu0 %v405
      %1322 = vmatprep.subr.bf16.mxu0 0
      %1323 = vmatpush1.bf16.msra.mxu0 %v406
      %1324 = vmatprep.subr.bf16.mxu0 0
      %1325 = vmatpush1.bf16.msra.mxu0 %v407
      %1326 = vmatprep.subr.bf16.mxu0 0
      %1327 = vmatpush1.bf16.msra.mxu0 %v408
      %1328 = vmatprep.subr.bf16.mxu0 0
      %1329 = vmatpush1.bf16.msra.mxu0 %v409
      %1330 = vmatprep.subr.bf16.mxu0 0
      %1331 = vmatpush1.bf16.msra.mxu0 %v410
      %1332 = vmatprep.subr.bf16.mxu0 0
      %1333 = vmatpush1.bf16.msra.mxu0 %v411
      %1334 = vmatprep.subr.bf16.mxu0 0
      %1335 = vmatpush1.bf16.msra.mxu0 %v412
      %1336 = vmatprep.subr.bf16.mxu0 0
      %1337 = vmatpush1.bf16.msra.mxu0 %v413
      %1338 = vmatprep.subr.bf16.mxu0 0
      %1339 = vmatpush1.bf16.msra.mxu0 %v414
      %1340 = vmatprep.subr.bf16.mxu0 0
      %1341 = vmatpush1.bf16.msra.mxu0 %v415
      %1342 = vmatprep.subr.bf16.mxu0 0
      %1343 = vmatpush1.bf16.msra.mxu0 %v416
      %1344 = vmatprep.subr.bf16.mxu0 0
      %1345 = vmatpush1.bf16.msra.mxu0 %v417
      %1346 = vmatprep.mubr.bf16.mxu0 %v1291
      %1347 = vmatmul.mubr.bf16.gmra.mrb[0].mxu0 %v1290
      %v1348 = vpop.f32.mrb[0].mxu0
      %v1349 = vadd.f32 0.0, %v1348
      %v1350 = vpop.f32.mrb[0].mxu0
      %v1351 = vpop.f32.mrb[0].mxu0
      %v1352 = vadd.f32 0.0, %v1351
      %v1353 = vpop.f32.mrb[0].mxu0
      %1354 = vmatprep.mubr.bf16.mxu0 %v1294
      %1355 = vmatmul.mubr.bf16.gmra.mrb[0].mxu0 %v1293
      %v1356 = vpop.f32.mrb[0].mxu0
      %v1357 = vadd.f32 0.0, %v1356
      %v1358 = vpop.f32.mrb[0].mxu0
      %v1359 = vpop.f32.mrb[0].mxu0
      %v1360 = vadd.f32 0.0, %v1359
      %v1361 = vpop.f32.mrb[0].mxu0
      %1362 = vmatprep.mubr.bf16.mxu0 %v1297
      %1363 = vmatmul.mubr.bf16.gmra.mrb[0].mxu0 %v1296
      %v1364 = vpop.f32.mrb[0].mxu0
      %v1365 = vadd.f32 0.0, %v1364
      %v1366 = vpop.f32.mrb[0].mxu0
      %v1367 = vpop.f32.mrb[0].mxu0
      %v1368 = vadd.f32 0.0, %v1367
      %v1369 = vpop.f32.mrb[0].mxu0
      %1370 = vmatprep.mubr.bf16.mxu0 %v1300
      %1371 = vmatmul.mubr.bf16.gmra.mrb[0].mxu0 %v1299
      %v1372 = vpop.f32.mrb[0].mxu0
      %v1373 = vadd.f32 0.0, %v1372
      %v1374 = vpop.f32.mrb[0].mxu0
      %v1375 = vpop.f32.mrb[0].mxu0
      %v1376 = vadd.f32 0.0, %v1375
      %v1377 = vpop.f32.mrb[0].mxu0
      %1378 = vdwg.mxu0
      %1379 = vmatprep.subr.bf16.mxu0 0
      %1380 = vmatpush1.bf16.msra.mxu0 %v418
      %1381 = vmatprep.subr.bf16.mxu0 0
      %1382 = vmatpush1.bf16.msra.mxu0 %v419
      %1383 = vmatprep.subr.bf16.mxu0 0
      %1384 = vmatpush1.bf16.msra.mxu0 %v420
      %1385 = vmatprep.subr.bf16.mxu0 0
      %1386 = vmatpush1.bf16.msra.mxu0 %v421
      %1387 = vmatprep.subr.bf16.mxu0 0
      %1388 = vmatpush1.bf16.msra.mxu0 %v422
      %1389 = vmatprep.subr.bf16.mxu0 0
      %1390 = vmatpush1.bf16.msra.mxu0 %v423
      %1391 = vmatprep.subr.bf16.mxu0 0
      %1392 = vmatpush1.bf16.msra.mxu0 %v424
      %1393 = vmatprep.subr.bf16.mxu0 0
      %1394 = vmatpush1.bf16.msra.mxu0 %v425
      %1395 = vmatprep.subr.bf16.mxu0 0
      %1396 = vmatpush1.bf16.msra.mxu0 0
      %1397 = vmatprep.subr.bf16.mxu0 0
      %1398 = vmatpush1.bf16.msra.mxu0 0
      %1399 = vmatprep.subr.bf16.mxu0 0
      %1400 = vmatpush1.bf16.msra.mxu0 0
      %1401 = vmatprep.subr.bf16.mxu0 0
      %1402 = vmatpush1.bf16.msra.mxu0 0
      %1403 = vmatprep.subr.bf16.mxu0 0
      %1404 = vmatpush1.bf16.msra.mxu0 0
      %1405 = vmatprep.subr.bf16.mxu0 0
      %1406 = vmatpush1.bf16.msra.mxu0 0
      %1407 = vmatprep.subr.bf16.mxu0 0
      %1408 = vmatpush1.bf16.msra.mxu0 0
      %1409 = vmatprep.subr.bf16.mxu0 0
      %1410 = vmatpush1.bf16.msra.mxu0 0
      %1411 = vmatprep.mubr.bf16.mxu0 0
      %1412 = vmatmul.mubr.bf16.gmra.mrb[0].mxu0 %v1292
      %v1413 = vpop.f32.mrb[0].mxu0
      %v1414 = vadd.f32 %v1349, %v1413
      %v1415 = vpop.f32.mrb[0].mxu0
      %v1416 = vpop.f32.mrb[0].mxu0
      %v1417 = vadd.f32 %v1352, %v1416
      %v1418 = vpop.f32.mrb[0].mxu0
      %1419 = vmatprep.mubr.bf16.mxu0 0
      %1420 = vmatmul.mubr.bf16.gmra.mrb[0].mxu0 %v1295
      %v1421 = vpop.f32.mrb[0].mxu0
      %v1422 = vadd.f32 %v1357, %v1421
      %v1423 = vpop.f32.mrb[0].mxu0
      %v1424 = vpop.f32.mrb[0].mxu0
      %v1425 = vadd.f32 %v1360, %v1424
      %v1426 = vpop.f32.mrb[0].mxu0
      %1427 = vmatprep.mubr.bf16.mxu0 0
      %1428 = vmatmul.mubr.bf16.gmra.mrb[0].mxu0 %v1298
      %v1429 = vpop.f32.mrb[0].mxu0
      %v1430 = vadd.f32 %v1365, %v1429
      %v1431 = vpop.f32.mrb[0].mxu0
      %v1432 = vpop.f32.mrb[0].mxu0
      %v1433 = vadd.f32 %v1368, %v1432
      %v1434 = vpop.f32.mrb[0].mxu0
      %1435 = vmatprep.mubr.bf16.mxu0 0
      %1436 = vmatmul.mubr.bf16.gmra.mrb[0].mxu0 %v1301
      %v1437 = vpop.f32.mrb[0].mxu0
      %v1438 = vadd.f32 %v1373, %v1437
      %v1439 = vpop.f32.mrb[0].mxu0
      %v1440 = vpop.f32.mrb[0].mxu0
      %v1441 = vadd.f32 %v1376, %v1440
      %v1442 = vpop.f32.mrb[0].mxu0
      %1443 = vdwg.mxu0
      %v1444 = vmax.f32 %v1226, %v1414
      %v1445 = vmax.f32 %v1227, %v1417
      %v1446 = vmax.f32 %v1228, %v1422
      %v1447 = vmax.f32 %v1229, %v1425
      %v1448 = vmax.f32 %v1230, %v1430
      %v1449 = vmax.f32 %v1231, %v1433
      %v1450 = vmax.f32 %v1232, %v1438
      %v1451 = vmax.f32 %v1233, %v1441
      %v1452 = vld [vmem:[%s169 + $0x1e0] sm:$0xff]
      %v1453 = vld [vmem:[%s169 + $0x1e8] sm:$0xf]
      %v1454 = vld [vmem:[%s169 + $0x1ec] sm:$0xff]
      %v1455 = vld [vmem:[%s169 + $0x1f4] sm:$0xf]
      %v1456 = vld [vmem:[%s169 + $0x1f8] sm:$0xff]
      %v1457 = vld [vmem:[%s169 + $0x200] sm:$0xf]
      %v1458 = vld [vmem:[%s169 + $0x204] sm:$0xff]
      %v1459 = vld [vmem:[%s169 + $0x20c] sm:$0xf]
      %v1460 = vld [vmem:[%s169 + $0x210] sm:$0xff]
      %v1461 = vld [vmem:[%s169 + $0x218] sm:$0xf]
      %v1462 = vld [vmem:[%s169 + $0x21c] sm:$0xff]
      %v1463 = vld [vmem:[%s169 + $0x224] sm:$0xf]
      %v1464 = vld [vmem:[%s169 + $0x228] sm:$0xff]
      %v1465 = vld [vmem:[%s169 + $0x230] sm:$0xf]
      %v1466 = vld [vmem:[%s169 + $0x234] sm:$0xff]
      %v1467 = vld [vmem:[%s169 + $0x23c] sm:$0xf]
      %v1484 = vunpack.c.l.b16 %v1452
      %v1485 = vunpack.c.h.b16 %v1452
      %v1486 = vunpack.c.l.b16 %v1453
      %v1487 = vunpack.c.l.b16 %v1454
      %v1488 = vunpack.c.h.b16 %v1454
      %v1489 = vunpack.c.l.b16 %v1455
      %v1490 = vunpack.c.l.b16 %v1456
      %v1491 = vunpack.c.h.b16 %v1456
      %v1492 = vunpack.c.l.b16 %v1457
      %v1493 = vunpack.c.l.b16 %v1458
      %v1494 = vunpack.c.h.b16 %v1458
      %v1495 = vunpack.c.l.b16 %v1459
      %v1496 = vunpack.c.l.b16 %v1460
      %v1497 = vunpack.c.h.b16 %v1460
      %v1498 = vunpack.c.l.b16 %v1461
      %v1499 = vunpack.c.l.b16 %v1462
      %v1500 = vunpack.c.h.b16 %v1462
      %v1501 = vunpack.c.l.b16 %v1463
      %v1502 = vunpack.c.l.b16 %v1464
      %v1503 = vunpack.c.h.b16 %v1464
      %v1504 = vunpack.c.l.b16 %v1465
      %v1505 = vunpack.c.l.b16 %v1466
      %v1506 = vunpack.c.h.b16 %v1466
      %v1507 = vunpack.c.l.b16 %v1467
      %v1508 = vpack.c.b16 %v1487, %v1484
      %v1509 = vpack.c.b16 %v1488, %v1485
      %v1510 = vpack.c.b16 %v1489, %v1486
      %v1511 = vpack.c.b16 %v1493, %v1490
      %v1512 = vpack.c.b16 %v1494, %v1491
      %v1513 = vpack.c.b16 %v1495, %v1492
      %v1514 = vpack.c.b16 %v1499, %v1496
      %v1515 = vpack.c.b16 %v1500, %v1497
      %v1516 = vpack.c.b16 %v1501, %v1498
      %v1517 = vpack.c.b16 %v1505, %v1502
      %v1518 = vpack.c.b16 %v1506, %v1503
      %v1519 = vpack.c.b16 %v1507, %v1504
      %1532 = vmatprep.subr.bf16.mxu0 0
      %1533 = vmatpush1.bf16.msra.mxu0 %v402
      %1534 = vmatprep.subr.bf16.mxu0 0
      %1535 = vmatpush1.bf16.msra.mxu0 %v403
      %1536 = vmatprep.subr.bf16.mxu0 0
      %1537 = vmatpush1.bf16.msra.mxu0 %v404
      %1538 = vmatprep.subr.bf16.mxu0 0
      %1539 = vmatpush1.bf16.msra.mxu0 %v405
      %1540 = vmatprep.subr.bf16.mxu0 0
      %1541 = vmatpush1.bf16.msra.mxu0 %v406
      %1542 = vmatprep.subr.bf16.mxu0 0
      %1543 = vmatpush1.bf16.msra.mxu0 %v407
      %1544 = vmatprep.subr.bf16.mxu0 0
      %1545 = vmatpush1.bf16.msra.mxu0 %v408
      %1546 = vmatprep.subr.bf16.mxu0 0
      %1547 = vmatpush1.bf16.msra.mxu0 %v409
      %1548 = vmatprep.subr.bf16.mxu0 0
      %1549 = vmatpush1.bf16.msra.mxu0 %v410
      %1550 = vmatprep.subr.bf16.mxu0 0
      %1551 = vmatpush1.bf16.msra.mxu0 %v411
      %1552 = vmatprep.subr.bf16.mxu0 0
      %1553 = vmatpush1.bf16.msra.mxu0 %v412
      %1554 = vmatprep.subr.bf16.mxu0 0
      %1555 = vmatpush1.bf16.msra.mxu0 %v413
      %1556 = vmatprep.subr.bf16.mxu0 0
      %1557 = vmatpush1.bf16.msra.mxu0 %v414
      %1558 = vmatprep.subr.bf16.mxu0 0
      %1559 = vmatpush1.bf16.msra.mxu0 %v415
      %1560 = vmatprep.subr.bf16.mxu0 0
      %1561 = vmatpush1.bf16.msra.mxu0 %v416
      %1562 = vmatprep.subr.bf16.mxu0 0
      %1563 = vmatpush1.bf16.msra.mxu0 %v417
      %1564 = vmatprep.mubr.bf16.mxu0 %v1509
      %1565 = vmatmul.mubr.bf16.gmra.mrb[0].mxu0 %v1508
      %v1566 = vpop.f32.mrb[0].mxu0
      %v1567 = vadd.f32 0.0, %v1566
      %v1568 = vpop.f32.mrb[0].mxu0
      %v1569 = vpop.f32.mrb[0].mxu0
      %v1570 = vadd.f32 0.0, %v1569
      %v1571 = vpop.f32.mrb[0].mxu0
      %1572 = vmatprep.mubr.bf16.mxu0 %v1512
      %1573 = vmatmul.mubr.bf16.gmra.mrb[0].mxu0 %v1511
      %v1574 = vpop.f32.mrb[0].mxu0
      %v1575 = vadd.f32 0.0, %v1574
      %v1576 = vpop.f32.mrb[0].mxu0
      %v1577 = vpop.f32.mrb[0].mxu0
      %v1578 = vadd.f32 0.0, %v1577
      %v1579 = vpop.f32.mrb[0].mxu0
      %1580 = vmatprep.mubr.bf16.mxu0 %v1515
      %1581 = vmatmul.mubr.bf16.gmra.mrb[0].mxu0 %v1514
      %v1582 = vpop.f32.mrb[0].mxu0
      %v1583 = vadd.f32 0.0, %v1582
      %v1584 = vpop.f32.mrb[0].mxu0
      %v1585 = vpop.f32.mrb[0].mxu0
      %v1586 = vadd.f32 0.0, %v1585
      %v1587 = vpop.f32.mrb[0].mxu0
      %1588 = vmatprep.mubr.bf16.mxu0 %v1518
      %1589 = vmatmul.mubr.bf16.gmra.mrb[0].mxu0 %v1517
      %v1590 = vpop.f32.mrb[0].mxu0
      %v1591 = vadd.f32 0.0, %v1590
      %v1592 = vpop.f32.mrb[0].mxu0
      %v1593 = vpop.f32.mrb[0].mxu0
      %v1594 = vadd.f32 0.0, %v1593
      %v1595 = vpop.f32.mrb[0].mxu0
      %1596 = vdwg.mxu0
      %1597 = vmatprep.subr.bf16.mxu0 0
      %1598 = vmatpush1.bf16.msra.mxu0 %v418
      %1599 = vmatprep.subr.bf16.mxu0 0
      %1600 = vmatpush1.bf16.msra.mxu0 %v419
      %1601 = vmatprep.subr.bf16.mxu0 0
      %1602 = vmatpush1.bf16.msra.mxu0 %v420
      %1603 = vmatprep.subr.bf16.mxu0 0
      %1604 = vmatpush1.bf16.msra.mxu0 %v421
      %1605 = vmatprep.subr.bf16.mxu0 0
      %1606 = vmatpush1.bf16.msra.mxu0 %v422
      %1607 = vmatprep.subr.bf16.mxu0 0
      %1608 = vmatpush1.bf16.msra.mxu0 %v423
      %1609 = vmatprep.subr.bf16.mxu0 0
      %1610 = vmatpush1.bf16.msra.mxu0 %v424
      %1611 = vmatprep.subr.bf16.mxu0 0
      %1612 = vmatpush1.bf16.msra.mxu0 %v425
      %1613 = vmatprep.subr.bf16.mxu0 0
      %1614 = vmatpush1.bf16.msra.mxu0 0
      %1615 = vmatprep.subr.bf16.mxu0 0
      %1616 = vmatpush1.bf16.msra.mxu0 0
      %1617 = vmatprep.subr.bf16.mxu0 0
      %1618 = vmatpush1.bf16.msra.mxu0 0
      %1619 = vmatprep.subr.bf16.mxu0 0
      %1620 = vmatpush1.bf16.msra.mxu0 0
      %1621 = vmatprep.subr.bf16.mxu0 0
      %1622 = vmatpush1.bf16.msra.mxu0 0
      %1623 = vmatprep.subr.bf16.mxu0 0
      %1624 = vmatpush1.bf16.msra.mxu0 0
      %1625 = vmatprep.subr.bf16.mxu0 0
      %1626 = vmatpush1.bf16.msra.mxu0 0
      %1627 = vmatprep.subr.bf16.mxu0 0
      %1628 = vmatpush1.bf16.msra.mxu0 0
      %1629 = vmatprep.mubr.bf16.mxu0 0
      %1630 = vmatmul.mubr.bf16.gmra.mrb[0].mxu0 %v1510
      %v1631 = vpop.f32.mrb[0].mxu0
      %v1632 = vadd.f32 %v1567, %v1631
      %v1633 = vpop.f32.mrb[0].mxu0
      %v1634 = vpop.f32.mrb[0].mxu0
      %v1635 = vadd.f32 %v1570, %v1634
      %v1636 = vpop.f32.mrb[0].mxu0
      %1637 = vmatprep.mubr.bf16.mxu0 0
      %1638 = vmatmul.mubr.bf16.gmra.mrb[0].mxu0 %v1513
      %v1639 = vpop.f32.mrb[0].mxu0
      %v1640 = vadd.f32 %v1575, %v1639
      %v1641 = vpop.f32.mrb[0].mxu0
      %v1642 = vpop.f32.mrb[0].mxu0
      %v1643 = vadd.f32 %v1578, %v1642
      %v1644 = vpop.f32.mrb[0].mxu0
      %1645 = vmatprep.mubr.bf16.mxu0 0
      %1646 = vmatmul.mubr.bf16.gmra.mrb[0].mxu0 %v1516
      %v1647 = vpop.f32.mrb[0].mxu0
      %v1648 = vadd.f32 %v1583, %v1647
      %v1649 = vpop.f32.mrb[0].mxu0
      %v1650 = vpop.f32.mrb[0].mxu0
      %v1651 = vadd.f32 %v1586, %v1650
      %v1652 = vpop.f32.mrb[0].mxu0
      %1653 = vmatprep.mubr.bf16.mxu0 0
      %1654 = vmatmul.mubr.bf16.gmra.mrb[0].mxu0 %v1519
      %v1655 = vpop.f32.mrb[0].mxu0
      %v1656 = vadd.f32 %v1591, %v1655
      %v1657 = vpop.f32.mrb[0].mxu0
      %v1658 = vpop.f32.mrb[0].mxu0
      %v1659 = vadd.f32 %v1594, %v1658
      %v1660 = vpop.f32.mrb[0].mxu0
      %1661 = vdwg.mxu0
      %v1662 = vmax.f32 %v1444, %v1632
      %v1663 = vmax.f32 %v1445, %v1635
      %v1664 = vmax.f32 %v1446, %v1640
      %v1665 = vmax.f32 %v1447, %v1643
      %v1666 = vmax.f32 %v1448, %v1648
      %v1667 = vmax.f32 %v1449, %v1651
      %v1668 = vmax.f32 %v1450, %v1656
      %v1669 = vmax.f32 %v1451, %v1659
      %v1670 = vld [vmem:[%s169 + $0x240] sm:$0xff]
      %v1671 = vld [vmem:[%s169 + $0x248] sm:$0xf]
      %v1672 = vld [vmem:[%s169 + $0x24c] sm:$0xff]
      %v1673 = vld [vmem:[%s169 + $0x254] sm:$0xf]
      %v1674 = vld [vmem:[%s169 + $0x258] sm:$0xff]
      %v1675 = vld [vmem:[%s169 + $0x260] sm:$0xf]
      %v1676 = vld [vmem:[%s169 + $0x264] sm:$0xff]
      %v1677 = vld [vmem:[%s169 + $0x26c] sm:$0xf]
      %v1678 = vld [vmem:[%s169 + $0x270] sm:$0xff]
      %v1679 = vld [vmem:[%s169 + $0x278] sm:$0xf]
      %v1680 = vld [vmem:[%s169 + $0x27c] sm:$0xff]
      %v1681 = vld [vmem:[%s169 + $0x284] sm:$0xf]
      %v1682 = vld [vmem:[%s169 + $0x288] sm:$0xff]
      %v1683 = vld [vmem:[%s169 + $0x290] sm:$0xf]
      %v1684 = vld [vmem:[%s169 + $0x294] sm:$0xff]
      %v1685 = vld [vmem:[%s169 + $0x29c] sm:$0xf]
      %v1702 = vunpack.c.l.b16 %v1670
      %v1703 = vunpack.c.h.b16 %v1670
      %v1704 = vunpack.c.l.b16 %v1671
      %v1705 = vunpack.c.l.b16 %v1672
      %v1706 = vunpack.c.h.b16 %v1672
      %v1707 = vunpack.c.l.b16 %v1673
      %v1708 = vunpack.c.l.b16 %v1674
      %v1709 = vunpack.c.h.b16 %v1674
      %v1710 = vunpack.c.l.b16 %v1675
      %v1711 = vunpack.c.l.b16 %v1676
      %v1712 = vunpack.c.h.b16 %v1676
      %v1713 = vunpack.c.l.b16 %v1677
      %v1714 = vunpack.c.l.b16 %v1678
      %v1715 = vunpack.c.h.b16 %v1678
      %v1716 = vunpack.c.l.b16 %v1679
      %v1717 = vunpack.c.l.b16 %v1680
      %v1718 = vunpack.c.h.b16 %v1680
      %v1719 = vunpack.c.l.b16 %v1681
      %v1720 = vunpack.c.l.b16 %v1682
      %v1721 = vunpack.c.h.b16 %v1682
      %v1722 = vunpack.c.l.b16 %v1683
      %v1723 = vunpack.c.l.b16 %v1684
      %v1724 = vunpack.c.h.b16 %v1684
      %v1725 = vunpack.c.l.b16 %v1685
      %v1726 = vpack.c.b16 %v1705, %v1702
      %v1727 = vpack.c.b16 %v1706, %v1703
      %v1728 = vpack.c.b16 %v1707, %v1704
      %v1729 = vpack.c.b16 %v1711, %v1708
      %v1730 = vpack.c.b16 %v1712, %v1709
      %v1731 = vpack.c.b16 %v1713, %v1710
      %v1732 = vpack.c.b16 %v1717, %v1714
      %v1733 = vpack.c.b16 %v1718, %v1715
      %v1734 = vpack.c.b16 %v1719, %v1716
      %v1735 = vpack.c.b16 %v1723, %v1720
      %v1736 = vpack.c.b16 %v1724, %v1721
      %v1737 = vpack.c.b16 %v1725, %v1722
      %1750 = vmatprep.subr.bf16.mxu0 0
      %1751 = vmatpush1.bf16.msra.mxu0 %v402
      %1752 = vmatprep.subr.bf16.mxu0 0
      %1753 = vmatpush1.bf16.msra.mxu0 %v403
      %1754 = vmatprep.subr.bf16.mxu0 0
      %1755 = vmatpush1.bf16.msra.mxu0 %v404
      %1756 = vmatprep.subr.bf16.mxu0 0
      %1757 = vmatpush1.bf16.msra.mxu0 %v405
      %1758 = vmatprep.subr.bf16.mxu0 0
      %1759 = vmatpush1.bf16.msra.mxu0 %v406
      %1760 = vmatprep.subr.bf16.mxu0 0
      %1761 = vmatpush1.bf16.msra.mxu0 %v407
      %1762 = vmatprep.subr.bf16.mxu0 0
      %1763 = vmatpush1.bf16.msra.mxu0 %v408
      %1764 = vmatprep.subr.bf16.mxu0 0
      %1765 = vmatpush1.bf16.msra.mxu0 %v409
      %1766 = vmatprep.subr.bf16.mxu0 0
      %1767 = vmatpush1.bf16.msra.mxu0 %v410
      %1768 = vmatprep.subr.bf16.mxu0 0
      %1769 = vmatpush1.bf16.msra.mxu0 %v411
      %1770 = vmatprep.subr.bf16.mxu0 0
      %1771 = vmatpush1.bf16.msra.mxu0 %v412
      %1772 = vmatprep.subr.bf16.mxu0 0
      %1773 = vmatpush1.bf16.msra.mxu0 %v413
      %1774 = vmatprep.subr.bf16.mxu0 0
      %1775 = vmatpush1.bf16.msra.mxu0 %v414
      %1776 = vmatprep.subr.bf16.mxu0 0
      %1777 = vmatpush1.bf16.msra.mxu0 %v415
      %1778 = vmatprep.subr.bf16.mxu0 0
      %1779 = vmatpush1.bf16.msra.mxu0 %v416
      %1780 = vmatprep.subr.bf16.mxu0 0
      %1781 = vmatpush1.bf16.msra.mxu0 %v417
      %1782 = vmatprep.mubr.bf16.mxu0 %v1727
      %1783 = vmatmul.mubr.bf16.gmra.mrb[0].mxu0 %v1726
      %v1784 = vpop.f32.mrb[0].mxu0
      %v1785 = vadd.f32 0.0, %v1784
      %v1786 = vpop.f32.mrb[0].mxu0
      %v1787 = vpop.f32.mrb[0].mxu0
      %v1788 = vadd.f32 0.0, %v1787
      %v1789 = vpop.f32.mrb[0].mxu0
      %1790 = vmatprep.mubr.bf16.mxu0 %v1730
      %1791 = vmatmul.mubr.bf16.gmra.mrb[0].mxu0 %v1729
      %v1792 = vpop.f32.mrb[0].mxu0
      %v1793 = vadd.f32 0.0, %v1792
      %v1794 = vpop.f32.mrb[0].mxu0
      %v1795 = vpop.f32.mrb[0].mxu0
      %v1796 = vadd.f32 0.0, %v1795
      %v1797 = vpop.f32.mrb[0].mxu0
      %1798 = vmatprep.mubr.bf16.mxu0 %v1733
      %1799 = vmatmul.mubr.bf16.gmra.mrb[0].mxu0 %v1732
      %v1800 = vpop.f32.mrb[0].mxu0
      %v1801 = vadd.f32 0.0, %v1800
      %v1802 = vpop.f32.mrb[0].mxu0
      %v1803 = vpop.f32.mrb[0].mxu0
      %v1804 = vadd.f32 0.0, %v1803
      %v1805 = vpop.f32.mrb[0].mxu0
      %1806 = vmatprep.mubr.bf16.mxu0 %v1736
      %1807 = vmatmul.mubr.bf16.gmra.mrb[0].mxu0 %v1735
      %v1808 = vpop.f32.mrb[0].mxu0
      %v1809 = vadd.f32 0.0, %v1808
      %v1810 = vpop.f32.mrb[0].mxu0
      %v1811 = vpop.f32.mrb[0].mxu0
      %v1812 = vadd.f32 0.0, %v1811
      %v1813 = vpop.f32.mrb[0].mxu0
      %1814 = vdwg.mxu0
      %1815 = vmatprep.subr.bf16.mxu0 0
      %1816 = vmatpush1.bf16.msra.mxu0 %v418
      %1817 = vmatprep.subr.bf16.mxu0 0
      %1818 = vmatpush1.bf16.msra.mxu0 %v419
      %1819 = vmatprep.subr.bf16.mxu0 0
      %1820 = vmatpush1.bf16.msra.mxu0 %v420
      %1821 = vmatprep.subr.bf16.mxu0 0
      %1822 = vmatpush1.bf16.msra.mxu0 %v421
      %1823 = vmatprep.subr.bf16.mxu0 0
      %1824 = vmatpush1.bf16.msra.mxu0 %v422
      %1825 = vmatprep.subr.bf16.mxu0 0
      %1826 = vmatpush1.bf16.msra.mxu0 %v423
      %1827 = vmatprep.subr.bf16.mxu0 0
      %1828 = vmatpush1.bf16.msra.mxu0 %v424
      %1829 = vmatprep.subr.bf16.mxu0 0
      %1830 = vmatpush1.bf16.msra.mxu0 %v425
      %1831 = vmatprep.subr.bf16.mxu0 0
      %1832 = vmatpush1.bf16.msra.mxu0 0
      %1833 = vmatprep.subr.bf16.mxu0 0
      %1834 = vmatpush1.bf16.msra.mxu0 0
      %1835 = vmatprep.subr.bf16.mxu0 0
      %1836 = vmatpush1.bf16.msra.mxu0 0
      %1837 = vmatprep.subr.bf16.mxu0 0
      %1838 = vmatpush1.bf16.msra.mxu0 0
      %1839 = vmatprep.subr.bf16.mxu0 0
      %1840 = vmatpush1.bf16.msra.mxu0 0
      %1841 = vmatprep.subr.bf16.mxu0 0
      %1842 = vmatpush1.bf16.msra.mxu0 0
      %1843 = vmatprep.subr.bf16.mxu0 0
      %1844 = vmatpush1.bf16.msra.mxu0 0
      %1845 = vmatprep.subr.bf16.mxu0 0
      %1846 = vmatpush1.bf16.msra.mxu0 0
      %1847 = vmatprep.mubr.bf16.mxu0 0
      %1848 = vmatmul.mubr.bf16.gmra.mrb[0].mxu0 %v1728
      %v1849 = vpop.f32.mrb[0].mxu0
      %v1850 = vadd.f32 %v1785, %v1849
      %v1851 = vpop.f32.mrb[0].mxu0
      %v1852 = vpop.f32.mrb[0].mxu0
      %v1853 = vadd.f32 %v1788, %v1852
      %v1854 = vpop.f32.mrb[0].mxu0
      %1855 = vmatprep.mubr.bf16.mxu0 0
      %1856 = vmatmul.mubr.bf16.gmra.mrb[0].mxu0 %v1731
      %v1857 = vpop.f32.mrb[0].mxu0
      %v1858 = vadd.f32 %v1793, %v1857
      %v1859 = vpop.f32.mrb[0].mxu0
      %v1860 = vpop.f32.mrb[0].mxu0
      %v1861 = vadd.f32 %v1796, %v1860
      %v1862 = vpop.f32.mrb[0].mxu0
      %1863 = vmatprep.mubr.bf16.mxu0 0
      %1864 = vmatmul.mubr.bf16.gmra.mrb[0].mxu0 %v1734
      %v1865 = vpop.f32.mrb[0].mxu0
      %v1866 = vadd.f32 %v1801, %v1865
      %v1867 = vpop.f32.mrb[0].mxu0
      %v1868 = vpop.f32.mrb[0].mxu0
      %v1869 = vadd.f32 %v1804, %v1868
      %v1870 = vpop.f32.mrb[0].mxu0
      %1871 = vmatprep.mubr.bf16.mxu0 0
      %1872 = vmatmul.mubr.bf16.gmra.mrb[0].mxu0 %v1737
      %v1873 = vpop.f32.mrb[0].mxu0
      %v1874 = vadd.f32 %v1809, %v1873
      %v1875 = vpop.f32.mrb[0].mxu0
      %v1876 = vpop.f32.mrb[0].mxu0
      %v1877 = vadd.f32 %v1812, %v1876
      %v1878 = vpop.f32.mrb[0].mxu0
      %1879 = vdwg.mxu0
      %v1880 = vmax.f32 %v1662, %v1850
      %v1881 = vmax.f32 %v1663, %v1853
      %v1882 = vmax.f32 %v1664, %v1858
      %v1883 = vmax.f32 %v1665, %v1861
      %v1884 = vmax.f32 %v1666, %v1866
      %v1885 = vmax.f32 %v1667, %v1869
      %v1886 = vmax.f32 %v1668, %v1874
      %v1887 = vmax.f32 %v1669, %v1877
      %v1888 = vld [vmem:[%s169 + $0x2a0] sm:$0xff]
      %v1889 = vld [vmem:[%s169 + $0x2a8] sm:$0xf]
      %v1890 = vld [vmem:[%s169 + $0x2ac] sm:$0xff]
      %v1891 = vld [vmem:[%s169 + $0x2b4] sm:$0xf]
      %v1892 = vld [vmem:[%s169 + $0x2b8] sm:$0xff]
      %v1893 = vld [vmem:[%s169 + $0x2c0] sm:$0xf]
      %v1894 = vld [vmem:[%s169 + $0x2c4] sm:$0xff]
      %v1895 = vld [vmem:[%s169 + $0x2cc] sm:$0xf]
      %v1896 = vld [vmem:[%s169 + $0x2d0] sm:$0xff]
      %v1897 = vld [vmem:[%s169 + $0x2d8] sm:$0xf]
      %v1898 = vld [vmem:[%s169 + $0x2dc] sm:$0xff]
      %v1899 = vld [vmem:[%s169 + $0x2e4] sm:$0xf]
      %v1900 = vld [vmem:[%s169 + $0x2e8] sm:$0xff]
      %v1901 = vld [vmem:[%s169 + $0x2f0] sm:$0xf]
      %v1902 = vld [vmem:[%s169 + $0x2f4] sm:$0xff]
      %v1903 = vld [vmem:[%s169 + $0x2fc] sm:$0xf]
      %v1920 = vunpack.c.l.b16 %v1888
      %v1921 = vunpack.c.h.b16 %v1888
      %v1922 = vunpack.c.l.b16 %v1889
      %v1923 = vunpack.c.l.b16 %v1890
      %v1924 = vunpack.c.h.b16 %v1890
      %v1925 = vunpack.c.l.b16 %v1891
      %v1926 = vunpack.c.l.b16 %v1892
      %v1927 = vunpack.c.h.b16 %v1892
      %v1928 = vunpack.c.l.b16 %v1893
      %v1929 = vunpack.c.l.b16 %v1894
      %v1930 = vunpack.c.h.b16 %v1894
      %v1931 = vunpack.c.l.b16 %v1895
      %v1932 = vunpack.c.l.b16 %v1896
      %v1933 = vunpack.c.h.b16 %v1896
      %v1934 = vunpack.c.l.b16 %v1897
      %v1935 = vunpack.c.l.b16 %v1898
      %v1936 = vunpack.c.h.b16 %v1898
      %v1937 = vunpack.c.l.b16 %v1899
      %v1938 = vunpack.c.l.b16 %v1900
      %v1939 = vunpack.c.h.b16 %v1900
      %v1940 = vunpack.c.l.b16 %v1901
      %v1941 = vunpack.c.l.b16 %v1902
      %v1942 = vunpack.c.h.b16 %v1902
      %v1943 = vunpack.c.l.b16 %v1903
      %v1944 = vpack.c.b16 %v1923, %v1920
      %v1945 = vpack.c.b16 %v1924, %v1921
      %v1946 = vpack.c.b16 %v1925, %v1922
      %v1947 = vpack.c.b16 %v1929, %v1926
      %v1948 = vpack.c.b16 %v1930, %v1927
      %v1949 = vpack.c.b16 %v1931, %v1928
      %v1950 = vpack.c.b16 %v1935, %v1932
      %v1951 = vpack.c.b16 %v1936, %v1933
      %v1952 = vpack.c.b16 %v1937, %v1934
      %v1953 = vpack.c.b16 %v1941, %v1938
      %v1954 = vpack.c.b16 %v1942, %v1939
      %v1955 = vpack.c.b16 %v1943, %v1940
      %1968 = vmatprep.subr.bf16.mxu0 0
      %1969 = vmatpush1.bf16.msra.mxu0 %v402
      %1970 = vmatprep.subr.bf16.mxu0 0
      %1971 = vmatpush1.bf16.msra.mxu0 %v403
      %1972 = vmatprep.subr.bf16.mxu0 0
      %1973 = vmatpush1.bf16.msra.mxu0 %v404
      %1974 = vmatprep.subr.bf16.mxu0 0
      %1975 = vmatpush1.bf16.msra.mxu0 %v405
      %1976 = vmatprep.subr.bf16.mxu0 0
      %1977 = vmatpush1.bf16.msra.mxu0 %v406
      %1978 = vmatprep.subr.bf16.mxu0 0
      %1979 = vmatpush1.bf16.msra.mxu0 %v407
      %1980 = vmatprep.subr.bf16.mxu0 0
      %1981 = vmatpush1.bf16.msra.mxu0 %v408
      %1982 = vmatprep.subr.bf16.mxu0 0
      %1983 = vmatpush1.bf16.msra.mxu0 %v409
      %1984 = vmatprep.subr.bf16.mxu0 0
      %1985 = vmatpush1.bf16.msra.mxu0 %v410
      %1986 = vmatprep.subr.bf16.mxu0 0
      %1987 = vmatpush1.bf16.msra.mxu0 %v411
      %1988 = vmatprep.subr.bf16.mxu0 0
      %1989 = vmatpush1.bf16.msra.mxu0 %v412
      %1990 = vmatprep.subr.bf16.mxu0 0
      %1991 = vmatpush1.bf16.msra.mxu0 %v413
      %1992 = vmatprep.subr.bf16.mxu0 0
      %1993 = vmatpush1.bf16.msra.mxu0 %v414
      %1994 = vmatprep.subr.bf16.mxu0 0
      %1995 = vmatpush1.bf16.msra.mxu0 %v415
      %1996 = vmatprep.subr.bf16.mxu0 0
      %1997 = vmatpush1.bf16.msra.mxu0 %v416
      %1998 = vmatprep.subr.bf16.mxu0 0
      %1999 = vmatpush1.bf16.msra.mxu0 %v417
      %2000 = vmatprep.mubr.bf16.mxu0 %v1945
      %2001 = vmatmul.mubr.bf16.gmra.mrb[0].mxu0 %v1944
      %v2002 = vpop.f32.mrb[0].mxu0
      %v2003 = vadd.f32 0.0, %v2002
      %v2004 = vpop.f32.mrb[0].mxu0
      %v2005 = vpop.f32.mrb[0].mxu0
      %v2006 = vadd.f32 0.0, %v2005
      %v2007 = vpop.f32.mrb[0].mxu0
      %2008 = vmatprep.mubr.bf16.mxu0 %v1948
      %2009 = vmatmul.mubr.bf16.gmra.mrb[0].mxu0 %v1947
      %v2010 = vpop.f32.mrb[0].mxu0
      %v2011 = vadd.f32 0.0, %v2010
      %v2012 = vpop.f32.mrb[0].mxu0
      %v2013 = vpop.f32.mrb[0].mxu0
      %v2014 = vadd.f32 0.0, %v2013
      %v2015 = vpop.f32.mrb[0].mxu0
      %2016 = vmatprep.mubr.bf16.mxu0 %v1951
      %2017 = vmatmul.mubr.bf16.gmra.mrb[0].mxu0 %v1950
      %v2018 = vpop.f32.mrb[0].mxu0
      %v2019 = vadd.f32 0.0, %v2018
      %v2020 = vpop.f32.mrb[0].mxu0
      %v2021 = vpop.f32.mrb[0].mxu0
      %v2022 = vadd.f32 0.0, %v2021
      %v2023 = vpop.f32.mrb[0].mxu0
      %2024 = vmatprep.mubr.bf16.mxu0 %v1954
      %2025 = vmatmul.mubr.bf16.gmra.mrb[0].mxu0 %v1953
      %v2026 = vpop.f32.mrb[0].mxu0
      %v2027 = vadd.f32 0.0, %v2026
      %v2028 = vpop.f32.mrb[0].mxu0
      %v2029 = vpop.f32.mrb[0].mxu0
      %v2030 = vadd.f32 0.0, %v2029
      %v2031 = vpop.f32.mrb[0].mxu0
      %2032 = vdwg.mxu0
      %2033 = vmatprep.subr.bf16.mxu0 0
      %2034 = vmatpush1.bf16.msra.mxu0 %v418
      %2035 = vmatprep.subr.bf16.mxu0 0
      %2036 = vmatpush1.bf16.msra.mxu0 %v419
      %2037 = vmatprep.subr.bf16.mxu0 0
      %2038 = vmatpush1.bf16.msra.mxu0 %v420
      %2039 = vmatprep.subr.bf16.mxu0 0
      %2040 = vmatpush1.bf16.msra.mxu0 %v421
      %2041 = vmatprep.subr.bf16.mxu0 0
      %2042 = vmatpush1.bf16.msra.mxu0 %v422
      %2043 = vmatprep.subr.bf16.mxu0 0
      %2044 = vmatpush1.bf16.msra.mxu0 %v423
      %2045 = vmatprep.subr.bf16.mxu0 0
      %2046 = vmatpush1.bf16.msra.mxu0 %v424
      %2047 = vmatprep.subr.bf16.mxu0 0
      %2048 = vmatpush1.bf16.msra.mxu0 %v425
      %2049 = vmatprep.subr.bf16.mxu0 0
      %2050 = vmatpush1.bf16.msra.mxu0 0
      %2051 = vmatprep.subr.bf16.mxu0 0
      %2052 = vmatpush1.bf16.msra.mxu0 0
      %2053 = vmatprep.subr.bf16.mxu0 0
      %2054 = vmatpush1.bf16.msra.mxu0 0
      %2055 = vmatprep.subr.bf16.mxu0 0
      %2056 = vmatpush1.bf16.msra.mxu0 0
      %2057 = vmatprep.subr.bf16.mxu0 0
      %2058 = vmatpush1.bf16.msra.mxu0 0
      %2059 = vmatprep.subr.bf16.mxu0 0
      %2060 = vmatpush1.bf16.msra.mxu0 0
      %2061 = vmatprep.subr.bf16.mxu0 0
      %2062 = vmatpush1.bf16.msra.mxu0 0
      %2063 = vmatprep.subr.bf16.mxu0 0
      %2064 = vmatpush1.bf16.msra.mxu0 0
      %2065 = vmatprep.mubr.bf16.mxu0 0
      %2066 = vmatmul.mubr.bf16.gmra.mrb[0].mxu0 %v1946
      %v2067 = vpop.f32.mrb[0].mxu0
      %v2068 = vadd.f32 %v2003, %v2067
      %v2069 = vpop.f32.mrb[0].mxu0
      %v2070 = vpop.f32.mrb[0].mxu0
      %v2071 = vadd.f32 %v2006, %v2070
      %v2072 = vpop.f32.mrb[0].mxu0
      %2073 = vmatprep.mubr.bf16.mxu0 0
      %2074 = vmatmul.mubr.bf16.gmra.mrb[0].mxu0 %v1949
      %v2075 = vpop.f32.mrb[0].mxu0
      %v2076 = vadd.f32 %v2011, %v2075
      %v2077 = vpop.f32.mrb[0].mxu0
      %v2078 = vpop.f32.mrb[0].mxu0
      %v2079 = vadd.f32 %v2014, %v2078
      %v2080 = vpop.f32.mrb[0].mxu0
      %2081 = vmatprep.mubr.bf16.mxu0 0
      %2082 = vmatmul.mubr.bf16.gmra.mrb[0].mxu0 %v1952
      %v2083 = vpop.f32.mrb[0].mxu0
      %v2084 = vadd.f32 %v2019, %v2083
      %v2085 = vpop.f32.mrb[0].mxu0
      %v2086 = vpop.f32.mrb[0].mxu0
      %v2087 = vadd.f32 %v2022, %v2086
      %v2088 = vpop.f32.mrb[0].mxu0
      %2089 = vmatprep.mubr.bf16.mxu0 0
      %2090 = vmatmul.mubr.bf16.gmra.mrb[0].mxu0 %v1955
      %v2091 = vpop.f32.mrb[0].mxu0
      %v2092 = vadd.f32 %v2027, %v2091
      %v2093 = vpop.f32.mrb[0].mxu0
      %v2094 = vpop.f32.mrb[0].mxu0
      %v2095 = vadd.f32 %v2030, %v2094
      %v2096 = vpop.f32.mrb[0].mxu0
      %2097 = vdwg.mxu0
      %v2098 = vmax.f32 %v1880, %v2068
      %v2099 = vmax.f32 %v1881, %v2071
      %v2100 = vmax.f32 %v1882, %v2076
      %v2101 = vmax.f32 %v1883, %v2079
      %v2102 = vmax.f32 %v1884, %v2084
      %v2103 = vmax.f32 %v1885, %v2087
      %v2104 = vmax.f32 %v1886, %v2092
      %v2105 = vmax.f32 %v1887, %v2095
      %v2106 = vld [vmem:[%s2] sm:$0x1]
      %v2108 = vlaneseq
      %v2109 = vshrl.u32 %v2108, 7
      %v2110 = vsub.s32 0, %v2109
      %v2111 = vrot.slane %v2106, %v2110
      %v2113 = vadd.f32 %v2098, %v2111
      %v2114 = vadd.f32 %v2099, %v2111
      %v2115 = vadd.f32 %v2100, %v2111
      %v2116 = vadd.f32 %v2101, %v2111
      %v2117 = vadd.f32 %v2102, %v2111
      %v2118 = vadd.f32 %v2103, %v2111
      %v2119 = vadd.f32 %v2104, %v2111
      %v2120 = vadd.f32 %v2105, %v2111
      %v2121 = vxor.u32 %v2113, 2147483648
      %v2122 = vxor.u32 %v2114, 2147483648
      %v2123 = vxor.u32 %v2115, 2147483648
      %v2124 = vxor.u32 %v2116, 2147483648
      %v2125 = vxor.u32 %v2117, 2147483648
      %v2126 = vxor.u32 %v2118, 2147483648
      %v2127 = vxor.u32 %v2119, 2147483648
      %v2128 = vxor.u32 %v2120, 2147483648
      %v2129 = vmul.f32 %v2121, 1.442695
      %v2130 = vpow.pop %v2129
      %v2131 = vmul.f32 %v2122, 1.442695
      %v2132 = vpow.pop %v2131
      %v2133 = vmul.f32 %v2123, 1.442695
      %v2134 = vpow.pop %v2133
      %v2135 = vmul.f32 %v2124, 1.442695
      %v2136 = vpow.pop %v2135
      %v2137 = vmul.f32 %v2125, 1.442695
      %v2138 = vpow.pop %v2137
      %v2139 = vmul.f32 %v2126, 1.442695
      %v2140 = vpow.pop %v2139
      %v2141 = vmul.f32 %v2127, 1.442695
      %v2142 = vpow.pop %v2141
      %v2143 = vmul.f32 %v2128, 1.442695
      %v2144 = vpow.pop %v2143
      %v2145 = vadd.f32 %v2130, 1.0
      %v2146 = vadd.f32 %v2132, 1.0
      %v2147 = vadd.f32 %v2134, 1.0
      %v2148 = vadd.f32 %v2136, 1.0
      %v2149 = vadd.f32 %v2138, 1.0
      %v2150 = vadd.f32 %v2140, 1.0
      %v2151 = vadd.f32 %v2142, 1.0
      %v2152 = vadd.f32 %v2144, 1.0
      %v2153 = vrcp.pop %v2145
      %v2154 = vmul.f32 1.0, %v2153
      %v2155 = vrcp.pop %v2146
      %v2156 = vmul.f32 1.0, %v2155
      %v2157 = vrcp.pop %v2147
      %v2158 = vmul.f32 1.0, %v2157
      %v2159 = vrcp.pop %v2148
      %v2160 = vmul.f32 1.0, %v2159
      %v2161 = vrcp.pop %v2149
      %v2162 = vmul.f32 1.0, %v2161
      %v2163 = vrcp.pop %v2150
      %v2164 = vmul.f32 1.0, %v2163
      %v2165 = vrcp.pop %v2151
      %v2166 = vmul.f32 1.0, %v2165
      %v2167 = vrcp.pop %v2152
      %v2168 = vmul.f32 1.0, %v2167
      %2169 = vst [vmem:[%s175] sm:$0xff] %v2154
      %2170 = vst [vmem:[%s175 + $0x8] sm:$0xff] %v2156
      %2171 = vst [vmem:[%s175 + $0x10] sm:$0xff] %v2158
      %2172 = vst [vmem:[%s175 + $0x18] sm:$0xff] %v2160
      %2173 = vst [vmem:[%s175 + $0x20] sm:$0xff] %v2162
      %2174 = vst [vmem:[%s175 + $0x28] sm:$0xff] %v2164
      %2175 = vst [vmem:[%s175 + $0x30] sm:$0xff] %v2166
      %2176 = vst [vmem:[%s175 + $0x38] sm:$0xff] %v2168
      %s2177 = smul.u32 8, %s14
      %p2178 = scmp.lt.s32.totalorder %s2177, 15
      %s2179 = scalar_select %p2178, %s2177, 15
      %s2180 = smul.addr %s2179, 8
      %s2181 = scalar_lea.vmem %s3, %s2180
      // Predicated region
      $region33: #{closed_call.15} parent=31 // pred_check
        %p2182 = pneg %p100
      $region34: #{closed_call.15} parent=31 // pred_check_branch
        %2184 = sbr.rel (%p2182) target = $region36
      $region35: #{closed_call.15} parent=31 // pred_region
        %s2185 = smul.u32 8, %s14
      $region36: #{closed_call.15} parent=31 // pred_fallthru
        _
    $region32: #{closed_call.15} parent=5 // pred_fallthru
      _
    %p2186 = scmp.le.s32.totalorder 2, %s9
    // Predicated region
    $region37: #{closed_call.15} parent=5 // pred_check
      %p2187 = pneg %p2186
    $region38: #{closed_call.15} parent=5 // pred_check_branch
      %2189 = sbr.rel (%p2187) target = $region40
    $region39: #{closed_call.15} parent=5 // pred_region
      %s2190 = ssub.s32 %s9, 2
      // Predicated region
      $region41: #{closed_call.15} parent=39 // pred_check
        %p2191 = pneg %p106
      $region42: #{closed_call.15} parent=39 // pred_check_branch
        %2193 = sbr.rel (%p2191) target = $region44
      $region43: #{closed_call.15} parent=39 // pred_region
        %s2194 = smul.u32 8, %s15
        %p2195 = scmp.lt.s32.totalorder %s2194, 15
        %s2196 = scalar_select %p2195, %s2194, 15
        %s2197 = smul.addr %s2196, 8
        %s2198 = scalar_lea.vmem %s3, %s2197
      $region44: #{closed_call.15} parent=39 // pred_fallthru
        _
    $region40: #{closed_call.15} parent=5 // pred_fallthru
      _
  $region6: #{closed_call.15} parent=0 // loop_footer
    %s13 = sadd.s32 1, %s9
  $region7: #{closed_call.15} parent=0 // loop_footer_branch
    %8 = sbr.rel target = $region3
  $region8: #{closed_call.15} parent=0 // loop_exit
    _

</llo_original>
